<compile_context>
chip_gen: v7x
topology: tpu7x:2x2x1
jax: 0.10.0
libtpu: 0.0.40
codegen_flags: <defaults>
</compile_context>

<pallas_src>
import jax
import jax.numpy as jnp
import numpy as np
from jax.experimental import pallas as pl
from jax.experimental.pallas import tpu as pltpu

SELU_ALPHA = 1.6732632423543772
SELU_SCALE = 1.0507009873554804
HIDDEN1 = 4096
HIDDEN2 = 64


def _selu(x):
    return SELU_SCALE * jnp.where(x > 0, x, SELU_ALPHA * (jnp.exp(x) - 1.0))


def _leaky_relu(x, slope=0.01):
    return jnp.where(x > 0, x, slope * x)


def _sigmoid(x):
    return 1.0 / (1.0 + jnp.exp(-x))


def xuanet_kernel(cw_ref, cb_ref, b3_ref,          # SMEM: conv scalars (6,),(3,), fc3 bias (1,)
                  x0_ref, x1_ref, tgt_ref,         # VMEM (grid-invariant): (N,L),(N,L),(N,1)
                  w1_ref, b1_ref,                  # VMEM tiles: (L,TN) bf16, (1,TN) f32
                  w2_ref, b2_ref,                  # VMEM: (TN,64) bf16, (1,64) f32
                  w3_ref,                          # VMEM: (1,64) f32 row
                  pred_ref, loss_ref,              # out: VMEM (N,1), SMEM (1,1)
                  y_ref, acc_ref):                 # scratch: (N,L) bf16, (N,64) f32
    j = pl.program_id(0)

    @pl.when(j == 0)
    def _init():
        x0 = x0_ref[...]                                   # dense (N, L) tiles
        x1 = x1_ref[...]
        # conv1 (1x1, 2 -> 2 channels): per-element channel mix (VPU)
        h0 = cw_ref[0] * x0 + cw_ref[1] * x1 + cb_ref[0]
        h1 = cw_ref[2] * x0 + cw_ref[3] * x1 + cb_ref[1]
        # conv2 (1x1, 2 -> 1) + leaky_relu, stored once as the bf16 fc1 input
        y = _leaky_relu(cw_ref[4] * h0 + cw_ref[5] * h1 + cb_ref[2])        # (N, L)
        y_ref[...] = y.astype(y_ref.dtype)
        acc_ref[...] = jnp.zeros_like(acc_ref)

    # fc1 column block -> SELU (f32), then contract into the (N, 64) fc2
    # accumulator.  z1 stays f32 so only weight bf16 rounding remains.
    z1 = _selu(jnp.dot(y_ref[...], w1_ref[...],
                       preferred_element_type=jnp.float32) + b1_ref[...])   # (N, TN) f32
    acc_ref[...] += jnp.dot(z1, w2_ref[...].astype(jnp.float32),
                            preferred_element_type=jnp.float32)             # (N, 64)

    @pl.when(j == pl.num_programs(0) - 1)
    def _finalize():
        z2 = _selu(acc_ref[...] + b2_ref[...])                              # (N, 64)
        # fc3 as VPU multiply + lane reduction (no degenerate 1-lane MXU op)
        logit = jnp.sum(z2 * w3_ref[...], axis=-1, keepdims=True) + b3_ref[0]
        z3 = _sigmoid(logit)                                                # (N, 1)
        pred_ref[...] = z3
        # L1Loss (mean reduction)
        loss_ref[0, 0] = jnp.mean(jnp.abs(z3 - tgt_ref[...]))


def prepare_params(params, weight_dtype=jnp.bfloat16):
    """One-time packing: transpose fc weights, cast to bf16, concat conv scalars."""
    cw = jnp.concatenate([params["conv1_w"].reshape(-1),
                          params["conv2_w"].reshape(-1)]).astype(jnp.float32)   # (6,)
    cb = jnp.concatenate([params["conv1_b"],
                          params["conv2_b"]]).astype(jnp.float32)               # (3,)
    return dict(
        cw=cw, cb=cb,
        w1t=params["fc1_w"].T.astype(weight_dtype),                 # (L, 4096)
        b1=params["fc1_b"].reshape(1, HIDDEN1).astype(jnp.float32),
        w2t=params["fc2_w"].T.astype(weight_dtype),                 # (4096, 64)
        b2=params["fc2_b"].reshape(1, HIDDEN2).astype(jnp.float32),
        w3=params["fc3_w"].reshape(1, HIDDEN2).astype(jnp.float32),  # (1, 64) row
        b3=params["fc3_b"].reshape(1).astype(jnp.float32),
    )


def _nbytes(a):
    return int(a.size) * int(a.dtype.itemsize)


def _vmem_budget_bytes():
    """Conservative per-kernel VMEM budget, generation-aware where possible."""
    phys = 64 << 20                       # assume the smallest (v7x per-TC) if unknown
    try:
        info = pltpu.get_tpu_info()
        phys = int(info.vmem_capacity_bytes)
    except Exception:
        pass
    # Stay within half of physical and under every generation's scoped default,
    # leaving headroom for compiler scratch.
    return min(phys // 2, 24 << 20)


def _pick_tn(L, n_rows):
    """Largest tn (multiple of 256, divides 4096) whose double-buffered tiles fit VMEM."""
    budget = _vmem_budget_bytes()
    fixed = (2 * 2 * n_rows * L * 4        # x0, x1 (double-buffered, grid-invariant)
             + 2 * n_rows * 4              # target
             + n_rows * L * 2              # y scratch (bf16)
             + n_rows * HIDDEN2 * 4        # fc2 accumulator
             + 4 * (2 * HIDDEN2 * 4)       # b2 / w3 small tiles (double-buffered)
             + 2 * n_rows * 4)             # prediction
    for tn in (4096, 2048, 1024, 512, 256):
        if HIDDEN1 % tn != 0:
            continue
        per_step = (2 * (2 * L * tn)           # w1 tile, bf16, double-buffered
                    + 2 * (2 * tn * HIDDEN2)   # w2 tile, bf16, double-buffered
                    + 2 * (4 * tn)             # b1 tile, f32, double-buffered
                    + n_rows * tn * 4)         # z1 intermediate, f32
        if fixed + per_step <= budget:
            return tn
    return 256


def xuanet_forward(x, target, prep, *, tn=None):
    """x: (N, 2, 1, L) float32 NCHW (H must be 1), target: (N,) float32."""
    N, C, H, L = x.shape
    assert C == 2 and H == 1
    if tn is None:
        tn = _pick_tn(L, N)
    assert HIDDEN1 % tn == 0 and tn % 256 == 0
    n_blocks = HIDDEN1 // tn

    # Split the two input channels into dense (N, L) slabs (no sublane-2 block).
    x0 = x[:, 0, 0, :].astype(jnp.float32)
    x1 = x[:, 1, 0, :].astype(jnp.float32)
    tgt = target.reshape(N, 1).astype(jnp.float32)

    cost = pl.CostEstimate(
        flops=2 * N * L * HIDDEN1 + 2 * N * HIDDEN1 * HIDDEN2 + 2 * N * HIDDEN2,
        transcendentals=N * (HIDDEN1 + HIDDEN2 + 1),
        bytes_accessed=(_nbytes(x0) + _nbytes(x1) + _nbytes(tgt)
                        + _nbytes(prep["w1t"]) + _nbytes(prep["b1"])
                        + _nbytes(prep["w2t"]) + _nbytes(prep["b2"])
                        + _nbytes(prep["w3"]) + N * 4 + 4),
    )

    pred, loss = pl.pallas_call(
        xuanet_kernel,
        out_shape=(jax.ShapeDtypeStruct((N, 1), jnp.float32),
                   jax.ShapeDtypeStruct((1, 1), jnp.float32)),
        grid_spec=pltpu.PrefetchScalarGridSpec(
            num_scalar_prefetch=0,
            grid=(n_blocks,),
            in_specs=[
                pl.BlockSpec(memory_space=pltpu.SMEM),             # conv weights (6,)
                pl.BlockSpec(memory_space=pltpu.SMEM),             # conv biases (3,)
                pl.BlockSpec(memory_space=pltpu.SMEM),             # fc3 bias (1,)
                pl.BlockSpec((N, L), lambda j: (0, 0)),            # x channel 0
                pl.BlockSpec((N, L), lambda j: (0, 0)),            # x channel 1
                pl.BlockSpec((N, 1), lambda j: (0, 0)),            # target
                pl.BlockSpec((L, tn), lambda j: (0, j)),           # fc1 weight tile
                pl.BlockSpec((1, tn), lambda j: (0, j)),           # fc1 bias tile
                pl.BlockSpec((tn, HIDDEN2), lambda j: (j, 0)),     # fc2 weight tile
                pl.BlockSpec((1, HIDDEN2), lambda j: (0, 0)),      # fc2 bias
                pl.BlockSpec((1, HIDDEN2), lambda j: (0, 0)),      # fc3 weight row
            ],
            out_specs=(
                pl.BlockSpec((N, 1), lambda j: (0, 0)),            # prediction
                pl.BlockSpec((1, 1), lambda j: (0, 0),
                             memory_space=pltpu.SMEM),             # scalar loss
            ),
            scratch_shapes=[
                pltpu.VMEM((N, L), prep["w1t"].dtype),             # post-conv activation
                pltpu.VMEM((N, HIDDEN2), jnp.float32),             # fc2 accumulator
            ],
        ),
        compiler_params=pltpu.CompilerParams(
            dimension_semantics=("arbitrary",)),                   # reduction axis
        cost_estimate=cost,
    )(prep["cw"], prep["cb"], prep["b3"], x0, x1, tgt,
      prep["w1t"], prep["b1"], prep["w2t"], prep["b2"], prep["w3"])

    return pred[:, 0], loss[0, 0]


def init_params(key, input_len):
    """Deterministic parameter init mirroring the module's shapes/init scheme."""
    ks = jax.random.split(key, 10)
    gain = np.sqrt(2.0)  # calculate_gain('relu')

    # conv1: (2, 2, 1, 1), xavier_uniform
    bound1 = gain * np.sqrt(6.0 / (2 + 2))
    conv1_w = jax.random.uniform(ks[0], (2, 2, 1, 1), jnp.float32, -bound1, bound1)
    conv1_b = jax.random.uniform(ks[1], (2,), jnp.float32, -0.5, 0.5)

    # conv2: (1, 2, 1, 1), xavier_uniform
    bound2 = gain * np.sqrt(6.0 / (2 + 1))
    conv2_w = jax.random.uniform(ks[2], (1, 2, 1, 1), jnp.float32, -bound2, bound2)
    conv2_b = jax.random.uniform(ks[3], (1,), jnp.float32, -0.5, 0.5)

    # fc layers: normal(0, 0.01) weights, PyTorch-style uniform biases
    fc1_w = 0.01 * jax.random.normal(ks[4], (HIDDEN1, input_len), jnp.float32)
    fc1_b = jax.random.uniform(ks[5], (HIDDEN1,), jnp.float32,
                               -1.0 / np.sqrt(input_len), 1.0 / np.sqrt(input_len))
    fc2_w = 0.01 * jax.random.normal(ks[6], (HIDDEN2, HIDDEN1), jnp.float32)
    fc2_b = jax.random.uniform(ks[7], (HIDDEN2,), jnp.float32,
                               -1.0 / np.sqrt(HIDDEN1), 1.0 / np.sqrt(HIDDEN1))
    fc3_w = 0.01 * jax.random.normal(ks[8], (1, HIDDEN2), jnp.float32)
    fc3_b = jax.random.uniform(ks[9], (1,), jnp.float32,
                               -1.0 / np.sqrt(HIDDEN2), 1.0 / np.sqrt(HIDDEN2))

    return dict(conv1_w=conv1_w, conv1_b=conv1_b,
                conv2_w=conv2_w, conv2_b=conv2_b,
                fc1_w=fc1_w, fc1_b=fc1_b,
                fc2_w=fc2_w, fc2_b=fc2_b,
                fc3_w=fc3_w, fc3_b=fc3_b)


def ref_forward(x, target, params):
    """Pure-JAX reference matching the PyTorch forward (f32, HIGHEST precision)."""
    w1 = params["conv1_w"][:, :, 0, 0]
    b1 = params["conv1_b"]
    xin = x[:, :, 0, :]                                   # (N, 2, L)
    h = jnp.einsum("oc,ncl->nol", w1, xin) + b1[None, :, None]
    w2 = params["conv2_w"][:, :, 0, 0]
    b2 = params["conv2_b"]
    y = jnp.einsum("oc,ncl->nol", w2, h) + b2[None, :, None]
    y = jnp.where(y > 0, y, 0.01 * y)[:, 0, :]            # (N, L)
    hp = jax.lax.Precision.HIGHEST
    z1 = jax.nn.selu(jnp.dot(y, params["fc1_w"].T, precision=hp) + params["fc1_b"])
    z2 = jax.nn.selu(jnp.dot(z1, params["fc2_w"].T, precision=hp) + params["fc2_b"])
    z3 = jax.nn.sigmoid(jnp.dot(z2, params["fc3_w"].T, precision=hp) + params["fc3_b"])[:, 0]
    loss = jnp.mean(jnp.abs(z3 - target))
    return z3, loss


if __name__ == "__main__":
    N = 8
    INPUT_LEN = 128

    key = jax.random.PRNGKey(0)
    k_x, k_t, k_p = jax.random.split(key, 3)

    x = jax.random.normal(k_x, (N, 2, 1, INPUT_LEN), jnp.float32)
    target = jax.random.uniform(k_t, (N,), jnp.float32)
    params = init_params(k_p, INPUT_LEN)
    prep = prepare_params(params)          # one-time transpose / bf16 pack

    pred, loss = xuanet_forward(x, target, prep)
    pred = jax.block_until_ready(pred)
    loss = jax.block_until_ready(loss)

    pred_ref, loss_ref = ref_forward(x, target, params)

    # Tolerances account for bf16-streamed fc1/fc2 weights (f32 accumulation).
    if not np.allclose(np.asarray(pred), np.asarray(pred_ref), rtol=2e-3, atol=2e-4):
        raise SystemExit("prediction mismatch vs reference")
    if not np.allclose(np.asarray(loss), np.asarray(loss_ref), rtol=2e-3, atol=2e-4):
        raise SystemExit("loss mismatch vs reference")

    print("KERNEL_OK")
</pallas_src>

<mosaic_0001>
module attributes {stable_mosaic.version = 11 : i64} {
  func.func @xuanet_kernel(%arg0: i32, %arg1: memref<6xf32, #tpu.memory_space<smem>>, %arg2: memref<3xf32, #tpu.memory_space<smem>>, %arg3: memref<1xf32, #tpu.memory_space<smem>>, %arg4: memref<8x128xf32, #tpu.memory_space<vmem>>, %arg5: memref<8x128xf32, #tpu.memory_space<vmem>>, %arg6: memref<8x1xf32, #tpu.memory_space<vmem>>, %arg7: memref<128x4096xbf16, #tpu.memory_space<vmem>>, %arg8: memref<1x4096xf32, #tpu.memory_space<vmem>>, %arg9: memref<4096x64xbf16, #tpu.memory_space<vmem>>, %arg10: memref<1x64xf32, #tpu.memory_space<vmem>>, %arg11: memref<1x64xf32, #tpu.memory_space<vmem>>, %arg12: memref<8x1xf32, #tpu.memory_space<vmem>>, %arg13: memref<1x1xf32, #tpu.memory_space<smem>>, %arg14: memref<8x128xbf16, #tpu.memory_space<vmem>>, %arg15: memref<8x64xf32, #tpu.memory_space<vmem>>) attributes {dimension_semantics = [#tpu.dimension_semantics<arbitrary>], iteration_bounds = array<i64: 1>, scalar_prefetch = 0 : i64, scratch_operands = 2 : i64, tpu.core_type = #tpu.core_type<tc>, window_params = [{transform_indices = @transform_0, window_bounds = array<i64: 6>}, {transform_indices = @transform_1, window_bounds = array<i64: 3>}, {transform_indices = @transform_2, window_bounds = array<i64: 1>}, {pipeline_mode = #tpu.pipeline_mode<synchronous>, transform_indices = @transform_3, window_bounds = array<i64: 8, 128>}, {pipeline_mode = #tpu.pipeline_mode<synchronous>, transform_indices = @transform_4, window_bounds = array<i64: 8, 128>}, {pipeline_mode = #tpu.pipeline_mode<synchronous>, transform_indices = @transform_5, window_bounds = array<i64: 8, 1>}, {transform_indices = @transform_6, window_bounds = array<i64: 128, 4096>}, {transform_indices = @transform_7, window_bounds = array<i64: 1, 4096>}, {transform_indices = @transform_8, window_bounds = array<i64: 4096, 64>}, {pipeline_mode = #tpu.pipeline_mode<synchronous>, transform_indices = @transform_9, window_bounds = array<i64: 1, 64>}, {pipeline_mode = #tpu.pipeline_mode<synchronous>, transform_indices = @transform_10, window_bounds = array<i64: 1, 64>}, {pipeline_mode = #tpu.pipeline_mode<synchronous>, transform_indices = @transform_11, window_bounds = array<i64: 8, 1>}, {transform_indices = @transform_12, window_bounds = array<i64: 1, 1>}]} {
    %c0_i32 = arith.constant 0 : i32
    %0 = arith.cmpi eq, %arg0, %c0_i32 : i32
    %1 = arith.extui %0 : i1 to i32
    %c0_i32_0 = arith.constant 0 : i32
    %2 = arith.cmpi ne, %1, %c0_i32_0 : i32
    scf.if %2 {
      %c0_19 = arith.constant 0 : index
      %c0_20 = arith.constant 0 : index
      %28 = vector.load %arg4[%c0_19, %c0_20] : memref<8x128xf32, #tpu.memory_space<vmem>>, vector<8x128xf32>
      %c0_21 = arith.constant 0 : index
      %c0_22 = arith.constant 0 : index
      %29 = vector.load %arg5[%c0_21, %c0_22] : memref<8x128xf32, #tpu.memory_space<vmem>>, vector<8x128xf32>
      %c0_23 = arith.constant 0 : index
      %30 = memref.load %arg1[%c0_23] : memref<6xf32, #tpu.memory_space<smem>>
      %31 = vector.broadcast %30 : f32 to vector<8x128xf32>
      %32 = arith.mulf %31, %28 : vector<8x128xf32>
      %c1 = arith.constant 1 : index
      %33 = memref.load %arg1[%c1] : memref<6xf32, #tpu.memory_space<smem>>
      %34 = vector.broadcast %33 : f32 to vector<8x128xf32>
      %35 = arith.mulf %34, %29 : vector<8x128xf32>
      %36 = arith.addf %32, %35 : vector<8x128xf32>
      %c0_24 = arith.constant 0 : index
      %37 = memref.load %arg2[%c0_24] : memref<3xf32, #tpu.memory_space<smem>>
      %38 = vector.broadcast %37 : f32 to vector<8x128xf32>
      %39 = arith.addf %36, %38 : vector<8x128xf32>
      %c2 = arith.constant 2 : index
      %40 = memref.load %arg1[%c2] : memref<6xf32, #tpu.memory_space<smem>>
      %41 = vector.broadcast %40 : f32 to vector<8x128xf32>
      %42 = arith.mulf %41, %28 : vector<8x128xf32>
      %c3 = arith.constant 3 : index
      %43 = memref.load %arg1[%c3] : memref<6xf32, #tpu.memory_space<smem>>
      %44 = vector.broadcast %43 : f32 to vector<8x128xf32>
      %45 = arith.mulf %44, %29 : vector<8x128xf32>
      %46 = arith.addf %42, %45 : vector<8x128xf32>
      %c1_25 = arith.constant 1 : index
      %47 = memref.load %arg2[%c1_25] : memref<3xf32, #tpu.memory_space<smem>>
      %48 = vector.broadcast %47 : f32 to vector<8x128xf32>
      %49 = arith.addf %46, %48 : vector<8x128xf32>
      %c4 = arith.constant 4 : index
      %50 = memref.load %arg1[%c4] : memref<6xf32, #tpu.memory_space<smem>>
      %51 = vector.broadcast %50 : f32 to vector<8x128xf32>
      %52 = arith.mulf %51, %39 : vector<8x128xf32>
      %c5 = arith.constant 5 : index
      %53 = memref.load %arg1[%c5] : memref<6xf32, #tpu.memory_space<smem>>
      %54 = vector.broadcast %53 : f32 to vector<8x128xf32>
      %55 = arith.mulf %54, %49 : vector<8x128xf32>
      %56 = arith.addf %52, %55 : vector<8x128xf32>
      %c2_26 = arith.constant 2 : index
      %57 = memref.load %arg2[%c2_26] : memref<3xf32, #tpu.memory_space<smem>>
      %58 = vector.broadcast %57 : f32 to vector<8x128xf32>
      %59 = arith.addf %56, %58 : vector<8x128xf32>
      %cst_27 = arith.constant 0.000000e+00 : f32
      %60 = vector.broadcast %cst_27 : f32 to vector<8x128xf32>
      %61 = arith.cmpf ogt, %59, %60 : vector<8x128xf32>
      %cst_28 = arith.constant 0.00999999977 : f32
      %62 = vector.broadcast %cst_28 : f32 to vector<8x128xf32>
      %63 = arith.mulf %62, %59 : vector<8x128xf32>
      %64 = arith.select %61, %59, %63 : vector<8x128xi1>, vector<8x128xf32>
      %65 = arith.truncf %64 : vector<8x128xf32> to vector<8x128xbf16>
      %c0_29 = arith.constant 0 : index
      %c0_30 = arith.constant 0 : index
      %66 = vector.load %arg14[%c0_29, %c0_30] : memref<8x128xbf16, #tpu.memory_space<vmem>>, vector<8x128xbf16>
      tpu.vector_store %arg14[%c0_29, %c0_30], %65 {strides = array<i32>} : memref<8x128xbf16, #tpu.memory_space<vmem>>, vector<8x128xbf16>,
      %cst_31 = arith.constant 0.000000e+00 : f32
      %67 = vector.broadcast %cst_31 : f32 to vector<8x64xf32>
      %c0_32 = arith.constant 0 : index
      %c0_33 = arith.constant 0 : index
      %68 = vector.load %arg15[%c0_32, %c0_33] : memref<8x64xf32, #tpu.memory_space<vmem>>, vector<8x64xf32>
      tpu.vector_store %arg15[%c0_32, %c0_33], %67 {strides = array<i32>} : memref<8x64xf32, #tpu.memory_space<vmem>>, vector<8x64xf32>,
    } else {
    }
    %c0 = arith.constant 0 : index
    %c0_1 = arith.constant 0 : index
    %3 = vector.load %arg14[%c0, %c0_1] : memref<8x128xbf16, #tpu.memory_space<vmem>>, vector<8x128xbf16>
    %c0_2 = arith.constant 0 : index
    %c0_3 = arith.constant 0 : index
    %4 = vector.load %arg7[%c0_2, %c0_3] : memref<128x4096xbf16, #tpu.memory_space<vmem>>, vector<128x4096xbf16>
    %cst = arith.constant dense<0.000000e+00> : vector<8x4096xf32>
    %5 = tpu.matmul %3, %4, %cst {dimension_numbers = #tpu.dot_dimension_numbers<[1], [0], [0], [1], [0, 0, 1, 1], [], []>} : vector<8x128xbf16>, vector<128x4096xbf16>, vector<8x4096xf32> -> vector<8x4096xf32>
    %c0_4 = arith.constant 0 : index
    %c0_5 = arith.constant 0 : index
    %6 = vector.load %arg8[%c0_4, %c0_5] : memref<1x4096xf32, #tpu.memory_space<vmem>>, vector<1x4096xf32>
    %7 = vector.broadcast %6 : vector<1x4096xf32> to vector<8x4096xf32>
    %8 = arith.addf %5, %7 : vector<8x4096xf32>
    %cst_6 = arith.constant 0.000000e+00 : f32
    %9 = vector.broadcast %cst_6 : f32 to vector<8x4096xf32>
    %10 = arith.cmpf ogt, %8, %9 : vector<8x4096xf32>
    %11 = math.exp %8 : vector<8x4096xf32>
    %cst_7 = arith.constant 1.000000e+00 : f32
    %12 = vector.broadcast %cst_7 : f32 to vector<8x4096xf32>
    %13 = arith.subf %11, %12 : vector<8x4096xf32>
    %cst_8 = arith.constant 1.67326319 : f32
    %14 = vector.broadcast %cst_8 : f32 to vector<8x4096xf32>
    %15 = arith.mulf %14, %13 : vector<8x4096xf32>
    %16 = arith.select %10, %8, %15 : vector<8x4096xi1>, vector<8x4096xf32>
    %cst_9 = arith.constant 1.05070102 : f32
    %17 = vector.broadcast %cst_9 : f32 to vector<8x4096xf32>
    %18 = arith.mulf %17, %16 : vector<8x4096xf32>
    %c0_10 = arith.constant 0 : index
    %c0_11 = arith.constant 0 : index
    %19 = vector.load %arg15[%c0_10, %c0_11] : memref<8x64xf32, #tpu.memory_space<vmem>>, vector<8x64xf32>
    %c0_12 = arith.constant 0 : index
    %c0_13 = arith.constant 0 : index
    %20 = vector.load %arg9[%c0_12, %c0_13] : memref<4096x64xbf16, #tpu.memory_space<vmem>>, vector<4096x64xbf16>
    %21 = arith.extf %20 : vector<4096x64xbf16> to vector<4096x64xf32>
    %cst_14 = arith.constant dense<0.000000e+00> : vector<8x64xf32>
    %22 = tpu.matmul %18, %21, %cst_14 {dimension_numbers = #tpu.dot_dimension_numbers<[1], [0], [0], [1], [0, 0, 1, 1], [], []>} : vector<8x4096xf32>, vector<4096x64xf32>, vector<8x64xf32> -> vector<8x64xf32>
    %23 = arith.addf %19, %22 : vector<8x64xf32>
    %c0_15 = arith.constant 0 : index
    %c0_16 = arith.constant 0 : index
    %24 = vector.load %arg15[%c0_15, %c0_16] : memref<8x64xf32, #tpu.memory_space<vmem>>, vector<8x64xf32>
    tpu.vector_store %arg15[%c0_15, %c0_16], %23 {strides = array<i32>} : memref<8x64xf32, #tpu.memory_space<vmem>>, vector<8x64xf32>,
    %c0_i32_17 = arith.constant 0 : i32
    %25 = arith.cmpi eq, %arg0, %c0_i32_17 : i32
    %26 = arith.extui %25 : i1 to i32
    %c0_i32_18 = arith.constant 0 : i32
    %27 = arith.cmpi ne, %26, %c0_i32_18 : i32
    scf.if %27 {
      %c0_19 = arith.constant 0 : index
      %c0_20 = arith.constant 0 : index
      %28 = vector.load %arg15[%c0_19, %c0_20] : memref<8x64xf32, #tpu.memory_space<vmem>>, vector<8x64xf32>
      %c0_21 = arith.constant 0 : index
      %c0_22 = arith.constant 0 : index
      %29 = vector.load %arg10[%c0_21, %c0_22] : memref<1x64xf32, #tpu.memory_space<vmem>>, vector<1x64xf32>
      %30 = vector.broadcast %29 : vector<1x64xf32> to vector<8x64xf32>
      %31 = arith.addf %28, %30 : vector<8x64xf32>
      %cst_23 = arith.constant 0.000000e+00 : f32
      %32 = vector.broadcast %cst_23 : f32 to vector<8x64xf32>
      %33 = arith.cmpf ogt, %31, %32 : vector<8x64xf32>
      %34 = math.exp %31 : vector<8x64xf32>
      %cst_24 = arith.constant 1.000000e+00 : f32
      %35 = vector.broadcast %cst_24 : f32 to vector<8x64xf32>
      %36 = arith.subf %34, %35 : vector<8x64xf32>
      %cst_25 = arith.constant 1.67326319 : f32
      %37 = vector.broadcast %cst_25 : f32 to vector<8x64xf32>
      %38 = arith.mulf %37, %36 : vector<8x64xf32>
      %39 = arith.select %33, %31, %38 : vector<8x64xi1>, vector<8x64xf32>
      %cst_26 = arith.constant 1.05070102 : f32
      %40 = vector.broadcast %cst_26 : f32 to vector<8x64xf32>
      %41 = arith.mulf %40, %39 : vector<8x64xf32>
      %c0_27 = arith.constant 0 : index
      %c0_28 = arith.constant 0 : index
      %42 = vector.load %arg11[%c0_27, %c0_28] : memref<1x64xf32, #tpu.memory_space<vmem>>, vector<1x64xf32>
      %43 = vector.broadcast %42 : vector<1x64xf32> to vector<8x64xf32>
      %44 = arith.mulf %41, %43 : vector<8x64xf32>
      %cst_29 = arith.constant dense<0.000000e+00> : vector<8xf32>
      %45 = vector.multi_reduction <add>, %44, %cst_29 [1] : vector<8x64xf32> to vector<8xf32>
      %46 = vector.shape_cast %45 : vector<8xf32> to vector<8x1xf32>
      %c0_30 = arith.constant 0 : index
      %47 = memref.load %arg3[%c0_30] : memref<1xf32, #tpu.memory_space<smem>>
      %48 = vector.broadcast %47 : f32 to vector<8x1xf32>
      %49 = arith.addf %46, %48 : vector<8x1xf32>
      %cst_31 = arith.constant 0.000000e+00 : f32
      %50 = vector.broadcast %cst_31 : f32 to vector<8x1xf32>
      %51 = arith.subf %50, %49 : vector<8x1xf32>
      %52 = math.exp %51 : vector<8x1xf32>
      %cst_32 = arith.constant 1.000000e+00 : f32
      %53 = vector.broadcast %cst_32 : f32 to vector<8x1xf32>
      %54 = arith.addf %53, %52 : vector<8x1xf32>
      %cst_33 = arith.constant 1.000000e+00 : f32
      %55 = vector.broadcast %cst_33 : f32 to vector<8x1xf32>
      %56 = arith.divf %55, %54 : vector<8x1xf32>
      %c0_34 = arith.constant 0 : index
      %c0_35 = arith.constant 0 : index
      %57 = vector.load %arg12[%c0_34, %c0_35] : memref<8x1xf32, #tpu.memory_space<vmem>>, vector<8x1xf32>
      tpu.vector_store %arg12[%c0_34, %c0_35], %56 {strides = array<i32>} : memref<8x1xf32, #tpu.memory_space<vmem>>, vector<8x1xf32>,
      %c0_36 = arith.constant 0 : index
      %c0_37 = arith.constant 0 : index
      %58 = vector.load %arg6[%c0_36, %c0_37] : memref<8x1xf32, #tpu.memory_space<vmem>>, vector<8x1xf32>
      %59 = arith.subf %56, %58 : vector<8x1xf32>
      %60 = math.absf %59 : vector<8x1xf32>
      %61 = vector.shape_cast %60 : vector<8x1xf32> to vector<1x8x1xf32>
      %cst_38 = arith.constant dense<0.000000e+00> : vector<1xf32>
      %62 = vector.multi_reduction <add>, %61, %cst_38 [1, 2] : vector<1x8x1xf32> to vector<1xf32>
      %63 = vector.shape_cast %62 : vector<1xf32> to vector<1x1x1xf32>
      %64 = vector.extract %63[0, 0, 0] : f32 from vector<1x1x1xf32>
      %cst_39 = arith.constant 8.000000e+00 : f32
      %65 = arith.divf %64, %cst_39 : f32
      %c0_40 = arith.constant 0 : index
      %c0_41 = arith.constant 0 : index
      %66 = memref.load %arg13[%c0_40, %c0_41] : memref<1x1xf32, #tpu.memory_space<smem>>
      memref.store %65, %arg13[%c0_40, %c0_41] : memref<1x1xf32, #tpu.memory_space<smem>>
    } else {
    }
    return
  }
  func.func @transform_0(%arg0: i32) -> i32 {
    %c0_i32 = arith.constant 0 : i32
    %c0_i32_0 = arith.constant 0 : i32
    return %c0_i32 : i32
  }
  func.func @transform_1(%arg0: i32) -> i32 {
    %c0_i32 = arith.constant 0 : i32
    %c0_i32_0 = arith.constant 0 : i32
    return %c0_i32 : i32
  }
  func.func @transform_2(%arg0: i32) -> i32 {
    %c0_i32 = arith.constant 0 : i32
    %c0_i32_0 = arith.constant 0 : i32
    return %c0_i32 : i32
  }
  func.func @transform_3(%arg0: i32) -> (i32, i32) {
    %c0_i32 = arith.constant 0 : i32
    %c0_i32_0 = arith.constant 0 : i32
    %c0_i32_1 = arith.constant 0 : i32
    return %c0_i32, %c0_i32_0 : i32, i32
  }
  func.func @transform_4(%arg0: i32) -> (i32, i32) {
    %c0_i32 = arith.constant 0 : i32
    %c0_i32_0 = arith.constant 0 : i32
    %c0_i32_1 = arith.constant 0 : i32
    return %c0_i32, %c0_i32_0 : i32, i32
  }
  func.func @transform_5(%arg0: i32) -> (i32, i32) {
    %c0_i32 = arith.constant 0 : i32
    %c0_i32_0 = arith.constant 0 : i32
    %c0_i32_1 = arith.constant 0 : i32
    return %c0_i32, %c0_i32_0 : i32, i32
  }
  func.func @transform_6(%arg0: i32) -> (i32, i32) {
    %c0_i32 = arith.constant 0 : i32
    %c0_i32_0 = arith.constant 0 : i32
    return %c0_i32, %arg0 : i32, i32
  }
  func.func @transform_7(%arg0: i32) -> (i32, i32) {
    %c0_i32 = arith.constant 0 : i32
    %c0_i32_0 = arith.constant 0 : i32
    return %c0_i32, %arg0 : i32, i32
  }
  func.func @transform_8(%arg0: i32) -> (i32, i32) {
    %c0_i32 = arith.constant 0 : i32
    %c0_i32_0 = arith.constant 0 : i32
    return %arg0, %c0_i32 : i32, i32
  }
  func.func @transform_9(%arg0: i32) -> (i32, i32) {
    %c0_i32 = arith.constant 0 : i32
    %c0_i32_0 = arith.constant 0 : i32
    %c0_i32_1 = arith.constant 0 : i32
    return %c0_i32, %c0_i32_0 : i32, i32
  }
  func.func @transform_10(%arg0: i32) -> (i32, i32) {
    %c0_i32 = arith.constant 0 : i32
    %c0_i32_0 = arith.constant 0 : i32
    %c0_i32_1 = arith.constant 0 : i32
    return %c0_i32, %c0_i32_0 : i32, i32
  }
  func.func @transform_11(%arg0: i32) -> (i32, i32) {
    %c0_i32 = arith.constant 0 : i32
    %c0_i32_0 = arith.constant 0 : i32
    %c0_i32_1 = arith.constant 0 : i32
    return %c0_i32, %c0_i32_0 : i32, i32
  }
  func.func @transform_12(%arg0: i32) -> (i32, i32) {
    %c0_i32 = arith.constant 0 : i32
    %c0_i32_0 = arith.constant 0 : i32
    %c0_i32_1 = arith.constant 0 : i32
    return %c0_i32, %c0_i32_0 : i32, i32
  }
}

</mosaic_0001>

<llo_original>
// kernel: tpu_custom_call.1
$region0: #{tpu_custom_call.1}
  #allocation0 [shape = 'u32[]', space=smem, size = 0x4, offset = 0x4, fixed_abs, tag = 'smem constant byte address 0x4 - core index']
  #allocation1 [shape = 'u32[144,128]{1,0:T(1,128)}', space=vmem, size = 0x12000, scoped, tag = 'internal scratch']
  #allocation2 [shape = 'bf16[8,128]{1,0:T(8,128)(2,1)}', space=vmem, size = 0x800, scoped, tag = 'scratch operand']
  #allocation3 [shape = 'f32[8,64]{1,0:T(8,128)}', space=vmem, size = 0x1000, scoped, tag = 'scratch operand']
  #allocation4 [shape = 'f32[1]{0:T(128)S(6)}', space=smem, size = 0x200, scoped, tag = 'scoped memory for tpu_custom_call.1']
  %s0 = inlined_call_operand.vmem [shape: f32[6], index: 0, kind: input, shape index: {}]
  %s1 = inlined_call_operand.vmem [shape: f32[3], index: 1, kind: input, shape index: {}]
  %s2 = inlined_call_operand.<no memory space> [shape: f32[1], index: 2, kind: input, shape index: {}]
  %s3 = inlined_call_operand.vmem [shape: f32[8,128], index: 3, kind: input, shape index: {}]
  %s4 = inlined_call_operand.vmem [shape: f32[8,128], index: 4, kind: input, shape index: {}]
  %s5 = inlined_call_operand.vmem [shape: f32[8,1], index: 5, kind: input, shape index: {}]
  %s6 = inlined_call_operand.vmem [shape: bf16[128,4096], index: 6, kind: input, shape index: {}]
  %s7 = inlined_call_operand.vmem [shape: f32[1,4096], index: 7, kind: input, shape index: {}]
  %s8 = inlined_call_operand.vmem [shape: bf16[4096,64], index: 8, kind: input, shape index: {}]
  %s9 = inlined_call_operand.vmem [shape: f32[1,64], index: 9, kind: input, shape index: {}]
  %s10 = inlined_call_operand.vmem [shape: f32[1,64], index: 10, kind: input, shape index: {}]
  %s11 = inlined_call_operand.vmem [shape: f32[8,1], index: 11, kind: output, shape index: {0}]
  %s12 = inlined_call_operand.hbm [shape: f32[1,1], index: 12, kind: output, shape index: {1}]
  %13 = xla_tuple %s11, %s12
  %s14 = sld [smem:[#allocation0]]
  $region78: #{tpu_custom_call.1} parent=0
    _
  %s16 = ssub.s32 1, %s14
  %s17 = scalar_select 0, %s16, %s14
  %18 = sst [smem:[#allocation4]] %s2
  $region1: #{tpu_custom_call.1} parent=0
    #allocation5 [shape = 'u8[512]{0}', space=smem, size = 0x200, scoped, tag = 'input window, operand 0, single buffered']
    #allocation6 [shape = 's32[1]{0}', space=sflag, size = 0x4, scoped, tag = 'scoped memory for tpu_custom_call.1']
    #allocation7 [shape = 's32[1]{0}', space=sflag, size = 0x4, scoped, tag = 'scoped memory for tpu_custom_call.1']
    #allocation8 [shape = 'u8[512]{0}', space=smem, size = 0x200, scoped, tag = 'input window, operand 1, single buffered']
    #allocation9 [shape = 's32[1]{0}', space=sflag, size = 0x4, scoped, tag = 'scoped memory for tpu_custom_call.1']
    #allocation10 [shape = 'u8[512]{0}', space=smem, size = 0x200, scoped, tag = 'output window, operand 1, single buffered']
    %19 = vsyncpa [#allocation7], 0
    %20 = vsyncpa [#allocation9], 0
    %21 = vsyncpa [#allocation6], 0
    // Predicated region
    $region2: #{tpu_custom_call.1} parent=1 // pred_check
      _
    $region3: #{tpu_custom_call.1} parent=1 // pred_check_branch
      %23 = sbr.rel (0) target = $region5
    $region4: #{tpu_custom_call.1} parent=1 // pred_region
      %s25 = ssub.s32 16, 16
      %26 = vsyncadd [#allocation7], %s25
      %s28 = sshll.u32 %s0, 4
      %s29 = int_to_ptr.vmem [resolvable:$true] %s28
      %31 = dma.vmem_to_smem %s29, 16, [#allocation5], [#allocation7]
    $region5: #{tpu_custom_call.1} parent=1 // pred_fallthru
      _
    // Predicated region
    $region6: #{tpu_custom_call.1} parent=1 // pred_check
      _
    $region7: #{tpu_custom_call.1} parent=1 // pred_check_branch
      %33 = sbr.rel (0) target = $region9
    $region8: #{tpu_custom_call.1} parent=1 // pred_region
      %s35 = ssub.s32 16, 16
      %36 = vsyncadd [#allocation9], %s35
      %s38 = sshll.u32 %s1, 4
      %s39 = int_to_ptr.vmem [resolvable:$true] %s38
      %41 = dma.vmem_to_smem %s39, 16, [#allocation8], [#allocation9]
    $region9: #{tpu_custom_call.1} parent=1 // pred_fallthru
      _
    // Predicated region
    $region10: #{tpu_custom_call.1} parent=1 // pred_check
      _
    $region11: #{tpu_custom_call.1} parent=1 // pred_check_branch
      %43 = sbr.rel (0) target = $region13
    $region12: #{tpu_custom_call.1} parent=1 // pred_region
      _
    $region13: #{tpu_custom_call.1} parent=1 // pred_fallthru
      _
    // Predicated region
    $region14: #{tpu_custom_call.1} parent=1 // pred_check
      _
    $region15: #{tpu_custom_call.1} parent=1 // pred_check_branch
      %45 = sbr.rel (0) target = $region17
    $region16: #{tpu_custom_call.1} parent=1 // pred_region
      _
    $region17: #{tpu_custom_call.1} parent=1 // pred_fallthru
      _
    // Predicated region
    $region18: #{tpu_custom_call.1} parent=1 // pred_check
      _
    $region19: #{tpu_custom_call.1} parent=1 // pred_check_branch
      %47 = sbr.rel (0) target = $region21
    $region20: #{tpu_custom_call.1} parent=1 // pred_region
      _
    $region21: #{tpu_custom_call.1} parent=1 // pred_fallthru
      _
    // Predicated region
    $region22: #{tpu_custom_call.1} parent=1 // pred_check
      _
    $region23: #{tpu_custom_call.1} parent=1 // pred_check_branch
      %49 = sbr.rel (0) target = $region25
    $region24: #{tpu_custom_call.1} parent=1 // pred_region
      _
    $region25: #{tpu_custom_call.1} parent=1 // pred_fallthru
      _
    // Predicated region
    $region26: #{tpu_custom_call.1} parent=1 // pred_check
      _
    $region27: #{tpu_custom_call.1} parent=1 // pred_check_branch
      %51 = sbr.rel (0) target = $region29
    $region28: #{tpu_custom_call.1} parent=1 // pred_region
      _
    $region29: #{tpu_custom_call.1} parent=1 // pred_fallthru
      _
    // Predicated region
    $region30: #{tpu_custom_call.1} parent=1 // pred_check
      _
    $region31: #{tpu_custom_call.1} parent=1 // pred_check_branch
      %53 = sbr.rel (0) target = $region33
    $region32: #{tpu_custom_call.1} parent=1 // pred_region
      _
    $region33: #{tpu_custom_call.1} parent=1 // pred_fallthru
      _
    // Predicated region
    $region34: #{tpu_custom_call.1} parent=1 // pred_check
      _
    $region35: #{tpu_custom_call.1} parent=1 // pred_check_branch
      %55 = sbr.rel (0) target = $region37
    $region36: #{tpu_custom_call.1} parent=1 // pred_region
      _
    $region37: #{tpu_custom_call.1} parent=1 // pred_fallthru
      _
    // Predicated region
    $region38: #{tpu_custom_call.1} parent=1 // pred_check
      _
    $region39: #{tpu_custom_call.1} parent=1 // pred_check_branch
      %57 = sbr.rel (0) target = $region41
    $region40: #{tpu_custom_call.1} parent=1 // pred_region
      _
    $region41: #{tpu_custom_call.1} parent=1 // pred_fallthru
      _
    // Predicated region
    $region42: #{tpu_custom_call.1} parent=1 // pred_check
      _
    $region43: #{tpu_custom_call.1} parent=1 // pred_check_branch
      %59 = sbr.rel (0) target = $region45
    $region44: #{tpu_custom_call.1} parent=1 // pred_region
      _
    $region45: #{tpu_custom_call.1} parent=1 // pred_fallthru
      _
    // Predicated region
    $region46: #{tpu_custom_call.1} parent=1 // pred_check
      _
    $region47: #{tpu_custom_call.1} parent=1 // pred_check_branch
      %61 = sbr.rel (0) target = $region49
    $region48: #{tpu_custom_call.1} parent=1 // pred_region
      %62 = dma.done [#allocation7], 16
    $region49: #{tpu_custom_call.1} parent=1 // pred_fallthru
      _
    // Predicated region
    $region50: #{tpu_custom_call.1} parent=1 // pred_check
      _
    $region51: #{tpu_custom_call.1} parent=1 // pred_check_branch
      %64 = sbr.rel (0) target = $region53
    $region52: #{tpu_custom_call.1} parent=1 // pred_region
      %65 = dma.done [#allocation9], 16
    $region53: #{tpu_custom_call.1} parent=1 // pred_fallthru
      _
    %66 = sfence
    %p68 = scmp.eq.s32.totalorder 0, 0
    // Predicated region
    $region54: #{tpu_custom_call.1} parent=1 // pred_check
      %p69 = pneg %p68
    $region55: #{tpu_custom_call.1} parent=1 // pred_check_branch
      %71 = sbr.rel (%p69) target = $region57
    $region56: #{tpu_custom_call.1} parent=1 // pred_region
      %v72 = vld [vmem:[%s3] sm:$0xff]
      %v73 = vld [vmem:[%s4] sm:$0xff]
      %s74 = sld [smem:[#allocation5]]
      %v75 = vstv %s74
      %v76 = vmul.f32 %v75, %v72
      %s77 = sld [smem:[#allocation5 + $0x1]]
      %v78 = vstv %s77
      %v79 = vmul.f32 %v78, %v73
      %v80 = vadd.f32 %v76, %v79
      %s81 = sld [smem:[#allocation8]]
      %v82 = vstv %s81
      %v83 = vadd.f32 %v80, %v82
      %s84 = sld [smem:[#allocation5 + $0x2]]
      %v85 = vstv %s84
      %v86 = vmul.f32 %v85, %v72
      %s87 = sld [smem:[#allocation5 + $0x3]]
      %v88 = vstv %s87
      %v89 = vmul.f32 %v88, %v73
      %v90 = vadd.f32 %v86, %v89
      %s91 = sld [smem:[#allocation8 + $0x1]]
      %v92 = vstv %s91
      %v93 = vadd.f32 %v90, %v92
      %s94 = sld [smem:[#allocation5 + $0x4]]
      %v95 = vstv %s94
      %v96 = vmul.f32 %v95, %v83
      %s97 = sld [smem:[#allocation5 + $0x5]]
      %v98 = vstv %s97
      %v99 = vmul.f32 %v98, %v93
      %v100 = vadd.f32 %v96, %v99
      %s101 = sld [smem:[#allocation8 + $0x2]]
      %v102 = vstv %s101
      %v103 = vadd.f32 %v100, %v102
      %vm104 = vcmp.gt.f32.partialorder %v103, 0.0
      %v105 = vmul.f32 %v103, 0.01
      %v106 = vsel %vm104, %v103, %v105
      %v107 = vpack.c.bf16 %v106, %v106
      %108 = vst [vmem:[#allocation2] sm:$0xf] %v107
      %vm109 = vcmask 523264
      %110 = vst.msk [vmem:[#allocation3] sm:$0xff] %vm109, 0.0
    $region57: #{tpu_custom_call.1} parent=1 // pred_fallthru
      _
    %v111 = vld [vmem:[#allocation2] sm:$0xf]
    %v112 = vld [vmem:[%s6] sm:$0xff]
    %v113 = vld [vmem:[%s6 + $0x8] sm:$0xff]
    %v114 = vld [vmem:[%s6 + $0x10] sm:$0xff]
    %v115 = vld [vmem:[%s6 + $0x18] sm:$0xff]
    %v116 = vld [vmem:[%s6 + $0x20] sm:$0xff]
    %v117 = vld [vmem:[%s6 + $0x28] sm:$0xff]
    %v118 = vld [vmem:[%s6 + $0x30] sm:$0xff]
    %v119 = vld [vmem:[%s6 + $0x38] sm:$0xff]
    %v120 = vld [vmem:[%s6 + $0x40] sm:$0xff]
    %v121 = vld [vmem:[%s6 + $0x48] sm:$0xff]
    %v122 = vld [vmem:[%s6 + $0x50] sm:$0xff]
    %v123 = vld [vmem:[%s6 + $0x58] sm:$0xff]
    %v124 = vld [vmem:[%s6 + $0x60] sm:$0xff]
    %v125 = vld [vmem:[%s6 + $0x68] sm:$0xff]
    %v126 = vld [vmem:[%s6 + $0x70] sm:$0xff]
    %v127 = vld [vmem:[%s6 + $0x78] sm:$0xff]
    %v128 = vld [vmem:[%s6 + $0x80] sm:$0xff]
    %v129 = vld [vmem:[%s6 + $0x88] sm:$0xff]
    %v130 = vld [vmem:[%s6 + $0x90] sm:$0xff]
    %v131 = vld [vmem:[%s6 + $0x98] sm:$0xff]
    %v132 = vld [vmem:[%s6 + $0xa0] sm:$0xff]
    %v133 = vld [vmem:[%s6 + $0xa8] sm:$0xff]
    %v134 = vld [vmem:[%s6 + $0xb0] sm:$0xff]
    %v135 = vld [vmem:[%s6 + $0xb8] sm:$0xff]
    %v136 = vld [vmem:[%s6 + $0xc0] sm:$0xff]
    %v137 = vld [vmem:[%s6 + $0xc8] sm:$0xff]
    %v138 = vld [vmem:[%s6 + $0xd0] sm:$0xff]
    %v139 = vld [vmem:[%s6 + $0xd8] sm:$0xff]
    %v140 = vld [vmem:[%s6 + $0xe0] sm:$0xff]
    %v141 = vld [vmem:[%s6 + $0xe8] sm:$0xff]
    %v142 = vld [vmem:[%s6 + $0xf0] sm:$0xff]
    %v143 = vld [vmem:[%s6 + $0xf8] sm:$0xff]
    %v144 = vld [vmem:[%s6 + $0x100] sm:$0xff]
    %v145 = vld [vmem:[%s6 + $0x108] sm:$0xff]
    %v146 = vld [vmem:[%s6 + $0x110] sm:$0xff]
    %v147 = vld [vmem:[%s6 + $0x118] sm:$0xff]
    %v148 = vld [vmem:[%s6 + $0x120] sm:$0xff]
    %v149 = vld [vmem:[%s6 + $0x128] sm:$0xff]
    %v150 = vld [vmem:[%s6 + $0x130] sm:$0xff]
    %v151 = vld [vmem:[%s6 + $0x138] sm:$0xff]
    %v152 = vld [vmem:[%s6 + $0x140] sm:$0xff]
    %v153 = vld [vmem:[%s6 + $0x148] sm:$0xff]
    %v154 = vld [vmem:[%s6 + $0x150] sm:$0xff]
    %v155 = vld [vmem:[%s6 + $0x158] sm:$0xff]
    %v156 = vld [vmem:[%s6 + $0x160] sm:$0xff]
    %v157 = vld [vmem:[%s6 + $0x168] sm:$0xff]
    %v158 = vld [vmem:[%s6 + $0x170] sm:$0xff]
    %v159 = vld [vmem:[%s6 + $0x178] sm:$0xff]
    %v160 = vld [vmem:[%s6 + $0x180] sm:$0xff]
    %v161 = vld [vmem:[%s6 + $0x188] sm:$0xff]
    %v162 = vld [vmem:[%s6 + $0x190] sm:$0xff]
    %v163 = vld [vmem:[%s6 + $0x198] sm:$0xff]
    %v164 = vld [vmem:[%s6 + $0x1a0] sm:$0xff]
    %v165 = vld [vmem:[%s6 + $0x1a8] sm:$0xff]
    %v166 = vld [vmem:[%s6 + $0x1b0] sm:$0xff]
    %v167 = vld [vmem:[%s6 + $0x1b8] sm:$0xff]
    %v168 = vld [vmem:[%s6 + $0x1c0] sm:$0xff]
    %v169 = vld [vmem:[%s6 + $0x1c8] sm:$0xff]
    %v170 = vld [vmem:[%s6 + $0x1d0] sm:$0xff]
    %v171 = vld [vmem:[%s6 + $0x1d8] sm:$0xff]
    %v172 = vld [vmem:[%s6 + $0x1e0] sm:$0xff]
    %v173 = vld [vmem:[%s6 + $0x1e8] sm:$0xff]
    %v174 = vld [vmem:[%s6 + $0x1f0] sm:$0xff]
    %v175 = vld [vmem:[%s6 + $0x1f8] sm:$0xff]
    %v176 = vld [vmem:[%s6 + $0x200] sm:$0xff]
    %v177 = vld [vmem:[%s6 + $0x208] sm:$0xff]
    %v178 = vld [vmem:[%s6 + $0x210] sm:$0xff]
    %v179 = vld [vmem:[%s6 + $0x218] sm:$0xff]
    %v180 = vld [vmem:[%s6 + $0x220] sm:$0xff]
    %v181 = vld [vmem:[%s6 + $0x228] sm:$0xff]
    %v182 = vld [vmem:[%s6 + $0x230] sm:$0xff]
    %v183 = vld [vmem:[%s6 + $0x238] sm:$0xff]
    %v184 = vld [vmem:[%s6 + $0x240] sm:$0xff]
    %v185 = vld [vmem:[%s6 + $0x248] sm:$0xff]
    %v186 = vld [vmem:[%s6 + $0x250] sm:$0xff]
    %v187 = vld [vmem:[%s6 + $0x258] sm:$0xff]
    %v188 = vld [vmem:[%s6 + $0x260] sm:$0xff]
    %v189 = vld [vmem:[%s6 + $0x268] sm:$0xff]
    %v190 = vld [vmem:[%s6 + $0x270] sm:$0xff]
    %v191 = vld [vmem:[%s6 + $0x278] sm:$0xff]
    %v192 = vld [vmem:[%s6 + $0x280] sm:$0xff]
    %v193 = vld [vmem:[%s6 + $0x288] sm:$0xff]
    %v194 = vld [vmem:[%s6 + $0x290] sm:$0xff]
    %v195 = vld [vmem:[%s6 + $0x298] sm:$0xff]
    %v196 = vld [vmem:[%s6 + $0x2a0] sm:$0xff]
    %v197 = vld [vmem:[%s6 + $0x2a8] sm:$0xff]
    %v198 = vld [vmem:[%s6 + $0x2b0] sm:$0xff]
    %v199 = vld [vmem:[%s6 + $0x2b8] sm:$0xff]
    %v200 = vld [vmem:[%s6 + $0x2c0] sm:$0xff]
    %v201 = vld [vmem:[%s6 + $0x2c8] sm:$0xff]
    %v202 = vld [vmem:[%s6 + $0x2d0] sm:$0xff]
    %v203 = vld [vmem:[%s6 + $0x2d8] sm:$0xff]
    %v204 = vld [vmem:[%s6 + $0x2e0] sm:$0xff]
    %v205 = vld [vmem:[%s6 + $0x2e8] sm:$0xff]
    %v206 = vld [vmem:[%s6 + $0x2f0] sm:$0xff]
    %v207 = vld [vmem:[%s6 + $0x2f8] sm:$0xff]
    %v208 = vld [vmem:[%s6 + $0x300] sm:$0xff]
    %v209 = vld [vmem:[%s6 + $0x308] sm:$0xff]
    %v210 = vld [vmem:[%s6 + $0x310] sm:$0xff]
    %v211 = vld [vmem:[%s6 + $0x318] sm:$0xff]
    %v212 = vld [vmem:[%s6 + $0x320] sm:$0xff]
    %v213 = vld [vmem:[%s6 + $0x328] sm:$0xff]
    %v214 = vld [vmem:[%s6 + $0x330] sm:$0xff]
    %v215 = vld [vmem:[%s6 + $0x338] sm:$0xff]
    %v216 = vld [vmem:[%s6 + $0x340] sm:$0xff]
    %v217 = vld [vmem:[%s6 + $0x348] sm:$0xff]
    %v218 = vld [vmem:[%s6 + $0x350] sm:$0xff]
    %v219 = vld [vmem:[%s6 + $0x358] sm:$0xff]
    %v220 = vld [vmem:[%s6 + $0x360] sm:$0xff]
    %v221 = vld [vmem:[%s6 + $0x368] sm:$0xff]
    %v222 = vld [vmem:[%s6 + $0x370] sm:$0xff]
    %v223 = vld [vmem:[%s6 + $0x378] sm:$0xff]
    %v224 = vld [vmem:[%s6 + $0x380] sm:$0xff]
    %v225 = vld [vmem:[%s6 + $0x388] sm:$0xff]
    %v226 = vld [vmem:[%s6 + $0x390] sm:$0xff]
    %v227 = vld [vmem:[%s6 + $0x398] sm:$0xff]
    %v228 = vld [vmem:[%s6 + $0x3a0] sm:$0xff]
    %v229 = vld [vmem:[%s6 + $0x3a8] sm:$0xff]
    %v230 = vld [vmem:[%s6 + $0x3b0] sm:$0xff]
    %v231 = vld [vmem:[%s6 + $0x3b8] sm:$0xff]
    %v232 = vld [vmem:[%s6 + $0x3c0] sm:$0xff]
    %v233 = vld [vmem:[%s6 + $0x3c8] sm:$0xff]
    %v234 = vld [vmem:[%s6 + $0x3d0] sm:$0xff]
    %v235 = vld [vmem:[%s6 + $0x3d8] sm:$0xff]
    %v236 = vld [vmem:[%s6 + $0x3e0] sm:$0xff]
    %v237 = vld [vmem:[%s6 + $0x3e8] sm:$0xff]
    %v238 = vld [vmem:[%s6 + $0x3f0] sm:$0xff]
    %v239 = vld [vmem:[%s6 + $0x3f8] sm:$0xff]
    %v240 = vld [vmem:[%s6 + $0x400] sm:$0xff]
    %v241 = vld [vmem:[%s6 + $0x408] sm:$0xff]
    %v242 = vld [vmem:[%s6 + $0x410] sm:$0xff]
    %v243 = vld [vmem:[%s6 + $0x418] sm:$0xff]
    %v244 = vld [vmem:[%s6 + $0x420] sm:$0xff]
    %v245 = vld [vmem:[%s6 + $0x428] sm:$0xff]
    %v246 = vld [vmem:[%s6 + $0x430] sm:$0xff]
    %v247 = vld [vmem:[%s6 + $0x438] sm:$0xff]
    %v248 = vld [vmem:[%s6 + $0x440] sm:$0xff]
    %v249 = vld [vmem:[%s6 + $0x448] sm:$0xff]
    %v250 = vld [vmem:[%s6 + $0x450] sm:$0xff]
    %v251 = vld [vmem:[%s6 + $0x458] sm:$0xff]
    %v252 = vld [vmem:[%s6 + $0x460] sm:$0xff]
    %v253 = vld [vmem:[%s6 + $0x468] sm:$0xff]
    %v254 = vld [vmem:[%s6 + $0x470] sm:$0xff]
    %v255 = vld [vmem:[%s6 + $0x478] sm:$0xff]
    %v256 = vld [vmem:[%s6 + $0x480] sm:$0xff]
    %v257 = vld [vmem:[%s6 + $0x488] sm:$0xff]
    %v258 = vld [vmem:[%s6 + $0x490] sm:$0xff]
    %v259 = vld [vmem:[%s6 + $0x498] sm:$0xff]
    %v260 = vld [vmem:[%s6 + $0x4a0] sm:$0xff]
    %v261 = vld [vmem:[%s6 + $0x4a8] sm:$0xff]
    %v262 = vld [vmem:[%s6 + $0x4b0] sm:$0xff]
    %v263 = vld [vmem:[%s6 + $0x4b8] sm:$0xff]
    %v264 = vld [vmem:[%s6 + $0x4c0] sm:$0xff]
    %v265 = vld [vmem:[%s6 + $0x4c8] sm:$0xff]
    %v266 = vld [vmem:[%s6 + $0x4d0] sm:$0xff]
    %v267 = vld [vmem:[%s6 + $0x4d8] sm:$0xff]
    %v268 = vld [vmem:[%s6 + $0x4e0] sm:$0xff]
    %v269 = vld [vmem:[%s6 + $0x4e8] sm:$0xff]
    %v270 = vld [vmem:[%s6 + $0x4f0] sm:$0xff]
    %v271 = vld [vmem:[%s6 + $0x4f8] sm:$0xff]
    %v272 = vld [vmem:[%s6 + $0x500] sm:$0xff]
    %v273 = vld [vmem:[%s6 + $0x508] sm:$0xff]
    %v274 = vld [vmem:[%s6 + $0x510] sm:$0xff]
    %v275 = vld [vmem:[%s6 + $0x518] sm:$0xff]
    %v276 = vld [vmem:[%s6 + $0x520] sm:$0xff]
    %v277 = vld [vmem:[%s6 + $0x528] sm:$0xff]
    %v278 = vld [vmem:[%s6 + $0x530] sm:$0xff]
    %v279 = vld [vmem:[%s6 + $0x538] sm:$0xff]
    %v280 = vld [vmem:[%s6 + $0x540] sm:$0xff]
    %v281 = vld [vmem:[%s6 + $0x548] sm:$0xff]
    %v282 = vld [vmem:[%s6 + $0x550] sm:$0xff]
    %v283 = vld [vmem:[%s6 + $0x558] sm:$0xff]
    %v284 = vld [vmem:[%s6 + $0x560] sm:$0xff]
    %v285 = vld [vmem:[%s6 + $0x568] sm:$0xff]
    %v286 = vld [vmem:[%s6 + $0x570] sm:$0xff]
    %v287 = vld [vmem:[%s6 + $0x578] sm:$0xff]
    %v288 = vld [vmem:[%s6 + $0x580] sm:$0xff]
    %v289 = vld [vmem:[%s6 + $0x588] sm:$0xff]
    %v290 = vld [vmem:[%s6 + $0x590] sm:$0xff]
    %v291 = vld [vmem:[%s6 + $0x598] sm:$0xff]
    %v292 = vld [vmem:[%s6 + $0x5a0] sm:$0xff]
    %v293 = vld [vmem:[%s6 + $0x5a8] sm:$0xff]
    %v294 = vld [vmem:[%s6 + $0x5b0] sm:$0xff]
    %v295 = vld [vmem:[%s6 + $0x5b8] sm:$0xff]
    %v296 = vld [vmem:[%s6 + $0x5c0] sm:$0xff]
    %v297 = vld [vmem:[%s6 + $0x5c8] sm:$0xff]
    %v298 = vld [vmem:[%s6 + $0x5d0] sm:$0xff]
    %v299 = vld [vmem:[%s6 + $0x5d8] sm:$0xff]
    %v300 = vld [vmem:[%s6 + $0x5e0] sm:$0xff]
    %v301 = vld [vmem:[%s6 + $0x5e8] sm:$0xff]
    %v302 = vld [vmem:[%s6 + $0x5f0] sm:$0xff]
    %v303 = vld [vmem:[%s6 + $0x5f8] sm:$0xff]
    %v304 = vld [vmem:[%s6 + $0x600] sm:$0xff]
    %v305 = vld [vmem:[%s6 + $0x608] sm:$0xff]
    %v306 = vld [vmem:[%s6 + $0x610] sm:$0xff]
    %v307 = vld [vmem:[%s6 + $0x618] sm:$0xff]
    %v308 = vld [vmem:[%s6 + $0x620] sm:$0xff]
    %v309 = vld [vmem:[%s6 + $0x628] sm:$0xff]
    %v310 = vld [vmem:[%s6 + $0x630] sm:$0xff]
    %v311 = vld [vmem:[%s6 + $0x638] sm:$0xff]
    %v312 = vld [vmem:[%s6 + $0x640] sm:$0xff]
    %v313 = vld [vmem:[%s6 + $0x648] sm:$0xff]
    %v314 = vld [vmem:[%s6 + $0x650] sm:$0xff]
    %v315 = vld [vmem:[%s6 + $0x658] sm:$0xff]
    %v316 = vld [vmem:[%s6 + $0x660] sm:$0xff]
    %v317 = vld [vmem:[%s6 + $0x668] sm:$0xff]
    %v318 = vld [vmem:[%s6 + $0x670] sm:$0xff]
    %v319 = vld [vmem:[%s6 + $0x678] sm:$0xff]
    %v320 = vld [vmem:[%s6 + $0x680] sm:$0xff]
    %v321 = vld [vmem:[%s6 + $0x688] sm:$0xff]
    %v322 = vld [vmem:[%s6 + $0x690] sm:$0xff]
    %v323 = vld [vmem:[%s6 + $0x698] sm:$0xff]
    %v324 = vld [vmem:[%s6 + $0x6a0] sm:$0xff]
    %v325 = vld [vmem:[%s6 + $0x6a8] sm:$0xff]
    %v326 = vld [vmem:[%s6 + $0x6b0] sm:$0xff]
    %v327 = vld [vmem:[%s6 + $0x6b8] sm:$0xff]
    %v328 = vld [vmem:[%s6 + $0x6c0] sm:$0xff]
    %v329 = vld [vmem:[%s6 + $0x6c8] sm:$0xff]
    %v330 = vld [vmem:[%s6 + $0x6d0] sm:$0xff]
    %v331 = vld [vmem:[%s6 + $0x6d8] sm:$0xff]
    %v332 = vld [vmem:[%s6 + $0x6e0] sm:$0xff]
    %v333 = vld [vmem:[%s6 + $0x6e8] sm:$0xff]
    %v334 = vld [vmem:[%s6 + $0x6f0] sm:$0xff]
    %v335 = vld [vmem:[%s6 + $0x6f8] sm:$0xff]
    %v336 = vld [vmem:[%s6 + $0x700] sm:$0xff]
    %v337 = vld [vmem:[%s6 + $0x708] sm:$0xff]
    %v338 = vld [vmem:[%s6 + $0x710] sm:$0xff]
    %v339 = vld [vmem:[%s6 + $0x718] sm:$0xff]
    %v340 = vld [vmem:[%s6 + $0x720] sm:$0xff]
    %v341 = vld [vmem:[%s6 + $0x728] sm:$0xff]
    %v342 = vld [vmem:[%s6 + $0x730] sm:$0xff]
    %v343 = vld [vmem:[%s6 + $0x738] sm:$0xff]
    %v344 = vld [vmem:[%s6 + $0x740] sm:$0xff]
    %v345 = vld [vmem:[%s6 + $0x748] sm:$0xff]
    %v346 = vld [vmem:[%s6 + $0x750] sm:$0xff]
    %v347 = vld [vmem:[%s6 + $0x758] sm:$0xff]
    %v348 = vld [vmem:[%s6 + $0x760] sm:$0xff]
    %v349 = vld [vmem:[%s6 + $0x768] sm:$0xff]
    %v350 = vld [vmem:[%s6 + $0x770] sm:$0xff]
    %v351 = vld [vmem:[%s6 + $0x778] sm:$0xff]
    %v352 = vld [vmem:[%s6 + $0x780] sm:$0xff]
    %v353 = vld [vmem:[%s6 + $0x788] sm:$0xff]
    %v354 = vld [vmem:[%s6 + $0x790] sm:$0xff]
    %v355 = vld [vmem:[%s6 + $0x798] sm:$0xff]
    %v356 = vld [vmem:[%s6 + $0x7a0] sm:$0xff]
    %v357 = vld [vmem:[%s6 + $0x7a8] sm:$0xff]
    %v358 = vld [vmem:[%s6 + $0x7b0] sm:$0xff]
    %v359 = vld [vmem:[%s6 + $0x7b8] sm:$0xff]
    %v360 = vld [vmem:[%s6 + $0x7c0] sm:$0xff]
    %v361 = vld [vmem:[%s6 + $0x7c8] sm:$0xff]
    %v362 = vld [vmem:[%s6 + $0x7d0] sm:$0xff]
    %v363 = vld [vmem:[%s6 + $0x7d8] sm:$0xff]
    %v364 = vld [vmem:[%s6 + $0x7e0] sm:$0xff]
    %v365 = vld [vmem:[%s6 + $0x7e8] sm:$0xff]
    %v366 = vld [vmem:[%s6 + $0x7f0] sm:$0xff]
    %v367 = vld [vmem:[%s6 + $0x7f8] sm:$0xff]
    %v368 = vld [vmem:[%s7] sm:$0xff]
    %v369 = vld [vmem:[%s7 + $0x8] sm:$0xff]
    %v370 = vld [vmem:[%s7 + $0x10] sm:$0xff]
    %v371 = vld [vmem:[%s7 + $0x18] sm:$0xff]
    %v376 = vlaneseq
    %v377 = vshrl.u32 %v376, 7
    %v378 = vsub.s32 0, %v377
    %v379 = vrot.slane %v368, %v378
    %v380 = vlaneseq
    %v381 = vshrl.u32 %v380, 7
    %v382 = vsub.s32 1, %v381
    %v383 = vrot.slane %v368, %v382
    %v384 = vlaneseq
    %v385 = vshrl.u32 %v384, 7
    %v386 = vsub.s32 2, %v385
    %v387 = vrot.slane %v368, %v386
    %v388 = vlaneseq
    %v389 = vshrl.u32 %v388, 7
    %v390 = vsub.s32 3, %v389
    %v391 = vrot.slane %v368, %v390
    %v392 = vlaneseq
    %v393 = vshrl.u32 %v392, 7
    %v394 = vsub.s32 4, %v393
    %v395 = vrot.slane %v368, %v394
    %v396 = vlaneseq
    %v397 = vshrl.u32 %v396, 7
    %v398 = vsub.s32 5, %v397
    %v399 = vrot.slane %v368, %v398
    %v400 = vlaneseq
    %v401 = vshrl.u32 %v400, 7
    %v402 = vsub.s32 6, %v401
    %v403 = vrot.slane %v368, %v402
    %v404 = vlaneseq
    %v405 = vshrl.u32 %v404, 7
    %v406 = vsub.s32 7, %v405
    %v407 = vrot.slane %v368, %v406
    %v408 = vlaneseq
    %v409 = vshrl.u32 %v408, 7
    %v410 = vsub.s32 0, %v409
    %v411 = vrot.slane %v369, %v410
    %v412 = vlaneseq
    %v413 = vshrl.u32 %v412, 7
    %v414 = vsub.s32 1, %v413
    %v415 = vrot.slane %v369, %v414
    %v416 = vlaneseq
    %v417 = vshrl.u32 %v416, 7
    %v418 = vsub.s32 2, %v417
    %v419 = vrot.slane %v369, %v418
    %v420 = vlaneseq
    %v421 = vshrl.u32 %v420, 7
    %v422 = vsub.s32 3, %v421
    %v423 = vrot.slane %v369, %v422
    %v424 = vlaneseq
    %v425 = vshrl.u32 %v424, 7
    %v426 = vsub.s32 4, %v425
    %v427 = vrot.slane %v369, %v426
    %v428 = vlaneseq
    %v429 = vshrl.u32 %v428, 7
    %v430 = vsub.s32 5, %v429
    %v431 = vrot.slane %v369, %v430
    %v432 = vlaneseq
    %v433 = vshrl.u32 %v432, 7
    %v434 = vsub.s32 6, %v433
    %v435 = vrot.slane %v369, %v434
    %v436 = vlaneseq
    %v437 = vshrl.u32 %v436, 7
    %v438 = vsub.s32 7, %v437
    %v439 = vrot.slane %v369, %v438
    %v440 = vlaneseq
    %v441 = vshrl.u32 %v440, 7
    %v442 = vsub.s32 0, %v441
    %v443 = vrot.slane %v370, %v442
    %v444 = vlaneseq
    %v445 = vshrl.u32 %v444, 7
    %v446 = vsub.s32 1, %v445
    %v447 = vrot.slane %v370, %v446
    %v448 = vlaneseq
    %v449 = vshrl.u32 %v448, 7
    %v450 = vsub.s32 2, %v449
    %v451 = vrot.slane %v370, %v450
    %v452 = vlaneseq
    %v453 = vshrl.u32 %v452, 7
    %v454 = vsub.s32 3, %v453
    %v455 = vrot.slane %v370, %v454
    %v456 = vlaneseq
    %v457 = vshrl.u32 %v456, 7
    %v458 = vsub.s32 4, %v457
    %v459 = vrot.slane %v370, %v458
    %v460 = vlaneseq
    %v461 = vshrl.u32 %v460, 7
    %v462 = vsub.s32 5, %v461
    %v463 = vrot.slane %v370, %v462
    %v464 = vlaneseq
    %v465 = vshrl.u32 %v464, 7
    %v466 = vsub.s32 6, %v465
    %v467 = vrot.slane %v370, %v466
    %v468 = vlaneseq
    %v469 = vshrl.u32 %v468, 7
    %v470 = vsub.s32 7, %v469
    %v471 = vrot.slane %v370, %v470
    %v472 = vlaneseq
    %v473 = vshrl.u32 %v472, 7
    %v474 = vsub.s32 0, %v473
    %v475 = vrot.slane %v371, %v474
    %v476 = vlaneseq
    %v477 = vshrl.u32 %v476, 7
    %v478 = vsub.s32 1, %v477
    %v479 = vrot.slane %v371, %v478
    %v480 = vlaneseq
    %v481 = vshrl.u32 %v480, 7
    %v482 = vsub.s32 2, %v481
    %v483 = vrot.slane %v371, %v482
    %v484 = vlaneseq
    %v485 = vshrl.u32 %v484, 7
    %v486 = vsub.s32 3, %v485
    %v487 = vrot.slane %v371, %v486
    %v488 = vlaneseq
    %v489 = vshrl.u32 %v488, 7
    %v490 = vsub.s32 4, %v489
    %v491 = vrot.slane %v371, %v490
    %v492 = vlaneseq
    %v493 = vshrl.u32 %v492, 7
    %v494 = vsub.s32 5, %v493
    %v495 = vrot.slane %v371, %v494
    %v496 = vlaneseq
    %v497 = vshrl.u32 %v496, 7
    %v498 = vsub.s32 6, %v497
    %v499 = vrot.slane %v371, %v498
    %v500 = vlaneseq
    %v501 = vshrl.u32 %v500, 7
    %v502 = vsub.s32 7, %v501
    %v503 = vrot.slane %v371, %v502
    %v792 = vunpack.c.l.b16 %v112
    %v793 = vunpack.c.h.b16 %v112
    %v794 = vunpack.c.l.b16 %v113
    %v795 = vunpack.c.h.b16 %v113
    %v796 = vunpack.c.l.b16 %v114
    %v797 = vunpack.c.h.b16 %v114
    %v798 = vunpack.c.l.b16 %v115
    %v799 = vunpack.c.h.b16 %v115
    %v800 = vunpack.c.l.b16 %v116
    %v801 = vunpack.c.h.b16 %v116
    %v802 = vunpack.c.l.b16 %v117
    %v803 = vunpack.c.h.b16 %v117
    %v804 = vunpack.c.l.b16 %v118
    %v805 = vunpack.c.h.b16 %v118
    %v806 = vunpack.c.l.b16 %v119
    %v807 = vunpack.c.h.b16 %v119
    %v808 = vunpack.c.l.b16 %v120
    %v809 = vunpack.c.h.b16 %v120
    %v810 = vunpack.c.l.b16 %v121
    %v811 = vunpack.c.h.b16 %v121
    %v812 = vunpack.c.l.b16 %v122
    %v813 = vunpack.c.h.b16 %v122
    %v814 = vunpack.c.l.b16 %v123
    %v815 = vunpack.c.h.b16 %v123
    %v816 = vunpack.c.l.b16 %v124
    %v817 = vunpack.c.h.b16 %v124
    %v818 = vunpack.c.l.b16 %v125
    %v819 = vunpack.c.h.b16 %v125
    %v820 = vunpack.c.l.b16 %v126
    %v821 = vunpack.c.h.b16 %v126
    %v822 = vunpack.c.l.b16 %v127
    %v823 = vunpack.c.h.b16 %v127
    %v824 = vunpack.c.l.b16 %v128
    %v825 = vunpack.c.h.b16 %v128
    %v826 = vunpack.c.l.b16 %v129
    %v827 = vunpack.c.h.b16 %v129
    %v828 = vunpack.c.l.b16 %v130
    %v829 = vunpack.c.h.b16 %v130
    %v830 = vunpack.c.l.b16 %v131
    %v831 = vunpack.c.h.b16 %v131
    %v832 = vunpack.c.l.b16 %v132
    %v833 = vunpack.c.h.b16 %v132
    %v834 = vunpack.c.l.b16 %v133
    %v835 = vunpack.c.h.b16 %v133
    %v836 = vunpack.c.l.b16 %v134
    %v837 = vunpack.c.h.b16 %v134
    %v838 = vunpack.c.l.b16 %v135
    %v839 = vunpack.c.h.b16 %v135
    %v840 = vunpack.c.l.b16 %v136
    %v841 = vunpack.c.h.b16 %v136
    %v842 = vunpack.c.l.b16 %v137
    %v843 = vunpack.c.h.b16 %v137
    %v844 = vunpack.c.l.b16 %v138
    %v845 = vunpack.c.h.b16 %v138
    %v846 = vunpack.c.l.b16 %v139
    %v847 = vunpack.c.h.b16 %v139
    %v848 = vunpack.c.l.b16 %v140
    %v849 = vunpack.c.h.b16 %v140
    %v850 = vunpack.c.l.b16 %v141
    %v851 = vunpack.c.h.b16 %v141
    %v852 = vunpack.c.l.b16 %v142
    %v853 = vunpack.c.h.b16 %v142
    %v854 = vunpack.c.l.b16 %v143
    %v855 = vunpack.c.h.b16 %v143
    %v856 = vunpack.c.l.b16 %v144
    %v857 = vunpack.c.h.b16 %v144
    %v858 = vunpack.c.l.b16 %v145
    %v859 = vunpack.c.h.b16 %v145
    %v860 = vunpack.c.l.b16 %v146
    %v861 = vunpack.c.h.b16 %v146
    %v862 = vunpack.c.l.b16 %v147
    %v863 = vunpack.c.h.b16 %v147
    %v864 = vunpack.c.l.b16 %v148
    %v865 = vunpack.c.h.b16 %v148
    %v866 = vunpack.c.l.b16 %v149
    %v867 = vunpack.c.h.b16 %v149
    %v868 = vunpack.c.l.b16 %v150
    %v869 = vunpack.c.h.b16 %v150
    %v870 = vunpack.c.l.b16 %v151
    %v871 = vunpack.c.h.b16 %v151
    %v872 = vunpack.c.l.b16 %v152
    %v873 = vunpack.c.h.b16 %v152
    %v874 = vunpack.c.l.b16 %v153
    %v875 = vunpack.c.h.b16 %v153
    %v876 = vunpack.c.l.b16 %v154
    %v877 = vunpack.c.h.b16 %v154
    %v878 = vunpack.c.l.b16 %v155
    %v879 = vunpack.c.h.b16 %v155
    %v880 = vunpack.c.l.b16 %v156
    %v881 = vunpack.c.h.b16 %v156
    %v882 = vunpack.c.l.b16 %v157
    %v883 = vunpack.c.h.b16 %v157
    %v884 = vunpack.c.l.b16 %v158
    %v885 = vunpack.c.h.b16 %v158
    %v886 = vunpack.c.l.b16 %v159
    %v887 = vunpack.c.h.b16 %v159
    %v888 = vunpack.c.l.b16 %v160
    %v889 = vunpack.c.h.b16 %v160
    %v890 = vunpack.c.l.b16 %v161
    %v891 = vunpack.c.h.b16 %v161
    %v892 = vunpack.c.l.b16 %v162
    %v893 = vunpack.c.h.b16 %v162
    %v894 = vunpack.c.l.b16 %v163
    %v895 = vunpack.c.h.b16 %v163
    %v896 = vunpack.c.l.b16 %v164
    %v897 = vunpack.c.h.b16 %v164
    %v898 = vunpack.c.l.b16 %v165
    %v899 = vunpack.c.h.b16 %v165
    %v900 = vunpack.c.l.b16 %v166
    %v901 = vunpack.c.h.b16 %v166
    %v902 = vunpack.c.l.b16 %v167
    %v903 = vunpack.c.h.b16 %v167
    %v904 = vunpack.c.l.b16 %v168
    %v905 = vunpack.c.h.b16 %v168
    %v906 = vunpack.c.l.b16 %v169
    %v907 = vunpack.c.h.b16 %v169
    %v908 = vunpack.c.l.b16 %v170
    %v909 = vunpack.c.h.b16 %v170
    %v910 = vunpack.c.l.b16 %v171
    %v911 = vunpack.c.h.b16 %v171
    %v912 = vunpack.c.l.b16 %v172
    %v913 = vunpack.c.h.b16 %v172
    %v914 = vunpack.c.l.b16 %v173
    %v915 = vunpack.c.h.b16 %v173
    %v916 = vunpack.c.l.b16 %v174
    %v917 = vunpack.c.h.b16 %v174
    %v918 = vunpack.c.l.b16 %v175
    %v919 = vunpack.c.h.b16 %v175
    %v920 = vunpack.c.l.b16 %v176
    %v921 = vunpack.c.h.b16 %v176
    %v922 = vunpack.c.l.b16 %v177
    %v923 = vunpack.c.h.b16 %v177
    %v924 = vunpack.c.l.b16 %v178
    %v925 = vunpack.c.h.b16 %v178
    %v926 = vunpack.c.l.b16 %v179
    %v927 = vunpack.c.h.b16 %v179
    %v928 = vunpack.c.l.b16 %v180
    %v929 = vunpack.c.h.b16 %v180
    %v930 = vunpack.c.l.b16 %v181
    %v931 = vunpack.c.h.b16 %v181
    %v932 = vunpack.c.l.b16 %v182
    %v933 = vunpack.c.h.b16 %v182
    %v934 = vunpack.c.l.b16 %v183
    %v935 = vunpack.c.h.b16 %v183
    %v936 = vunpack.c.l.b16 %v184
    %v937 = vunpack.c.h.b16 %v184
    %v938 = vunpack.c.l.b16 %v185
    %v939 = vunpack.c.h.b16 %v185
    %v940 = vunpack.c.l.b16 %v186
    %v941 = vunpack.c.h.b16 %v186
    %v942 = vunpack.c.l.b16 %v187
    %v943 = vunpack.c.h.b16 %v187
    %v944 = vunpack.c.l.b16 %v188
    %v945 = vunpack.c.h.b16 %v188
    %v946 = vunpack.c.l.b16 %v189
    %v947 = vunpack.c.h.b16 %v189
    %v948 = vunpack.c.l.b16 %v190
    %v949 = vunpack.c.h.b16 %v190
    %v950 = vunpack.c.l.b16 %v191
    %v951 = vunpack.c.h.b16 %v191
    %v952 = vunpack.c.l.b16 %v192
    %v953 = vunpack.c.h.b16 %v192
    %v954 = vunpack.c.l.b16 %v193
    %v955 = vunpack.c.h.b16 %v193
    %v956 = vunpack.c.l.b16 %v194
    %v957 = vunpack.c.h.b16 %v194
    %v958 = vunpack.c.l.b16 %v195
    %v959 = vunpack.c.h.b16 %v195
    %v960 = vunpack.c.l.b16 %v196
    %v961 = vunpack.c.h.b16 %v196
    %v962 = vunpack.c.l.b16 %v197
    %v963 = vunpack.c.h.b16 %v197
    %v964 = vunpack.c.l.b16 %v198
    %v965 = vunpack.c.h.b16 %v198
    %v966 = vunpack.c.l.b16 %v199
    %v967 = vunpack.c.h.b16 %v199
    %v968 = vunpack.c.l.b16 %v200
    %v969 = vunpack.c.h.b16 %v200
    %v970 = vunpack.c.l.b16 %v201
    %v971 = vunpack.c.h.b16 %v201
    %v972 = vunpack.c.l.b16 %v202
    %v973 = vunpack.c.h.b16 %v202
    %v974 = vunpack.c.l.b16 %v203
    %v975 = vunpack.c.h.b16 %v203
    %v976 = vunpack.c.l.b16 %v204
    %v977 = vunpack.c.h.b16 %v204
    %v978 = vunpack.c.l.b16 %v205
    %v979 = vunpack.c.h.b16 %v205
    %v980 = vunpack.c.l.b16 %v206
    %v981 = vunpack.c.h.b16 %v206
    %v982 = vunpack.c.l.b16 %v207
    %v983 = vunpack.c.h.b16 %v207
    %v984 = vunpack.c.l.b16 %v208
    %v985 = vunpack.c.h.b16 %v208
    %v986 = vunpack.c.l.b16 %v209
    %v987 = vunpack.c.h.b16 %v209
    %v988 = vunpack.c.l.b16 %v210
    %v989 = vunpack.c.h.b16 %v210
    %v990 = vunpack.c.l.b16 %v211
    %v991 = vunpack.c.h.b16 %v211
    %v992 = vunpack.c.l.b16 %v212
    %v993 = vunpack.c.h.b16 %v212
    %v994 = vunpack.c.l.b16 %v213
    %v995 = vunpack.c.h.b16 %v213
    %v996 = vunpack.c.l.b16 %v214
    %v997 = vunpack.c.h.b16 %v214
    %v998 = vunpack.c.l.b16 %v215
    %v999 = vunpack.c.h.b16 %v215
    %v1000 = vunpack.c.l.b16 %v216
    %v1001 = vunpack.c.h.b16 %v216
    %v1002 = vunpack.c.l.b16 %v217
    %v1003 = vunpack.c.h.b16 %v217
    %v1004 = vunpack.c.l.b16 %v218
    %v1005 = vunpack.c.h.b16 %v218
    %v1006 = vunpack.c.l.b16 %v219
    %v1007 = vunpack.c.h.b16 %v219
    %v1008 = vunpack.c.l.b16 %v220
    %v1009 = vunpack.c.h.b16 %v220
    %v1010 = vunpack.c.l.b16 %v221
    %v1011 = vunpack.c.h.b16 %v221
    %v1012 = vunpack.c.l.b16 %v222
    %v1013 = vunpack.c.h.b16 %v222
    %v1014 = vunpack.c.l.b16 %v223
    %v1015 = vunpack.c.h.b16 %v223
    %v1016 = vunpack.c.l.b16 %v224
    %v1017 = vunpack.c.h.b16 %v224
    %v1018 = vunpack.c.l.b16 %v225
    %v1019 = vunpack.c.h.b16 %v225
    %v1020 = vunpack.c.l.b16 %v226
    %v1021 = vunpack.c.h.b16 %v226
    %v1022 = vunpack.c.l.b16 %v227
    %v1023 = vunpack.c.h.b16 %v227
    %v1024 = vunpack.c.l.b16 %v228
    %v1025 = vunpack.c.h.b16 %v228
    %v1026 = vunpack.c.l.b16 %v229
    %v1027 = vunpack.c.h.b16 %v229
    %v1028 = vunpack.c.l.b16 %v230
    %v1029 = vunpack.c.h.b16 %v230
    %v1030 = vunpack.c.l.b16 %v231
    %v1031 = vunpack.c.h.b16 %v231
    %v1032 = vunpack.c.l.b16 %v232
    %v1033 = vunpack.c.h.b16 %v232
    %v1034 = vunpack.c.l.b16 %v233
    %v1035 = vunpack.c.h.b16 %v233
    %v1036 = vunpack.c.l.b16 %v234
    %v1037 = vunpack.c.h.b16 %v234
    %v1038 = vunpack.c.l.b16 %v235
    %v1039 = vunpack.c.h.b16 %v235
    %v1040 = vunpack.c.l.b16 %v236
    %v1041 = vunpack.c.h.b16 %v236
    %v1042 = vunpack.c.l.b16 %v237
    %v1043 = vunpack.c.h.b16 %v237
    %v1044 = vunpack.c.l.b16 %v238
    %v1045 = vunpack.c.h.b16 %v238
    %v1046 = vunpack.c.l.b16 %v239
    %v1047 = vunpack.c.h.b16 %v239
    %v1048 = vunpack.c.l.b16 %v240
    %v1049 = vunpack.c.h.b16 %v240
    %v1050 = vunpack.c.l.b16 %v241
    %v1051 = vunpack.c.h.b16 %v241
    %v1052 = vunpack.c.l.b16 %v242
    %v1053 = vunpack.c.h.b16 %v242
    %v1054 = vunpack.c.l.b16 %v243
    %v1055 = vunpack.c.h.b16 %v243
    %v1056 = vunpack.c.l.b16 %v244
    %v1057 = vunpack.c.h.b16 %v244
    %v1058 = vunpack.c.l.b16 %v245
    %v1059 = vunpack.c.h.b16 %v245
    %v1060 = vunpack.c.l.b16 %v246
    %v1061 = vunpack.c.h.b16 %v246
    %v1062 = vunpack.c.l.b16 %v247
    %v1063 = vunpack.c.h.b16 %v247
    %v1064 = vunpack.c.l.b16 %v248
    %v1065 = vunpack.c.h.b16 %v248
    %v1066 = vunpack.c.l.b16 %v249
    %v1067 = vunpack.c.h.b16 %v249
    %v1068 = vunpack.c.l.b16 %v250
    %v1069 = vunpack.c.h.b16 %v250
    %v1070 = vunpack.c.l.b16 %v251
    %v1071 = vunpack.c.h.b16 %v251
    %v1072 = vunpack.c.l.b16 %v252
    %v1073 = vunpack.c.h.b16 %v252
    %v1074 = vunpack.c.l.b16 %v253
    %v1075 = vunpack.c.h.b16 %v253
    %v1076 = vunpack.c.l.b16 %v254
    %v1077 = vunpack.c.h.b16 %v254
    %v1078 = vunpack.c.l.b16 %v255
    %v1079 = vunpack.c.h.b16 %v255
    %v1080 = vunpack.c.l.b16 %v256
    %v1081 = vunpack.c.h.b16 %v256
    %v1082 = vunpack.c.l.b16 %v257
    %v1083 = vunpack.c.h.b16 %v257
    %v1084 = vunpack.c.l.b16 %v258
    %v1085 = vunpack.c.h.b16 %v258
    %v1086 = vunpack.c.l.b16 %v259
    %v1087 = vunpack.c.h.b16 %v259
    %v1088 = vunpack.c.l.b16 %v260
    %v1089 = vunpack.c.h.b16 %v260
    %v1090 = vunpack.c.l.b16 %v261
    %v1091 = vunpack.c.h.b16 %v261
    %v1092 = vunpack.c.l.b16 %v262
    %v1093 = vunpack.c.h.b16 %v262
    %v1094 = vunpack.c.l.b16 %v263
    %v1095 = vunpack.c.h.b16 %v263
    %v1096 = vunpack.c.l.b16 %v264
    %v1097 = vunpack.c.h.b16 %v264
    %v1098 = vunpack.c.l.b16 %v265
    %v1099 = vunpack.c.h.b16 %v265
    %v1100 = vunpack.c.l.b16 %v266
    %v1101 = vunpack.c.h.b16 %v266
    %v1102 = vunpack.c.l.b16 %v267
    %v1103 = vunpack.c.h.b16 %v267
    %v1104 = vunpack.c.l.b16 %v268
    %v1105 = vunpack.c.h.b16 %v268
    %v1106 = vunpack.c.l.b16 %v269
    %v1107 = vunpack.c.h.b16 %v269
    %v1108 = vunpack.c.l.b16 %v270
    %v1109 = vunpack.c.h.b16 %v270
    %v1110 = vunpack.c.l.b16 %v271
    %v1111 = vunpack.c.h.b16 %v271
    %v1112 = vunpack.c.l.b16 %v272
    %v1113 = vunpack.c.h.b16 %v272
    %v1114 = vunpack.c.l.b16 %v273
    %v1115 = vunpack.c.h.b16 %v273
    %v1116 = vunpack.c.l.b16 %v274
    %v1117 = vunpack.c.h.b16 %v274
    %v1118 = vunpack.c.l.b16 %v275
    %v1119 = vunpack.c.h.b16 %v275
    %v1120 = vunpack.c.l.b16 %v276
    %v1121 = vunpack.c.h.b16 %v276
    %v1122 = vunpack.c.l.b16 %v277
    %v1123 = vunpack.c.h.b16 %v277
    %v1124 = vunpack.c.l.b16 %v278
    %v1125 = vunpack.c.h.b16 %v278
    %v1126 = vunpack.c.l.b16 %v279
    %v1127 = vunpack.c.h.b16 %v279
    %v1128 = vunpack.c.l.b16 %v280
    %v1129 = vunpack.c.h.b16 %v280
    %v1130 = vunpack.c.l.b16 %v281
    %v1131 = vunpack.c.h.b16 %v281
    %v1132 = vunpack.c.l.b16 %v282
    %v1133 = vunpack.c.h.b16 %v282
    %v1134 = vunpack.c.l.b16 %v283
    %v1135 = vunpack.c.h.b16 %v283
    %v1136 = vunpack.c.l.b16 %v284
    %v1137 = vunpack.c.h.b16 %v284
    %v1138 = vunpack.c.l.b16 %v285
    %v1139 = vunpack.c.h.b16 %v285
    %v1140 = vunpack.c.l.b16 %v286
    %v1141 = vunpack.c.h.b16 %v286
    %v1142 = vunpack.c.l.b16 %v287
    %v1143 = vunpack.c.h.b16 %v287
    %v1144 = vunpack.c.l.b16 %v288
    %v1145 = vunpack.c.h.b16 %v288
    %v1146 = vunpack.c.l.b16 %v289
    %v1147 = vunpack.c.h.b16 %v289
    %v1148 = vunpack.c.l.b16 %v290
    %v1149 = vunpack.c.h.b16 %v290
    %v1150 = vunpack.c.l.b16 %v291
    %v1151 = vunpack.c.h.b16 %v291
    %v1152 = vunpack.c.l.b16 %v292
    %v1153 = vunpack.c.h.b16 %v292
    %v1154 = vunpack.c.l.b16 %v293
    %v1155 = vunpack.c.h.b16 %v293
    %v1156 = vunpack.c.l.b16 %v294
    %v1157 = vunpack.c.h.b16 %v294
    %v1158 = vunpack.c.l.b16 %v295
    %v1159 = vunpack.c.h.b16 %v295
    %v1160 = vunpack.c.l.b16 %v296
    %v1161 = vunpack.c.h.b16 %v296
    %v1162 = vunpack.c.l.b16 %v297
    %v1163 = vunpack.c.h.b16 %v297
    %v1164 = vunpack.c.l.b16 %v298
    %v1165 = vunpack.c.h.b16 %v298
    %v1166 = vunpack.c.l.b16 %v299
    %v1167 = vunpack.c.h.b16 %v299
    %v1168 = vunpack.c.l.b16 %v300
    %v1169 = vunpack.c.h.b16 %v300
    %v1170 = vunpack.c.l.b16 %v301
    %v1171 = vunpack.c.h.b16 %v301
    %v1172 = vunpack.c.l.b16 %v302
    %v1173 = vunpack.c.h.b16 %v302
    %v1174 = vunpack.c.l.b16 %v303
    %v1175 = vunpack.c.h.b16 %v303
    %v1176 = vunpack.c.l.b16 %v304
    %v1177 = vunpack.c.h.b16 %v304
    %v1178 = vunpack.c.l.b16 %v305
    %v1179 = vunpack.c.h.b16 %v305
    %v1180 = vunpack.c.l.b16 %v306
    %v1181 = vunpack.c.h.b16 %v306
    %v1182 = vunpack.c.l.b16 %v307
    %v1183 = vunpack.c.h.b16 %v307
    %v1184 = vunpack.c.l.b16 %v308
    %v1185 = vunpack.c.h.b16 %v308
    %v1186 = vunpack.c.l.b16 %v309
    %v1187 = vunpack.c.h.b16 %v309
    %v1188 = vunpack.c.l.b16 %v310
    %v1189 = vunpack.c.h.b16 %v310
    %v1190 = vunpack.c.l.b16 %v311
    %v1191 = vunpack.c.h.b16 %v311
    %v1192 = vunpack.c.l.b16 %v312
    %v1193 = vunpack.c.h.b16 %v312
    %v1194 = vunpack.c.l.b16 %v313
    %v1195 = vunpack.c.h.b16 %v313
    %v1196 = vunpack.c.l.b16 %v314
    %v1197 = vunpack.c.h.b16 %v314
    %v1198 = vunpack.c.l.b16 %v315
    %v1199 = vunpack.c.h.b16 %v315
    %v1200 = vunpack.c.l.b16 %v316
    %v1201 = vunpack.c.h.b16 %v316
    %v1202 = vunpack.c.l.b16 %v317
    %v1203 = vunpack.c.h.b16 %v317
    %v1204 = vunpack.c.l.b16 %v318
    %v1205 = vunpack.c.h.b16 %v318
    %v1206 = vunpack.c.l.b16 %v319
    %v1207 = vunpack.c.h.b16 %v319
    %v1208 = vunpack.c.l.b16 %v320
    %v1209 = vunpack.c.h.b16 %v320
    %v1210 = vunpack.c.l.b16 %v321
    %v1211 = vunpack.c.h.b16 %v321
    %v1212 = vunpack.c.l.b16 %v322
    %v1213 = vunpack.c.h.b16 %v322
    %v1214 = vunpack.c.l.b16 %v323
    %v1215 = vunpack.c.h.b16 %v323
    %v1216 = vunpack.c.l.b16 %v324
    %v1217 = vunpack.c.h.b16 %v324
    %v1218 = vunpack.c.l.b16 %v325
    %v1219 = vunpack.c.h.b16 %v325
    %v1220 = vunpack.c.l.b16 %v326
    %v1221 = vunpack.c.h.b16 %v326
    %v1222 = vunpack.c.l.b16 %v327
    %v1223 = vunpack.c.h.b16 %v327
    %v1224 = vunpack.c.l.b16 %v328
    %v1225 = vunpack.c.h.b16 %v328
    %v1226 = vunpack.c.l.b16 %v329
    %v1227 = vunpack.c.h.b16 %v329
    %v1228 = vunpack.c.l.b16 %v330
    %v1229 = vunpack.c.h.b16 %v330
    %v1230 = vunpack.c.l.b16 %v331
    %v1231 = vunpack.c.h.b16 %v331
    %v1232 = vunpack.c.l.b16 %v332
    %v1233 = vunpack.c.h.b16 %v332
    %v1234 = vunpack.c.l.b16 %v333
    %v1235 = vunpack.c.h.b16 %v333
    %v1236 = vunpack.c.l.b16 %v334
    %v1237 = vunpack.c.h.b16 %v334
    %v1238 = vunpack.c.l.b16 %v335
    %v1239 = vunpack.c.h.b16 %v335
    %v1240 = vunpack.c.l.b16 %v336
    %v1241 = vunpack.c.h.b16 %v336
    %v1242 = vunpack.c.l.b16 %v337
    %v1243 = vunpack.c.h.b16 %v337
    %v1244 = vunpack.c.l.b16 %v338
    %v1245 = vunpack.c.h.b16 %v338
    %v1246 = vunpack.c.l.b16 %v339
    %v1247 = vunpack.c.h.b16 %v339
    %v1248 = vunpack.c.l.b16 %v340
    %v1249 = vunpack.c.h.b16 %v340
    %v1250 = vunpack.c.l.b16 %v341
    %v1251 = vunpack.c.h.b16 %v341
    %v1252 = vunpack.c.l.b16 %v342
    %v1253 = vunpack.c.h.b16 %v342
    %v1254 = vunpack.c.l.b16 %v343
    %v1255 = vunpack.c.h.b16 %v343
    %v1256 = vunpack.c.l.b16 %v344
    %v1257 = vunpack.c.h.b16 %v344
    %v1258 = vunpack.c.l.b16 %v345
    %v1259 = vunpack.c.h.b16 %v345
    %v1260 = vunpack.c.l.b16 %v346
    %v1261 = vunpack.c.h.b16 %v346
    %v1262 = vunpack.c.l.b16 %v347
    %v1263 = vunpack.c.h.b16 %v347
    %v1264 = vunpack.c.l.b16 %v348
    %v1265 = vunpack.c.h.b16 %v348
    %v1266 = vunpack.c.l.b16 %v349
    %v1267 = vunpack.c.h.b16 %v349
    %v1268 = vunpack.c.l.b16 %v350
    %v1269 = vunpack.c.h.b16 %v350
    %v1270 = vunpack.c.l.b16 %v351
    %v1271 = vunpack.c.h.b16 %v351
    %v1272 = vunpack.c.l.b16 %v352
    %v1273 = vunpack.c.h.b16 %v352
    %v1274 = vunpack.c.l.b16 %v353
    %v1275 = vunpack.c.h.b16 %v353
    %v1276 = vunpack.c.l.b16 %v354
    %v1277 = vunpack.c.h.b16 %v354
    %v1278 = vunpack.c.l.b16 %v355
    %v1279 = vunpack.c.h.b16 %v355
    %v1280 = vunpack.c.l.b16 %v356
    %v1281 = vunpack.c.h.b16 %v356
    %v1282 = vunpack.c.l.b16 %v357
    %v1283 = vunpack.c.h.b16 %v357
    %v1284 = vunpack.c.l.b16 %v358
    %v1285 = vunpack.c.h.b16 %v358
    %v1286 = vunpack.c.l.b16 %v359
    %v1287 = vunpack.c.h.b16 %v359
    %v1288 = vunpack.c.l.b16 %v360
    %v1289 = vunpack.c.h.b16 %v360
    %v1290 = vunpack.c.l.b16 %v361
    %v1291 = vunpack.c.h.b16 %v361
    %v1292 = vunpack.c.l.b16 %v362
    %v1293 = vunpack.c.h.b16 %v362
    %v1294 = vunpack.c.l.b16 %v363
    %v1295 = vunpack.c.h.b16 %v363
    %v1296 = vunpack.c.l.b16 %v364
    %v1297 = vunpack.c.h.b16 %v364
    %v1298 = vunpack.c.l.b16 %v365
    %v1299 = vunpack.c.h.b16 %v365
    %v1300 = vunpack.c.l.b16 %v366
    %v1301 = vunpack.c.h.b16 %v366
    %v1302 = vunpack.c.l.b16 %v367
    %v1303 = vunpack.c.h.b16 %v367
    %v1304 = vpack.c.b16 %v824, %v792
    %v1305 = vpack.c.b16 %v825, %v793
    %v1306 = vpack.c.b16 %v826, %v794
    %v1307 = vpack.c.b16 %v827, %v795
    %v1308 = vpack.c.b16 %v828, %v796
    %v1309 = vpack.c.b16 %v829, %v797
    %v1310 = vpack.c.b16 %v830, %v798
    %v1311 = vpack.c.b16 %v831, %v799
    %v1312 = vpack.c.b16 %v832, %v800
    %v1313 = vpack.c.b16 %v833, %v801
    %v1314 = vpack.c.b16 %v834, %v802
    %v1315 = vpack.c.b16 %v835, %v803
    %v1316 = vpack.c.b16 %v836, %v804
    %v1317 = vpack.c.b16 %v837, %v805
    %v1318 = vpack.c.b16 %v838, %v806
    %v1319 = vpack.c.b16 %v839, %v807
    %v1320 = vpack.c.b16 %v840, %v808
    %v1321 = vpack.c.b16 %v841, %v809
    %v1322 = vpack.c.b16 %v842, %v810
    %v1323 = vpack.c.b16 %v843, %v811
    %v1324 = vpack.c.b16 %v844, %v812
    %v1325 = vpack.c.b16 %v845, %v813
    %v1326 = vpack.c.b16 %v846, %v814
    %v1327 = vpack.c.b16 %v847, %v815
    %v1328 = vpack.c.b16 %v848, %v816
    %v1329 = vpack.c.b16 %v849, %v817
    %v1330 = vpack.c.b16 %v850, %v818
    %v1331 = vpack.c.b16 %v851, %v819
    %v1332 = vpack.c.b16 %v852, %v820
    %v1333 = vpack.c.b16 %v853, %v821
    %v1334 = vpack.c.b16 %v854, %v822
    %v1335 = vpack.c.b16 %v855, %v823
    %v1336 = vpack.c.b16 %v888, %v856
    %v1337 = vpack.c.b16 %v889, %v857
    %v1338 = vpack.c.b16 %v890, %v858
    %v1339 = vpack.c.b16 %v891, %v859
    %v1340 = vpack.c.b16 %v892, %v860
    %v1341 = vpack.c.b16 %v893, %v861
    %v1342 = vpack.c.b16 %v894, %v862
    %v1343 = vpack.c.b16 %v895, %v863
    %v1344 = vpack.c.b16 %v896, %v864
    %v1345 = vpack.c.b16 %v897, %v865
    %v1346 = vpack.c.b16 %v898, %v866
    %v1347 = vpack.c.b16 %v899, %v867
    %v1348 = vpack.c.b16 %v900, %v868
    %v1349 = vpack.c.b16 %v901, %v869
    %v1350 = vpack.c.b16 %v902, %v870
    %v1351 = vpack.c.b16 %v903, %v871
    %v1352 = vpack.c.b16 %v904, %v872
    %v1353 = vpack.c.b16 %v905, %v873
    %v1354 = vpack.c.b16 %v906, %v874
    %v1355 = vpack.c.b16 %v907, %v875
    %v1356 = vpack.c.b16 %v908, %v876
    %v1357 = vpack.c.b16 %v909, %v877
    %v1358 = vpack.c.b16 %v910, %v878
    %v1359 = vpack.c.b16 %v911, %v879
    %v1360 = vpack.c.b16 %v912, %v880
    %v1361 = vpack.c.b16 %v913, %v881
    %v1362 = vpack.c.b16 %v914, %v882
    %v1363 = vpack.c.b16 %v915, %v883
    %v1364 = vpack.c.b16 %v916, %v884
    %v1365 = vpack.c.b16 %v917, %v885
    %v1366 = vpack.c.b16 %v918, %v886
    %v1367 = vpack.c.b16 %v919, %v887
    %v1368 = vpack.c.b16 %v952, %v920
    %v1369 = vpack.c.b16 %v953, %v921
    %v1370 = vpack.c.b16 %v954, %v922
    %v1371 = vpack.c.b16 %v955, %v923
    %v1372 = vpack.c.b16 %v956, %v924
    %v1373 = vpack.c.b16 %v957, %v925
    %v1374 = vpack.c.b16 %v958, %v926
    %v1375 = vpack.c.b16 %v959, %v927
    %v1376 = vpack.c.b16 %v960, %v928
    %v1377 = vpack.c.b16 %v961, %v929
    %v1378 = vpack.c.b16 %v962, %v930
    %v1379 = vpack.c.b16 %v963, %v931
    %v1380 = vpack.c.b16 %v964, %v932
    %v1381 = vpack.c.b16 %v965, %v933
    %v1382 = vpack.c.b16 %v966, %v934
    %v1383 = vpack.c.b16 %v967, %v935
    %v1384 = vpack.c.b16 %v968, %v936
    %v1385 = vpack.c.b16 %v969, %v937
    %v1386 = vpack.c.b16 %v970, %v938
    %v1387 = vpack.c.b16 %v971, %v939
    %v1388 = vpack.c.b16 %v972, %v940
    %v1389 = vpack.c.b16 %v973, %v941
    %v1390 = vpack.c.b16 %v974, %v942
    %v1391 = vpack.c.b16 %v975, %v943
    %v1392 = vpack.c.b16 %v976, %v944
    %v1393 = vpack.c.b16 %v977, %v945
    %v1394 = vpack.c.b16 %v978, %v946
    %v1395 = vpack.c.b16 %v979, %v947
    %v1396 = vpack.c.b16 %v980, %v948
    %v1397 = vpack.c.b16 %v981, %v949
    %v1398 = vpack.c.b16 %v982, %v950
    %v1399 = vpack.c.b16 %v983, %v951
    %v1400 = vpack.c.b16 %v1016, %v984
    %v1401 = vpack.c.b16 %v1017, %v985
    %v1402 = vpack.c.b16 %v1018, %v986
    %v1403 = vpack.c.b16 %v1019, %v987
    %v1404 = vpack.c.b16 %v1020, %v988
    %v1405 = vpack.c.b16 %v1021, %v989
    %v1406 = vpack.c.b16 %v1022, %v990
    %v1407 = vpack.c.b16 %v1023, %v991
    %v1408 = vpack.c.b16 %v1024, %v992
    %v1409 = vpack.c.b16 %v1025, %v993
    %v1410 = vpack.c.b16 %v1026, %v994
    %v1411 = vpack.c.b16 %v1027, %v995
    %v1412 = vpack.c.b16 %v1028, %v996
    %v1413 = vpack.c.b16 %v1029, %v997
    %v1414 = vpack.c.b16 %v1030, %v998
    %v1415 = vpack.c.b16 %v1031, %v999
    %v1416 = vpack.c.b16 %v1032, %v1000
    %v1417 = vpack.c.b16 %v1033, %v1001
    %v1418 = vpack.c.b16 %v1034, %v1002
    %v1419 = vpack.c.b16 %v1035, %v1003
    %v1420 = vpack.c.b16 %v1036, %v1004
    %v1421 = vpack.c.b16 %v1037, %v1005
    %v1422 = vpack.c.b16 %v1038, %v1006
    %v1423 = vpack.c.b16 %v1039, %v1007
    %v1424 = vpack.c.b16 %v1040, %v1008
    %v1425 = vpack.c.b16 %v1041, %v1009
    %v1426 = vpack.c.b16 %v1042, %v1010
    %v1427 = vpack.c.b16 %v1043, %v1011
    %v1428 = vpack.c.b16 %v1044, %v1012
    %v1429 = vpack.c.b16 %v1045, %v1013
    %v1430 = vpack.c.b16 %v1046, %v1014
    %v1431 = vpack.c.b16 %v1047, %v1015
    %v1432 = vpack.c.b16 %v1080, %v1048
    %v1433 = vpack.c.b16 %v1081, %v1049
    %v1434 = vpack.c.b16 %v1082, %v1050
    %v1435 = vpack.c.b16 %v1083, %v1051
    %v1436 = vpack.c.b16 %v1084, %v1052
    %v1437 = vpack.c.b16 %v1085, %v1053
    %v1438 = vpack.c.b16 %v1086, %v1054
    %v1439 = vpack.c.b16 %v1087, %v1055
    %v1440 = vpack.c.b16 %v1088, %v1056
    %v1441 = vpack.c.b16 %v1089, %v1057
    %v1442 = vpack.c.b16 %v1090, %v1058
    %v1443 = vpack.c.b16 %v1091, %v1059
    %v1444 = vpack.c.b16 %v1092, %v1060
    %v1445 = vpack.c.b16 %v1093, %v1061
    %v1446 = vpack.c.b16 %v1094, %v1062
    %v1447 = vpack.c.b16 %v1095, %v1063
    %v1448 = vpack.c.b16 %v1096, %v1064
    %v1449 = vpack.c.b16 %v1097, %v1065
    %v1450 = vpack.c.b16 %v1098, %v1066
    %v1451 = vpack.c.b16 %v1099, %v1067
    %v1452 = vpack.c.b16 %v1100, %v1068
    %v1453 = vpack.c.b16 %v1101, %v1069
    %v1454 = vpack.c.b16 %v1102, %v1070
    %v1455 = vpack.c.b16 %v1103, %v1071
    %v1456 = vpack.c.b16 %v1104, %v1072
    %v1457 = vpack.c.b16 %v1105, %v1073
    %v1458 = vpack.c.b16 %v1106, %v1074
    %v1459 = vpack.c.b16 %v1107, %v1075
    %v1460 = vpack.c.b16 %v1108, %v1076
    %v1461 = vpack.c.b16 %v1109, %v1077
    %v1462 = vpack.c.b16 %v1110, %v1078
    %v1463 = vpack.c.b16 %v1111, %v1079
    %v1464 = vpack.c.b16 %v1144, %v1112
    %v1465 = vpack.c.b16 %v1145, %v1113
    %v1466 = vpack.c.b16 %v1146, %v1114
    %v1467 = vpack.c.b16 %v1147, %v1115
    %v1468 = vpack.c.b16 %v1148, %v1116
    %v1469 = vpack.c.b16 %v1149, %v1117
    %v1470 = vpack.c.b16 %v1150, %v1118
    %v1471 = vpack.c.b16 %v1151, %v1119
    %v1472 = vpack.c.b16 %v1152, %v1120
    %v1473 = vpack.c.b16 %v1153, %v1121
    %v1474 = vpack.c.b16 %v1154, %v1122
    %v1475 = vpack.c.b16 %v1155, %v1123
    %v1476 = vpack.c.b16 %v1156, %v1124
    %v1477 = vpack.c.b16 %v1157, %v1125
    %v1478 = vpack.c.b16 %v1158, %v1126
    %v1479 = vpack.c.b16 %v1159, %v1127
    %v1480 = vpack.c.b16 %v1160, %v1128
    %v1481 = vpack.c.b16 %v1161, %v1129
    %v1482 = vpack.c.b16 %v1162, %v1130
    %v1483 = vpack.c.b16 %v1163, %v1131
    %v1484 = vpack.c.b16 %v1164, %v1132
    %v1485 = vpack.c.b16 %v1165, %v1133
    %v1486 = vpack.c.b16 %v1166, %v1134
    %v1487 = vpack.c.b16 %v1167, %v1135
    %v1488 = vpack.c.b16 %v1168, %v1136
    %v1489 = vpack.c.b16 %v1169, %v1137
    %v1490 = vpack.c.b16 %v1170, %v1138
    %v1491 = vpack.c.b16 %v1171, %v1139
    %v1492 = vpack.c.b16 %v1172, %v1140
    %v1493 = vpack.c.b16 %v1173, %v1141
    %v1494 = vpack.c.b16 %v1174, %v1142
    %v1495 = vpack.c.b16 %v1175, %v1143
    %v1496 = vpack.c.b16 %v1208, %v1176
    %v1497 = vpack.c.b16 %v1209, %v1177
    %v1498 = vpack.c.b16 %v1210, %v1178
    %v1499 = vpack.c.b16 %v1211, %v1179
    %v1500 = vpack.c.b16 %v1212, %v1180
    %v1501 = vpack.c.b16 %v1213, %v1181
    %v1502 = vpack.c.b16 %v1214, %v1182
    %v1503 = vpack.c.b16 %v1215, %v1183
    %v1504 = vpack.c.b16 %v1216, %v1184
    %v1505 = vpack.c.b16 %v1217, %v1185
    %v1506 = vpack.c.b16 %v1218, %v1186
    %v1507 = vpack.c.b16 %v1219, %v1187
    %v1508 = vpack.c.b16 %v1220, %v1188
    %v1509 = vpack.c.b16 %v1221, %v1189
    %v1510 = vpack.c.b16 %v1222, %v1190
    %v1511 = vpack.c.b16 %v1223, %v1191
    %v1512 = vpack.c.b16 %v1224, %v1192
    %v1513 = vpack.c.b16 %v1225, %v1193
    %v1514 = vpack.c.b16 %v1226, %v1194
    %v1515 = vpack.c.b16 %v1227, %v1195
    %v1516 = vpack.c.b16 %v1228, %v1196
    %v1517 = vpack.c.b16 %v1229, %v1197
    %v1518 = vpack.c.b16 %v1230, %v1198
    %v1519 = vpack.c.b16 %v1231, %v1199
    %v1520 = vpack.c.b16 %v1232, %v1200
    %v1521 = vpack.c.b16 %v1233, %v1201
    %v1522 = vpack.c.b16 %v1234, %v1202
    %v1523 = vpack.c.b16 %v1235, %v1203
    %v1524 = vpack.c.b16 %v1236, %v1204
    %v1525 = vpack.c.b16 %v1237, %v1205
    %v1526 = vpack.c.b16 %v1238, %v1206
    %v1527 = vpack.c.b16 %v1239, %v1207
    %v1528 = vpack.c.b16 %v1272, %v1240
    %v1529 = vpack.c.b16 %v1273, %v1241
    %v1530 = vpack.c.b16 %v1274, %v1242
    %v1531 = vpack.c.b16 %v1275, %v1243
    %v1532 = vpack.c.b16 %v1276, %v1244
    %v1533 = vpack.c.b16 %v1277, %v1245
    %v1534 = vpack.c.b16 %v1278, %v1246
    %v1535 = vpack.c.b16 %v1279, %v1247
    %v1536 = vpack.c.b16 %v1280, %v1248
    %v1537 = vpack.c.b16 %v1281, %v1249
    %v1538 = vpack.c.b16 %v1282, %v1250
    %v1539 = vpack.c.b16 %v1283, %v1251
    %v1540 = vpack.c.b16 %v1284, %v1252
    %v1541 = vpack.c.b16 %v1285, %v1253
    %v1542 = vpack.c.b16 %v1286, %v1254
    %v1543 = vpack.c.b16 %v1287, %v1255
    %v1544 = vpack.c.b16 %v1288, %v1256
    %v1545 = vpack.c.b16 %v1289, %v1257
    %v1546 = vpack.c.b16 %v1290, %v1258
    %v1547 = vpack.c.b16 %v1291, %v1259
    %v1548 = vpack.c.b16 %v1292, %v1260
    %v1549 = vpack.c.b16 %v1293, %v1261
    %v1550 = vpack.c.b16 %v1294, %v1262
    %v1551 = vpack.c.b16 %v1295, %v1263
    %v1552 = vpack.c.b16 %v1296, %v1264
    %v1553 = vpack.c.b16 %v1297, %v1265
    %v1554 = vpack.c.b16 %v1298, %v1266
    %v1555 = vpack.c.b16 %v1299, %v1267
    %v1556 = vpack.c.b16 %v1300, %v1268
    %v1557 = vpack.c.b16 %v1301, %v1269
    %v1558 = vpack.c.b16 %v1302, %v1270
    %v1559 = vpack.c.b16 %v1303, %v1271
    %1816 = vmatprep.subr.bf16.mxu0 %v1305
    %1817 = vmatpush1.bf16.msra.mxu0 %v1304
    %1818 = vmatprep.subr.bf16.mxu0 %v1337
    %1819 = vmatpush1.bf16.msra.mxu0 %v1336
    %1820 = vmatprep.subr.bf16.mxu0 %v1369
    %1821 = vmatpush1.bf16.msra.mxu0 %v1368
    %1822 = vmatprep.subr.bf16.mxu0 %v1401
    %1823 = vmatpush1.bf16.msra.mxu0 %v1400
    %1824 = vmatprep.subr.bf16.mxu0 %v1433
    %1825 = vmatpush1.bf16.msra.mxu0 %v1432
    %1826 = vmatprep.subr.bf16.mxu0 %v1465
    %1827 = vmatpush1.bf16.msra.mxu0 %v1464
    %1828 = vmatprep.subr.bf16.mxu0 %v1497
    %1829 = vmatpush1.bf16.msra.mxu0 %v1496
    %1830 = vmatprep.subr.bf16.mxu0 %v1529
    %1831 = vmatpush1.bf16.msra.mxu0 %v1528
    %1832 = vmatprep.subr.bf16.mxu0 0
    %1833 = vmatpush1.bf16.msra.mxu0 0
    %1834 = vmatprep.subr.bf16.mxu0 0
    %1835 = vmatpush1.bf16.msra.mxu0 0
    %1836 = vmatprep.subr.bf16.mxu0 0
    %1837 = vmatpush1.bf16.msra.mxu0 0
    %1838 = vmatprep.subr.bf16.mxu0 0
    %1839 = vmatpush1.bf16.msra.mxu0 0
    %1840 = vmatprep.subr.bf16.mxu0 0
    %1841 = vmatpush1.bf16.msra.mxu0 0
    %1842 = vmatprep.subr.bf16.mxu0 0
    %1843 = vmatpush1.bf16.msra.mxu0 0
    %1844 = vmatprep.subr.bf16.mxu0 0
    %1845 = vmatpush1.bf16.msra.mxu0 0
    %1846 = vmatprep.subr.bf16.mxu0 0
    %1847 = vmatpush1.bf16.msra.mxu0 0
    %1848 = vmatprep.mubr.bf16.mxu0 0
    %1849 = vmatmul.mubr.bf16.gmra.mrb[0].mxu0 %v111
    %v1850 = vpop.f32.mrb[0].mxu0
    %v1851 = vadd.f32 %v379, %v1850
    %v1852 = vpop.f32.mrb[0].mxu0
    %v1853 = vadd.f32 %v383, %v1852
    %v1854 = vpop.f32.mrb[0].mxu0
    %v1855 = vpop.f32.mrb[0].mxu0
    %1856 = vdwg.mxu0
    %1857 = vmatprep.subr.bf16.mxu0 %v1307
    %1858 = vmatpush1.bf16.msra.mxu0 %v1306
    %1859 = vmatprep.subr.bf16.mxu0 %v1339
    %1860 = vmatpush1.bf16.msra.mxu0 %v1338
    %1861 = vmatprep.subr.bf16.mxu0 %v1371
    %1862 = vmatpush1.bf16.msra.mxu0 %v1370
    %1863 = vmatprep.subr.bf16.mxu0 %v1403
    %1864 = vmatpush1.bf16.msra.mxu0 %v1402
    %1865 = vmatprep.subr.bf16.mxu0 %v1435
    %1866 = vmatpush1.bf16.msra.mxu0 %v1434
    %1867 = vmatprep.subr.bf16.mxu0 %v1467
    %1868 = vmatpush1.bf16.msra.mxu0 %v1466
    %1869 = vmatprep.subr.bf16.mxu0 %v1499
    %1870 = vmatpush1.bf16.msra.mxu0 %v1498
    %1871 = vmatprep.subr.bf16.mxu0 %v1531
    %1872 = vmatpush1.bf16.msra.mxu0 %v1530
    %1873 = vmatprep.subr.bf16.mxu0 0
    %1874 = vmatpush1.bf16.msra.mxu0 0
    %1875 = vmatprep.subr.bf16.mxu0 0
    %1876 = vmatpush1.bf16.msra.mxu0 0
    %1877 = vmatprep.subr.bf16.mxu0 0
    %1878 = vmatpush1.bf16.msra.mxu0 0
    %1879 = vmatprep.subr.bf16.mxu0 0
    %1880 = vmatpush1.bf16.msra.mxu0 0
    %1881 = vmatprep.subr.bf16.mxu0 0
    %1882 = vmatpush1.bf16.msra.mxu0 0
    %1883 = vmatprep.subr.bf16.mxu0 0
    %1884 = vmatpush1.bf16.msra.mxu0 0
    %1885 = vmatprep.subr.bf16.mxu0 0
    %1886 = vmatpush1.bf16.msra.mxu0 0
    %1887 = vmatprep.subr.bf16.mxu0 0
    %1888 = vmatpush1.bf16.msra.mxu0 0
    %1889 = vmatprep.mubr.bf16.mxu0 0
    %1890 = vmatmul.mubr.bf16.gmra.mrb[0].mxu0 %v111
    %v1891 = vpop.f32.mrb[0].mxu0
    %v1892 = vadd.f32 %v387, %v1891
    %v1893 = vpop.f32.mrb[0].mxu0
    %v1894 = vadd.f32 %v391, %v1893
    %v1895 = vpop.f32.mrb[0].mxu0
    %v1896 = vpop.f32.mrb[0].mxu0
    %1897 = vdwg.mxu0
    %1898 = vmatprep.subr.bf16.mxu0 %v1309
    %1899 = vmatpush1.bf16.msra.mxu0 %v1308
    %1900 = vmatprep.subr.bf16.mxu0 %v1341
    %1901 = vmatpush1.bf16.msra.mxu0 %v1340
    %1902 = vmatprep.subr.bf16.mxu0 %v1373
    %1903 = vmatpush1.bf16.msra.mxu0 %v1372
    %1904 = vmatprep.subr.bf16.mxu0 %v1405
    %1905 = vmatpush1.bf16.msra.mxu0 %v1404
    %1906 = vmatprep.subr.bf16.mxu0 %v1437
    %1907 = vmatpush1.bf16.msra.mxu0 %v1436
    %1908 = vmatprep.subr.bf16.mxu0 %v1469
    %1909 = vmatpush1.bf16.msra.mxu0 %v1468
    %1910 = vmatprep.subr.bf16.mxu0 %v1501
    %1911 = vmatpush1.bf16.msra.mxu0 %v1500
    %1912 = vmatprep.subr.bf16.mxu0 %v1533
    %1913 = vmatpush1.bf16.msra.mxu0 %v1532
    %1914 = vmatprep.subr.bf16.mxu0 0
    %1915 = vmatpush1.bf16.msra.mxu0 0
    %1916 = vmatprep.subr.bf16.mxu0 0
    %1917 = vmatpush1.bf16.msra.mxu0 0
    %1918 = vmatprep.subr.bf16.mxu0 0
    %1919 = vmatpush1.bf16.msra.mxu0 0
    %1920 = vmatprep.subr.bf16.mxu0 0
    %1921 = vmatpush1.bf16.msra.mxu0 0
    %1922 = vmatprep.subr.bf16.mxu0 0
    %1923 = vmatpush1.bf16.msra.mxu0 0
    %1924 = vmatprep.subr.bf16.mxu0 0
    %1925 = vmatpush1.bf16.msra.mxu0 0
    %1926 = vmatprep.subr.bf16.mxu0 0
    %1927 = vmatpush1.bf16.msra.mxu0 0
    %1928 = vmatprep.subr.bf16.mxu0 0
    %1929 = vmatpush1.bf16.msra.mxu0 0
    %1930 = vmatprep.mubr.bf16.mxu0 0
    %1931 = vmatmul.mubr.bf16.gmra.mrb[0].mxu0 %v111
    %v1932 = vpop.f32.mrb[0].mxu0
    %v1933 = vadd.f32 %v395, %v1932
    %v1934 = vpop.f32.mrb[0].mxu0
    %v1935 = vadd.f32 %v399, %v1934
    %v1936 = vpop.f32.mrb[0].mxu0
    %v1937 = vpop.f32.mrb[0].mxu0
    %1938 = vdwg.mxu0
    %1939 = vmatprep.subr.bf16.mxu0 %v1311
    %1940 = vmatpush1.bf16.msra.mxu0 %v1310
    %1941 = vmatprep.subr.bf16.mxu0 %v1343
    %1942 = vmatpush1.bf16.msra.mxu0 %v1342
    %1943 = vmatprep.subr.bf16.mxu0 %v1375
    %1944 = vmatpush1.bf16.msra.mxu0 %v1374
    %1945 = vmatprep.subr.bf16.mxu0 %v1407
    %1946 = vmatpush1.bf16.msra.mxu0 %v1406
    %1947 = vmatprep.subr.bf16.mxu0 %v1439
    %1948 = vmatpush1.bf16.msra.mxu0 %v1438
    %1949 = vmatprep.subr.bf16.mxu0 %v1471
    %1950 = vmatpush1.bf16.msra.mxu0 %v1470
    %1951 = vmatprep.subr.bf16.mxu0 %v1503
    %1952 = vmatpush1.bf16.msra.mxu0 %v1502
    %1953 = vmatprep.subr.bf16.mxu0 %v1535
    %1954 = vmatpush1.bf16.msra.mxu0 %v1534
    %1955 = vmatprep.subr.bf16.mxu0 0
    %1956 = vmatpush1.bf16.msra.mxu0 0
    %1957 = vmatprep.subr.bf16.mxu0 0
    %1958 = vmatpush1.bf16.msra.mxu0 0
    %1959 = vmatprep.subr.bf16.mxu0 0
    %1960 = vmatpush1.bf16.msra.mxu0 0
    %1961 = vmatprep.subr.bf16.mxu0 0
    %1962 = vmatpush1.bf16.msra.mxu0 0
    %1963 = vmatprep.subr.bf16.mxu0 0
    %1964 = vmatpush1.bf16.msra.mxu0 0
    %1965 = vmatprep.subr.bf16.mxu0 0
    %1966 = vmatpush1.bf16.msra.mxu0 0
    %1967 = vmatprep.subr.bf16.mxu0 0
    %1968 = vmatpush1.bf16.msra.mxu0 0
    %1969 = vmatprep.subr.bf16.mxu0 0
    %1970 = vmatpush1.bf16.msra.mxu0 0
    %1971 = vmatprep.mubr.bf16.mxu0 0
    %1972 = vmatmul.mubr.bf16.gmra.mrb[0].mxu0 %v111
    %v1973 = vpop.f32.mrb[0].mxu0
    %v1974 = vadd.f32 %v403, %v1973
    %v1975 = vpop.f32.mrb[0].mxu0
    %v1976 = vadd.f32 %v407, %v1975
    %v1977 = vpop.f32.mrb[0].mxu0
    %v1978 = vpop.f32.mrb[0].mxu0
    %1979 = vdwg.mxu0
    %1980 = vmatprep.subr.bf16.mxu0 %v1313
    %1981 = vmatpush1.bf16.msra.mxu0 %v1312
    %1982 = vmatprep.subr.bf16.mxu0 %v1345
    %1983 = vmatpush1.bf16.msra.mxu0 %v1344
    %1984 = vmatprep.subr.bf16.mxu0 %v1377
    %1985 = vmatpush1.bf16.msra.mxu0 %v1376
    %1986 = vmatprep.subr.bf16.mxu0 %v1409
    %1987 = vmatpush1.bf16.msra.mxu0 %v1408
    %1988 = vmatprep.subr.bf16.mxu0 %v1441
    %1989 = vmatpush1.bf16.msra.mxu0 %v1440
    %1990 = vmatprep.subr.bf16.mxu0 %v1473
    %1991 = vmatpush1.bf16.msra.mxu0 %v1472
    %1992 = vmatprep.subr.bf16.mxu0 %v1505
    %1993 = vmatpush1.bf16.msra.mxu0 %v1504
    %1994 = vmatprep.subr.bf16.mxu0 %v1537
    %1995 = vmatpush1.bf16.msra.mxu0 %v1536
    %1996 = vmatprep.subr.bf16.mxu0 0
    %1997 = vmatpush1.bf16.msra.mxu0 0
    %1998 = vmatprep.subr.bf16.mxu0 0
    %1999 = vmatpush1.bf16.msra.mxu0 0
    %2000 = vmatprep.subr.bf16.mxu0 0
    %2001 = vmatpush1.bf16.msra.mxu0 0
    %2002 = vmatprep.subr.bf16.mxu0 0
    %2003 = vmatpush1.bf16.msra.mxu0 0
    %2004 = vmatprep.subr.bf16.mxu0 0
    %2005 = vmatpush1.bf16.msra.mxu0 0
    %2006 = vmatprep.subr.bf16.mxu0 0
    %2007 = vmatpush1.bf16.msra.mxu0 0
    %2008 = vmatprep.subr.bf16.mxu0 0
    %2009 = vmatpush1.bf16.msra.mxu0 0
    %2010 = vmatprep.subr.bf16.mxu0 0
    %2011 = vmatpush1.bf16.msra.mxu0 0
    %2012 = vmatprep.mubr.bf16.mxu0 0
    %2013 = vmatmul.mubr.bf16.gmra.mrb[0].mxu0 %v111
    %v2014 = vpop.f32.mrb[0].mxu0
    %v2015 = vadd.f32 %v411, %v2014
    %v2016 = vpop.f32.mrb[0].mxu0
    %v2017 = vadd.f32 %v415, %v2016
    %v2018 = vpop.f32.mrb[0].mxu0
    %v2019 = vpop.f32.mrb[0].mxu0
    %2020 = vdwg.mxu0
    %2021 = vmatprep.subr.bf16.mxu0 %v1315
    %2022 = vmatpush1.bf16.msra.mxu0 %v1314
    %2023 = vmatprep.subr.bf16.mxu0 %v1347
    %2024 = vmatpush1.bf16.msra.mxu0 %v1346
    %2025 = vmatprep.subr.bf16.mxu0 %v1379
    %2026 = vmatpush1.bf16.msra.mxu0 %v1378
    %2027 = vmatprep.subr.bf16.mxu0 %v1411
    %2028 = vmatpush1.bf16.msra.mxu0 %v1410
    %2029 = vmatprep.subr.bf16.mxu0 %v1443
    %2030 = vmatpush1.bf16.msra.mxu0 %v1442
    %2031 = vmatprep.subr.bf16.mxu0 %v1475
    %2032 = vmatpush1.bf16.msra.mxu0 %v1474
    %2033 = vmatprep.subr.bf16.mxu0 %v1507
    %2034 = vmatpush1.bf16.msra.mxu0 %v1506
    %2035 = vmatprep.subr.bf16.mxu0 %v1539
    %2036 = vmatpush1.bf16.msra.mxu0 %v1538
    %2037 = vmatprep.subr.bf16.mxu0 0
    %2038 = vmatpush1.bf16.msra.mxu0 0
    %2039 = vmatprep.subr.bf16.mxu0 0
    %2040 = vmatpush1.bf16.msra.mxu0 0
    %2041 = vmatprep.subr.bf16.mxu0 0
    %2042 = vmatpush1.bf16.msra.mxu0 0
    %2043 = vmatprep.subr.bf16.mxu0 0
    %2044 = vmatpush1.bf16.msra.mxu0 0
    %2045 = vmatprep.subr.bf16.mxu0 0
    %2046 = vmatpush1.bf16.msra.mxu0 0
    %2047 = vmatprep.subr.bf16.mxu0 0
    %2048 = vmatpush1.bf16.msra.mxu0 0
    %2049 = vmatprep.subr.bf16.mxu0 0
    %2050 = vmatpush1.bf16.msra.mxu0 0
    %2051 = vmatprep.subr.bf16.mxu0 0
    %2052 = vmatpush1.bf16.msra.mxu0 0
    %2053 = vmatprep.mubr.bf16.mxu0 0
    %2054 = vmatmul.mubr.bf16.gmra.mrb[0].mxu0 %v111
    %v2055 = vpop.f32.mrb[0].mxu0
    %v2056 = vadd.f32 %v419, %v2055
    %v2057 = vpop.f32.mrb[0].mxu0
    %v2058 = vadd.f32 %v423, %v2057
    %v2059 = vpop.f32.mrb[0].mxu0
    %v2060 = vpop.f32.mrb[0].mxu0
    %2061 = vdwg.mxu0
    %2062 = vmatprep.subr.bf16.mxu0 %v1317
    %2063 = vmatpush1.bf16.msra.mxu0 %v1316
    %2064 = vmatprep.subr.bf16.mxu0 %v1349
    %2065 = vmatpush1.bf16.msra.mxu0 %v1348
    %2066 = vmatprep.subr.bf16.mxu0 %v1381
    %2067 = vmatpush1.bf16.msra.mxu0 %v1380
    %2068 = vmatprep.subr.bf16.mxu0 %v1413
    %2069 = vmatpush1.bf16.msra.mxu0 %v1412
    %2070 = vmatprep.subr.bf16.mxu0 %v1445
    %2071 = vmatpush1.bf16.msra.mxu0 %v1444
    %2072 = vmatprep.subr.bf16.mxu0 %v1477
    %2073 = vmatpush1.bf16.msra.mxu0 %v1476
    %2074 = vmatprep.subr.bf16.mxu0 %v1509
    %2075 = vmatpush1.bf16.msra.mxu0 %v1508
    %2076 = vmatprep.subr.bf16.mxu0 %v1541
    %2077 = vmatpush1.bf16.msra.mxu0 %v1540
    %2078 = vmatprep.subr.bf16.mxu0 0
    %2079 = vmatpush1.bf16.msra.mxu0 0
    %2080 = vmatprep.subr.bf16.mxu0 0
    %2081 = vmatpush1.bf16.msra.mxu0 0
    %2082 = vmatprep.subr.bf16.mxu0 0
    %2083 = vmatpush1.bf16.msra.mxu0 0
    %2084 = vmatprep.subr.bf16.mxu0 0
    %2085 = vmatpush1.bf16.msra.mxu0 0
    %2086 = vmatprep.subr.bf16.mxu0 0
    %2087 = vmatpush1.bf16.msra.mxu0 0
    %2088 = vmatprep.subr.bf16.mxu0 0
    %2089 = vmatpush1.bf16.msra.mxu0 0
    %2090 = vmatprep.subr.bf16.mxu0 0
    %2091 = vmatpush1.bf16.msra.mxu0 0
    %2092 = vmatprep.subr.bf16.mxu0 0
    %2093 = vmatpush1.bf16.msra.mxu0 0
    %2094 = vmatprep.mubr.bf16.mxu0 0
    %2095 = vmatmul.mubr.bf16.gmra.mrb[0].mxu0 %v111
    %v2096 = vpop.f32.mrb[0].mxu0
    %v2097 = vadd.f32 %v427, %v2096
    %v2098 = vpop.f32.mrb[0].mxu0
    %v2099 = vadd.f32 %v431, %v2098
    %v2100 = vpop.f32.mrb[0].mxu0
    %v2101 = vpop.f32.mrb[0].mxu0
    %2102 = vdwg.mxu0
    %2103 = vmatprep.subr.bf16.mxu0 %v1319
    %2104 = vmatpush1.bf16.msra.mxu0 %v1318
    %2105 = vmatprep.subr.bf16.mxu0 %v1351
    %2106 = vmatpush1.bf16.msra.mxu0 %v1350
    %2107 = vmatprep.subr.bf16.mxu0 %v1383
    %2108 = vmatpush1.bf16.msra.mxu0 %v1382
    %2109 = vmatprep.subr.bf16.mxu0 %v1415
    %2110 = vmatpush1.bf16.msra.mxu0 %v1414
    %2111 = vmatprep.subr.bf16.mxu0 %v1447
    %2112 = vmatpush1.bf16.msra.mxu0 %v1446
    %2113 = vmatprep.subr.bf16.mxu0 %v1479
    %2114 = vmatpush1.bf16.msra.mxu0 %v1478
    %2115 = vmatprep.subr.bf16.mxu0 %v1511
    %2116 = vmatpush1.bf16.msra.mxu0 %v1510
    %2117 = vmatprep.subr.bf16.mxu0 %v1543
    %2118 = vmatpush1.bf16.msra.mxu0 %v1542
    %2119 = vmatprep.subr.bf16.mxu0 0
    %2120 = vmatpush1.bf16.msra.mxu0 0
    %2121 = vmatprep.subr.bf16.mxu0 0
    %2122 = vmatpush1.bf16.msra.mxu0 0
    %2123 = vmatprep.subr.bf16.mxu0 0
    %2124 = vmatpush1.bf16.msra.mxu0 0
    %2125 = vmatprep.subr.bf16.mxu0 0
    %2126 = vmatpush1.bf16.msra.mxu0 0
    %2127 = vmatprep.subr.bf16.mxu0 0
    %2128 = vmatpush1.bf16.msra.mxu0 0
    %2129 = vmatprep.subr.bf16.mxu0 0
    %2130 = vmatpush1.bf16.msra.mxu0 0
    %2131 = vmatprep.subr.bf16.mxu0 0
    %2132 = vmatpush1.bf16.msra.mxu0 0
    %2133 = vmatprep.subr.bf16.mxu0 0
    %2134 = vmatpush1.bf16.msra.mxu0 0
    %2135 = vmatprep.mubr.bf16.mxu0 0
    %2136 = vmatmul.mubr.bf16.gmra.mrb[0].mxu0 %v111
    %v2137 = vpop.f32.mrb[0].mxu0
    %v2138 = vadd.f32 %v435, %v2137
    %v2139 = vpop.f32.mrb[0].mxu0
    %v2140 = vadd.f32 %v439, %v2139
    %v2141 = vpop.f32.mrb[0].mxu0
    %v2142 = vpop.f32.mrb[0].mxu0
    %2143 = vdwg.mxu0
    %2144 = vmatprep.subr.bf16.mxu0 %v1321
    %2145 = vmatpush1.bf16.msra.mxu0 %v1320
    %2146 = vmatprep.subr.bf16.mxu0 %v1353
    %2147 = vmatpush1.bf16.msra.mxu0 %v1352
    %2148 = vmatprep.subr.bf16.mxu0 %v1385
    %2149 = vmatpush1.bf16.msra.mxu0 %v1384
    %2150 = vmatprep.subr.bf16.mxu0 %v1417
    %2151 = vmatpush1.bf16.msra.mxu0 %v1416
    %2152 = vmatprep.subr.bf16.mxu0 %v1449
    %2153 = vmatpush1.bf16.msra.mxu0 %v1448
    %2154 = vmatprep.subr.bf16.mxu0 %v1481
    %2155 = vmatpush1.bf16.msra.mxu0 %v1480
    %2156 = vmatprep.subr.bf16.mxu0 %v1513
    %2157 = vmatpush1.bf16.msra.mxu0 %v1512
    %2158 = vmatprep.subr.bf16.mxu0 %v1545
    %2159 = vmatpush1.bf16.msra.mxu0 %v1544
    %2160 = vmatprep.subr.bf16.mxu0 0
    %2161 = vmatpush1.bf16.msra.mxu0 0
    %2162 = vmatprep.subr.bf16.mxu0 0
    %2163 = vmatpush1.bf16.msra.mxu0 0
    %2164 = vmatprep.subr.bf16.mxu0 0
    %2165 = vmatpush1.bf16.msra.mxu0 0
    %2166 = vmatprep.subr.bf16.mxu0 0
    %2167 = vmatpush1.bf16.msra.mxu0 0
    %2168 = vmatprep.subr.bf16.mxu0 0
    %2169 = vmatpush1.bf16.msra.mxu0 0
    %2170 = vmatprep.subr.bf16.mxu0 0
    %2171 = vmatpush1.bf16.msra.mxu0 0
    %2172 = vmatprep.subr.bf16.mxu0 0
    %2173 = vmatpush1.bf16.msra.mxu0 0
    %2174 = vmatprep.subr.bf16.mxu0 0
    %2175 = vmatpush1.bf16.msra.mxu0 0
    %2176 = vmatprep.mubr.bf16.mxu0 0
    %2177 = vmatmul.mubr.bf16.gmra.mrb[0].mxu0 %v111
    %v2178 = vpop.f32.mrb[0].mxu0
    %v2179 = vadd.f32 %v443, %v2178
    %v2180 = vpop.f32.mrb[0].mxu0
    %v2181 = vadd.f32 %v447, %v2180
    %v2182 = vpop.f32.mrb[0].mxu0
    %v2183 = vpop.f32.mrb[0].mxu0
    %2184 = vdwg.mxu0
    %2185 = vmatprep.subr.bf16.mxu0 %v1323
    %2186 = vmatpush1.bf16.msra.mxu0 %v1322
    %2187 = vmatprep.subr.bf16.mxu0 %v1355
    %2188 = vmatpush1.bf16.msra.mxu0 %v1354
    %2189 = vmatprep.subr.bf16.mxu0 %v1387
    %2190 = vmatpush1.bf16.msra.mxu0 %v1386
    %2191 = vmatprep.subr.bf16.mxu0 %v1419
    %2192 = vmatpush1.bf16.msra.mxu0 %v1418
    %2193 = vmatprep.subr.bf16.mxu0 %v1451
    %2194 = vmatpush1.bf16.msra.mxu0 %v1450
    %2195 = vmatprep.subr.bf16.mxu0 %v1483
    %2196 = vmatpush1.bf16.msra.mxu0 %v1482
    %2197 = vmatprep.subr.bf16.mxu0 %v1515
    %2198 = vmatpush1.bf16.msra.mxu0 %v1514
    %2199 = vmatprep.subr.bf16.mxu0 %v1547
    %2200 = vmatpush1.bf16.msra.mxu0 %v1546
    %2201 = vmatprep.subr.bf16.mxu0 0
    %2202 = vmatpush1.bf16.msra.mxu0 0
    %2203 = vmatprep.subr.bf16.mxu0 0
    %2204 = vmatpush1.bf16.msra.mxu0 0
    %2205 = vmatprep.subr.bf16.mxu0 0
    %2206 = vmatpush1.bf16.msra.mxu0 0
    %2207 = vmatprep.subr.bf16.mxu0 0
    %2208 = vmatpush1.bf16.msra.mxu0 0
    %2209 = vmatprep.subr.bf16.mxu0 0
    %2210 = vmatpush1.bf16.msra.mxu0 0
    %2211 = vmatprep.subr.bf16.mxu0 0
    %2212 = vmatpush1.bf16.msra.mxu0 0
    %2213 = vmatprep.subr.bf16.mxu0 0
    %2214 = vmatpush1.bf16.msra.mxu0 0
    %2215 = vmatprep.subr.bf16.mxu0 0
    %2216 = vmatpush1.bf16.msra.mxu0 0
    %2217 = vmatprep.mubr.bf16.mxu0 0
    %2218 = vmatmul.mubr.bf16.gmra.mrb[0].mxu0 %v111
    %v2219 = vpop.f32.mrb[0].mxu0
    %v2220 = vadd.f32 %v451, %v2219
    %v2221 = vpop.f32.mrb[0].mxu0
    %v2222 = vadd.f32 %v455, %v2221
    %v2223 = vpop.f32.mrb[0].mxu0
    %v2224 = vpop.f32.mrb[0].mxu0
    %2225 = vdwg.mxu0
    %2226 = vmatprep.subr.bf16.mxu0 %v1325
    %2227 = vmatpush1.bf16.msra.mxu0 %v1324
    %2228 = vmatprep.subr.bf16.mxu0 %v1357
    %2229 = vmatpush1.bf16.msra.mxu0 %v1356
    %2230 = vmatprep.subr.bf16.mxu0 %v1389
    %2231 = vmatpush1.bf16.msra.mxu0 %v1388
    %2232 = vmatprep.subr.bf16.mxu0 %v1421
    %2233 = vmatpush1.bf16.msra.mxu0 %v1420
    %2234 = vmatprep.subr.bf16.mxu0 %v1453
    %2235 = vmatpush1.bf16.msra.mxu0 %v1452
    %2236 = vmatprep.subr.bf16.mxu0 %v1485
    %2237 = vmatpush1.bf16.msra.mxu0 %v1484
    %2238 = vmatprep.subr.bf16.mxu0 %v1517
    %2239 = vmatpush1.bf16.msra.mxu0 %v1516
    %2240 = vmatprep.subr.bf16.mxu0 %v1549
    %2241 = vmatpush1.bf16.msra.mxu0 %v1548
    %2242 = vmatprep.subr.bf16.mxu0 0
    %2243 = vmatpush1.bf16.msra.mxu0 0
    %2244 = vmatprep.subr.bf16.mxu0 0
    %2245 = vmatpush1.bf16.msra.mxu0 0
    %2246 = vmatprep.subr.bf16.mxu0 0
    %2247 = vmatpush1.bf16.msra.mxu0 0
    %2248 = vmatprep.subr.bf16.mxu0 0
    %2249 = vmatpush1.bf16.msra.mxu0 0
    %2250 = vmatprep.subr.bf16.mxu0 0
    %2251 = vmatpush1.bf16.msra.mxu0 0
    %2252 = vmatprep.subr.bf16.mxu0 0
    %2253 = vmatpush1.bf16.msra.mxu0 0
    %2254 = vmatprep.subr.bf16.mxu0 0
    %2255 = vmatpush1.bf16.msra.mxu0 0
    %2256 = vmatprep.subr.bf16.mxu0 0
    %2257 = vmatpush1.bf16.msra.mxu0 0
    %2258 = vmatprep.mubr.bf16.mxu0 0
    %2259 = vmatmul.mubr.bf16.gmra.mrb[0].mxu0 %v111
    %v2260 = vpop.f32.mrb[0].mxu0
    %v2261 = vadd.f32 %v459, %v2260
    %v2262 = vpop.f32.mrb[0].mxu0
    %v2263 = vadd.f32 %v463, %v2262
    %v2264 = vpop.f32.mrb[0].mxu0
    %v2265 = vpop.f32.mrb[0].mxu0
    %2266 = vdwg.mxu0
    %2267 = vmatprep.subr.bf16.mxu0 %v1327
    %2268 = vmatpush1.bf16.msra.mxu0 %v1326
    %2269 = vmatprep.subr.bf16.mxu0 %v1359
    %2270 = vmatpush1.bf16.msra.mxu0 %v1358
    %2271 = vmatprep.subr.bf16.mxu0 %v1391
    %2272 = vmatpush1.bf16.msra.mxu0 %v1390
    %2273 = vmatprep.subr.bf16.mxu0 %v1423
    %2274 = vmatpush1.bf16.msra.mxu0 %v1422
    %2275 = vmatprep.subr.bf16.mxu0 %v1455
    %2276 = vmatpush1.bf16.msra.mxu0 %v1454
    %2277 = vmatprep.subr.bf16.mxu0 %v1487
    %2278 = vmatpush1.bf16.msra.mxu0 %v1486
    %2279 = vmatprep.subr.bf16.mxu0 %v1519
    %2280 = vmatpush1.bf16.msra.mxu0 %v1518
    %2281 = vmatprep.subr.bf16.mxu0 %v1551
    %2282 = vmatpush1.bf16.msra.mxu0 %v1550
    %2283 = vmatprep.subr.bf16.mxu0 0
    %2284 = vmatpush1.bf16.msra.mxu0 0
    %2285 = vmatprep.subr.bf16.mxu0 0
    %2286 = vmatpush1.bf16.msra.mxu0 0
    %2287 = vmatprep.subr.bf16.mxu0 0
    %2288 = vmatpush1.bf16.msra.mxu0 0
    %2289 = vmatprep.subr.bf16.mxu0 0
    %2290 = vmatpush1.bf16.msra.mxu0 0
    %2291 = vmatprep.subr.bf16.mxu0 0
    %2292 = vmatpush1.bf16.msra.mxu0 0
    %2293 = vmatprep.subr.bf16.mxu0 0
    %2294 = vmatpush1.bf16.msra.mxu0 0
    %2295 = vmatprep.subr.bf16.mxu0 0
    %2296 = vmatpush1.bf16.msra.mxu0 0
    %2297 = vmatprep.subr.bf16.mxu0 0
    %2298 = vmatpush1.bf16.msra.mxu0 0
    %2299 = vmatprep.mubr.bf16.mxu0 0
    %2300 = vmatmul.mubr.bf16.gmra.mrb[0].mxu0 %v111
    %v2301 = vpop.f32.mrb[0].mxu0
    %v2302 = vadd.f32 %v467, %v2301
    %v2303 = vpop.f32.mrb[0].mxu0
    %v2304 = vadd.f32 %v471, %v2303
    %v2305 = vpop.f32.mrb[0].mxu0
    %v2306 = vpop.f32.mrb[0].mxu0
    %2307 = vdwg.mxu0
    %2308 = vmatprep.subr.bf16.mxu0 %v1329
    %2309 = vmatpush1.bf16.msra.mxu0 %v1328
    %2310 = vmatprep.subr.bf16.mxu0 %v1361
    %2311 = vmatpush1.bf16.msra.mxu0 %v1360
    %2312 = vmatprep.subr.bf16.mxu0 %v1393
    %2313 = vmatpush1.bf16.msra.mxu0 %v1392
    %2314 = vmatprep.subr.bf16.mxu0 %v1425
    %2315 = vmatpush1.bf16.msra.mxu0 %v1424
    %2316 = vmatprep.subr.bf16.mxu0 %v1457
    %2317 = vmatpush1.bf16.msra.mxu0 %v1456
    %2318 = vmatprep.subr.bf16.mxu0 %v1489
    %2319 = vmatpush1.bf16.msra.mxu0 %v1488
    %2320 = vmatprep.subr.bf16.mxu0 %v1521
    %2321 = vmatpush1.bf16.msra.mxu0 %v1520
    %2322 = vmatprep.subr.bf16.mxu0 %v1553
    %2323 = vmatpush1.bf16.msra.mxu0 %v1552
    %2324 = vmatprep.subr.bf16.mxu0 0
    %2325 = vmatpush1.bf16.msra.mxu0 0
    %2326 = vmatprep.subr.bf16.mxu0 0
    %2327 = vmatpush1.bf16.msra.mxu0 0
    %2328 = vmatprep.subr.bf16.mxu0 0
    %2329 = vmatpush1.bf16.msra.mxu0 0
    %2330 = vmatprep.subr.bf16.mxu0 0
    %2331 = vmatpush1.bf16.msra.mxu0 0
    %2332 = vmatprep.subr.bf16.mxu0 0
    %2333 = vmatpush1.bf16.msra.mxu0 0
    %2334 = vmatprep.subr.bf16.mxu0 0
    %2335 = vmatpush1.bf16.msra.mxu0 0
    %2336 = vmatprep.subr.bf16.mxu0 0
    %2337 = vmatpush1.bf16.msra.mxu0 0
    %2338 = vmatprep.subr.bf16.mxu0 0
    %2339 = vmatpush1.bf16.msra.mxu0 0
    %2340 = vmatprep.mubr.bf16.mxu0 0
    %2341 = vmatmul.mubr.bf16.gmra.mrb[0].mxu0 %v111
    %v2342 = vpop.f32.mrb[0].mxu0
    %v2343 = vadd.f32 %v475, %v2342
    %v2344 = vpop.f32.mrb[0].mxu0
    %v2345 = vadd.f32 %v479, %v2344
    %v2346 = vpop.f32.mrb[0].mxu0
    %v2347 = vpop.f32.mrb[0].mxu0
    %2348 = vdwg.mxu0
    %2349 = vmatprep.subr.bf16.mxu0 %v1331
    %2350 = vmatpush1.bf16.msra.mxu0 %v1330
    %2351 = vmatprep.subr.bf16.mxu0 %v1363
    %2352 = vmatpush1.bf16.msra.mxu0 %v1362
    %2353 = vmatprep.subr.bf16.mxu0 %v1395
    %2354 = vmatpush1.bf16.msra.mxu0 %v1394
    %2355 = vmatprep.subr.bf16.mxu0 %v1427
    %2356 = vmatpush1.bf16.msra.mxu0 %v1426
    %2357 = vmatprep.subr.bf16.mxu0 %v1459
    %2358 = vmatpush1.bf16.msra.mxu0 %v1458
    %2359 = vmatprep.subr.bf16.mxu0 %v1491
    %2360 = vmatpush1.bf16.msra.mxu0 %v1490
    %2361 = vmatprep.subr.bf16.mxu0 %v1523
    %2362 = vmatpush1.bf16.msra.mxu0 %v1522
    %2363 = vmatprep.subr.bf16.mxu0 %v1555
    %2364 = vmatpush1.bf16.msra.mxu0 %v1554
    %2365 = vmatprep.subr.bf16.mxu0 0
    %2366 = vmatpush1.bf16.msra.mxu0 0
    %2367 = vmatprep.subr.bf16.mxu0 0
    %2368 = vmatpush1.bf16.msra.mxu0 0
    %2369 = vmatprep.subr.bf16.mxu0 0
    %2370 = vmatpush1.bf16.msra.mxu0 0
    %2371 = vmatprep.subr.bf16.mxu0 0
    %2372 = vmatpush1.bf16.msra.mxu0 0
    %2373 = vmatprep.subr.bf16.mxu0 0
    %2374 = vmatpush1.bf16.msra.mxu0 0
    %2375 = vmatprep.subr.bf16.mxu0 0
    %2376 = vmatpush1.bf16.msra.mxu0 0
    %2377 = vmatprep.subr.bf16.mxu0 0
    %2378 = vmatpush1.bf16.msra.mxu0 0
    %2379 = vmatprep.subr.bf16.mxu0 0
    %2380 = vmatpush1.bf16.msra.mxu0 0
    %2381 = vmatprep.mubr.bf16.mxu0 0
    %2382 = vmatmul.mubr.bf16.gmra.mrb[0].mxu0 %v111
    %v2383 = vpop.f32.mrb[0].mxu0
    %v2384 = vadd.f32 %v483, %v2383
    %v2385 = vpop.f32.mrb[0].mxu0
    %v2386 = vadd.f32 %v487, %v2385
    %v2387 = vpop.f32.mrb[0].mxu0
    %v2388 = vpop.f32.mrb[0].mxu0
    %2389 = vdwg.mxu0
    %2390 = vmatprep.subr.bf16.mxu0 %v1333
    %2391 = vmatpush1.bf16.msra.mxu0 %v1332
    %2392 = vmatprep.subr.bf16.mxu0 %v1365
    %2393 = vmatpush1.bf16.msra.mxu0 %v1364
    %2394 = vmatprep.subr.bf16.mxu0 %v1397
    %2395 = vmatpush1.bf16.msra.mxu0 %v1396
    %2396 = vmatprep.subr.bf16.mxu0 %v1429
    %2397 = vmatpush1.bf16.msra.mxu0 %v1428
    %2398 = vmatprep.subr.bf16.mxu0 %v1461
    %2399 = vmatpush1.bf16.msra.mxu0 %v1460
    %2400 = vmatprep.subr.bf16.mxu0 %v1493
    %2401 = vmatpush1.bf16.msra.mxu0 %v1492
    %2402 = vmatprep.subr.bf16.mxu0 %v1525
    %2403 = vmatpush1.bf16.msra.mxu0 %v1524
    %2404 = vmatprep.subr.bf16.mxu0 %v1557
    %2405 = vmatpush1.bf16.msra.mxu0 %v1556
    %2406 = vmatprep.subr.bf16.mxu0 0
    %2407 = vmatpush1.bf16.msra.mxu0 0
    %2408 = vmatprep.subr.bf16.mxu0 0
    %2409 = vmatpush1.bf16.msra.mxu0 0
    %2410 = vmatprep.subr.bf16.mxu0 0
    %2411 = vmatpush1.bf16.msra.mxu0 0
    %2412 = vmatprep.subr.bf16.mxu0 0
    %2413 = vmatpush1.bf16.msra.mxu0 0
    %2414 = vmatprep.subr.bf16.mxu0 0
    %2415 = vmatpush1.bf16.msra.mxu0 0
    %2416 = vmatprep.subr.bf16.mxu0 0
    %2417 = vmatpush1.bf16.msra.mxu0 0
    %2418 = vmatprep.subr.bf16.mxu0 0
    %2419 = vmatpush1.bf16.msra.mxu0 0
    %2420 = vmatprep.subr.bf16.mxu0 0
    %2421 = vmatpush1.bf16.msra.mxu0 0
    %2422 = vmatprep.mubr.bf16.mxu0 0
    %2423 = vmatmul.mubr.bf16.gmra.mrb[0].mxu0 %v111
    %v2424 = vpop.f32.mrb[0].mxu0
    %v2425 = vadd.f32 %v491, %v2424
    %v2426 = vpop.f32.mrb[0].mxu0
    %v2427 = vadd.f32 %v495, %v2426
    %v2428 = vpop.f32.mrb[0].mxu0
    %v2429 = vpop.f32.mrb[0].mxu0
    %2430 = vdwg.mxu0
    %2431 = vmatprep.subr.bf16.mxu0 %v1335
    %2432 = vmatpush1.bf16.msra.mxu0 %v1334
    %2433 = vmatprep.subr.bf16.mxu0 %v1367
    %2434 = vmatpush1.bf16.msra.mxu0 %v1366
    %2435 = vmatprep.subr.bf16.mxu0 %v1399
    %2436 = vmatpush1.bf16.msra.mxu0 %v1398
    %2437 = vmatprep.subr.bf16.mxu0 %v1431
    %2438 = vmatpush1.bf16.msra.mxu0 %v1430
    %2439 = vmatprep.subr.bf16.mxu0 %v1463
    %2440 = vmatpush1.bf16.msra.mxu0 %v1462
    %2441 = vmatprep.subr.bf16.mxu0 %v1495
    %2442 = vmatpush1.bf16.msra.mxu0 %v1494
    %2443 = vmatprep.subr.bf16.mxu0 %v1527
    %2444 = vmatpush1.bf16.msra.mxu0 %v1526
    %2445 = vmatprep.subr.bf16.mxu0 %v1559
    %2446 = vmatpush1.bf16.msra.mxu0 %v1558
    %2447 = vmatprep.subr.bf16.mxu0 0
    %2448 = vmatpush1.bf16.msra.mxu0 0
    %2449 = vmatprep.subr.bf16.mxu0 0
    %2450 = vmatpush1.bf16.msra.mxu0 0
    %2451 = vmatprep.subr.bf16.mxu0 0
    %2452 = vmatpush1.bf16.msra.mxu0 0
    %2453 = vmatprep.subr.bf16.mxu0 0
    %2454 = vmatpush1.bf16.msra.mxu0 0
    %2455 = vmatprep.subr.bf16.mxu0 0
    %2456 = vmatpush1.bf16.msra.mxu0 0
    %2457 = vmatprep.subr.bf16.mxu0 0
    %2458 = vmatpush1.bf16.msra.mxu0 0
    %2459 = vmatprep.subr.bf16.mxu0 0
    %2460 = vmatpush1.bf16.msra.mxu0 0
    %2461 = vmatprep.subr.bf16.mxu0 0
    %2462 = vmatpush1.bf16.msra.mxu0 0
    %2463 = vmatprep.mubr.bf16.mxu0 0
    %2464 = vmatmul.mubr.bf16.gmra.mrb[0].mxu0 %v111
    %v2465 = vpop.f32.mrb[0].mxu0
    %v2466 = vadd.f32 %v499, %v2465
    %v2467 = vpop.f32.mrb[0].mxu0
    %v2468 = vadd.f32 %v503, %v2467
    %v2469 = vpop.f32.mrb[0].mxu0
    %v2470 = vpop.f32.mrb[0].mxu0
    %2471 = vdwg.mxu0
    %vm2472 = vcmp.gt.f32.partialorder %v1851, 0.0
    %vm2473 = vcmp.gt.f32.partialorder %v1853, 0.0
    %vm2474 = vcmp.gt.f32.partialorder %v1892, 0.0
    %vm2475 = vcmp.gt.f32.partialorder %v1894, 0.0
    %vm2476 = vcmp.gt.f32.partialorder %v1933, 0.0
    %vm2477 = vcmp.gt.f32.partialorder %v1935, 0.0
    %vm2478 = vcmp.gt.f32.partialorder %v1974, 0.0
    %vm2479 = vcmp.gt.f32.partialorder %v1976, 0.0
    %vm2480 = vcmp.gt.f32.partialorder %v2015, 0.0
    %vm2481 = vcmp.gt.f32.partialorder %v2017, 0.0
    %vm2482 = vcmp.gt.f32.partialorder %v2056, 0.0
    %vm2483 = vcmp.gt.f32.partialorder %v2058, 0.0
    %vm2484 = vcmp.gt.f32.partialorder %v2097, 0.0
    %vm2485 = vcmp.gt.f32.partialorder %v2099, 0.0
    %vm2486 = vcmp.gt.f32.partialorder %v2138, 0.0
    %vm2487 = vcmp.gt.f32.partialorder %v2140, 0.0
    %vm2488 = vcmp.gt.f32.partialorder %v2179, 0.0
    %vm2489 = vcmp.gt.f32.partialorder %v2181, 0.0
    %vm2490 = vcmp.gt.f32.partialorder %v2220, 0.0
    %vm2491 = vcmp.gt.f32.partialorder %v2222, 0.0
    %vm2492 = vcmp.gt.f32.partialorder %v2261, 0.0
    %vm2493 = vcmp.gt.f32.partialorder %v2263, 0.0
    %vm2494 = vcmp.gt.f32.partialorder %v2302, 0.0
    %vm2495 = vcmp.gt.f32.partialorder %v2304, 0.0
    %vm2496 = vcmp.gt.f32.partialorder %v2343, 0.0
    %vm2497 = vcmp.gt.f32.partialorder %v2345, 0.0
    %vm2498 = vcmp.gt.f32.partialorder %v2384, 0.0
    %vm2499 = vcmp.gt.f32.partialorder %v2386, 0.0
    %vm2500 = vcmp.gt.f32.partialorder %v2425, 0.0
    %vm2501 = vcmp.gt.f32.partialorder %v2427, 0.0
    %vm2502 = vcmp.gt.f32.partialorder %v2466, 0.0
    %vm2503 = vcmp.gt.f32.partialorder %v2468, 0.0
    %v2504 = vmul.f32 %v1851, 1.442695
    %v2505 = vpow.pop %v2504
    %v2506 = vmul.f32 %v1853, 1.442695
    %v2507 = vpow.pop %v2506
    %v2508 = vmul.f32 %v1892, 1.442695
    %v2509 = vpow.pop %v2508
    %v2510 = vmul.f32 %v1894, 1.442695
    %v2511 = vpow.pop %v2510
    %v2512 = vmul.f32 %v1933, 1.442695
    %v2513 = vpow.pop %v2512
    %v2514 = vmul.f32 %v1935, 1.442695
    %v2515 = vpow.pop %v2514
    %v2516 = vmul.f32 %v1974, 1.442695
    %v2517 = vpow.pop %v2516
    %v2518 = vmul.f32 %v1976, 1.442695
    %v2519 = vpow.pop %v2518
    %v2520 = vmul.f32 %v2015, 1.442695
    %v2521 = vpow.pop %v2520
    %v2522 = vmul.f32 %v2017, 1.442695
    %v2523 = vpow.pop %v2522
    %v2524 = vmul.f32 %v2056, 1.442695
    %v2525 = vpow.pop %v2524
    %v2526 = vmul.f32 %v2058, 1.442695
    %v2527 = vpow.pop %v2526
    %v2528 = vmul.f32 %v2097, 1.442695
    %v2529 = vpow.pop %v2528
    %v2530 = vmul.f32 %v2099, 1.442695
    %v2531 = vpow.pop %v2530
    %v2532 = vmul.f32 %v2138, 1.442695
    %v2533 = vpow.pop %v2532
    %v2534 = vmul.f32 %v2140, 1.442695
    %v2535 = vpow.pop %v2534
    %v2536 = vmul.f32 %v2179, 1.442695
    %v2537 = vpow.pop %v2536
    %v2538 = vmul.f32 %v2181, 1.442695
    %v2539 = vpow.pop %v2538
    %v2540 = vmul.f32 %v2220, 1.442695
    %v2541 = vpow.pop %v2540
    %v2542 = vmul.f32 %v2222, 1.442695
    %v2543 = vpow.pop %v2542
    %v2544 = vmul.f32 %v2261, 1.442695
    %v2545 = vpow.pop %v2544
    %v2546 = vmul.f32 %v2263, 1.442695
    %v2547 = vpow.pop %v2546
    %v2548 = vmul.f32 %v2302, 1.442695
    %v2549 = vpow.pop %v2548
    %v2550 = vmul.f32 %v2304, 1.442695
    %v2551 = vpow.pop %v2550
    %v2552 = vmul.f32 %v2343, 1.442695
    %v2553 = vpow.pop %v2552
    %v2554 = vmul.f32 %v2345, 1.442695
    %v2555 = vpow.pop %v2554
    %v2556 = vmul.f32 %v2384, 1.442695
    %v2557 = vpow.pop %v2556
    %v2558 = vmul.f32 %v2386, 1.442695
    %v2559 = vpow.pop %v2558
    %v2560 = vmul.f32 %v2425, 1.442695
    %v2561 = vpow.pop %v2560
    %v2562 = vmul.f32 %v2427, 1.442695
    %v2563 = vpow.pop %v2562
    %v2564 = vmul.f32 %v2466, 1.442695
    %v2565 = vpow.pop %v2564
    %v2566 = vmul.f32 %v2468, 1.442695
    %v2567 = vpow.pop %v2566
    %v2568 = vsub.f32 %v2505, 1.0
    %v2569 = vsub.f32 %v2507, 1.0
    %v2570 = vsub.f32 %v2509, 1.0
    %v2571 = vsub.f32 %v2511, 1.0
    %v2572 = vsub.f32 %v2513, 1.0
    %v2573 = vsub.f32 %v2515, 1.0
    %v2574 = vsub.f32 %v2517, 1.0
    %v2575 = vsub.f32 %v2519, 1.0
    %v2576 = vsub.f32 %v2521, 1.0
    %v2577 = vsub.f32 %v2523, 1.0
    %v2578 = vsub.f32 %v2525, 1.0
    %v2579 = vsub.f32 %v2527, 1.0
    %v2580 = vsub.f32 %v2529, 1.0
    %v2581 = vsub.f32 %v2531, 1.0
    %v2582 = vsub.f32 %v2533, 1.0
    %v2583 = vsub.f32 %v2535, 1.0
    %v2584 = vsub.f32 %v2537, 1.0
    %v2585 = vsub.f32 %v2539, 1.0
    %v2586 = vsub.f32 %v2541, 1.0
    %v2587 = vsub.f32 %v2543, 1.0
    %v2588 = vsub.f32 %v2545, 1.0
    %v2589 = vsub.f32 %v2547, 1.0
    %v2590 = vsub.f32 %v2549, 1.0
    %v2591 = vsub.f32 %v2551, 1.0
    %v2592 = vsub.f32 %v2553, 1.0
    %v2593 = vsub.f32 %v2555, 1.0
    %v2594 = vsub.f32 %v2557, 1.0
    %v2595 = vsub.f32 %v2559, 1.0
    %v2596 = vsub.f32 %v2561, 1.0
    %v2597 = vsub.f32 %v2563, 1.0
    %v2598 = vsub.f32 %v2565, 1.0
    %v2599 = vsub.f32 %v2567, 1.0
    %v2600 = vmul.f32 %v2568, 1.6732632
    %v2601 = vmul.f32 %v2569, 1.6732632
    %v2602 = vmul.f32 %v2570, 1.6732632
    %v2603 = vmul.f32 %v2571, 1.6732632
    %v2604 = vmul.f32 %v2572, 1.6732632
    %v2605 = vmul.f32 %v2573, 1.6732632
    %v2606 = vmul.f32 %v2574, 1.6732632
    %v2607 = vmul.f32 %v2575, 1.6732632
    %v2608 = vmul.f32 %v2576, 1.6732632
    %v2609 = vmul.f32 %v2577, 1.6732632
    %v2610 = vmul.f32 %v2578, 1.6732632
    %v2611 = vmul.f32 %v2579, 1.6732632
    %v2612 = vmul.f32 %v2580, 1.6732632
    %v2613 = vmul.f32 %v2581, 1.6732632
    %v2614 = vmul.f32 %v2582, 1.6732632
    %v2615 = vmul.f32 %v2583, 1.6732632
    %v2616 = vmul.f32 %v2584, 1.6732632
    %v2617 = vmul.f32 %v2585, 1.6732632
    %v2618 = vmul.f32 %v2586, 1.6732632
    %v2619 = vmul.f32 %v2587, 1.6732632
    %v2620 = vmul.f32 %v2588, 1.6732632
    %v2621 = vmul.f32 %v2589, 1.6732632
    %v2622 = vmul.f32 %v2590, 1.6732632
    %v2623 = vmul.f32 %v2591, 1.6732632
    %v2624 = vmul.f32 %v2592, 1.6732632
    %v2625 = vmul.f32 %v2593, 1.6732632
    %v2626 = vmul.f32 %v2594, 1.6732632
    %v2627 = vmul.f32 %v2595, 1.6732632
    %v2628 = vmul.f32 %v2596, 1.6732632
    %v2629 = vmul.f32 %v2597, 1.6732632
    %v2630 = vmul.f32 %v2598, 1.6732632
    %v2631 = vmul.f32 %v2599, 1.6732632
    %v2632 = vsel %vm2472, %v1851, %v2600
    %v2633 = vsel %vm2473, %v1853, %v2601
    %v2634 = vsel %vm2474, %v1892, %v2602
    %v2635 = vsel %vm2475, %v1894, %v2603
    %v2636 = vsel %vm2476, %v1933, %v2604
    %v2637 = vsel %vm2477, %v1935, %v2605
    %v2638 = vsel %vm2478, %v1974, %v2606
    %v2639 = vsel %vm2479, %v1976, %v2607
    %v2640 = vsel %vm2480, %v2015, %v2608
    %v2641 = vsel %vm2481, %v2017, %v2609
    %v2642 = vsel %vm2482, %v2056, %v2610
    %v2643 = vsel %vm2483, %v2058, %v2611
    %v2644 = vsel %vm2484, %v2097, %v2612
    %v2645 = vsel %vm2485, %v2099, %v2613
    %v2646 = vsel %vm2486, %v2138, %v2614
    %v2647 = vsel %vm2487, %v2140, %v2615
    %v2648 = vsel %vm2488, %v2179, %v2616
    %v2649 = vsel %vm2489, %v2181, %v2617
    %v2650 = vsel %vm2490, %v2220, %v2618
    %v2651 = vsel %vm2491, %v2222, %v2619
    %v2652 = vsel %vm2492, %v2261, %v2620
    %v2653 = vsel %vm2493, %v2263, %v2621
    %v2654 = vsel %vm2494, %v2302, %v2622
    %v2655 = vsel %vm2495, %v2304, %v2623
    %v2656 = vsel %vm2496, %v2343, %v2624
    %v2657 = vsel %vm2497, %v2345, %v2625
    %v2658 = vsel %vm2498, %v2384, %v2626
    %v2659 = vsel %vm2499, %v2386, %v2627
    %v2660 = vsel %vm2500, %v2425, %v2628
    %v2661 = vsel %vm2501, %v2427, %v2629
    %v2662 = vsel %vm2502, %v2466, %v2630
    %v2663 = vsel %vm2503, %v2468, %v2631
    %v2664 = vmul.f32 %v2632, 1.050701
    %v2665 = vmul.f32 %v2633, 1.050701
    %v2666 = vmul.f32 %v2634, 1.050701
    %v2667 = vmul.f32 %v2635, 1.050701
    %v2668 = vmul.f32 %v2636, 1.050701
    %v2669 = vmul.f32 %v2637, 1.050701
    %v2670 = vmul.f32 %v2638, 1.050701
    %v2671 = vmul.f32 %v2639, 1.050701
    %v2672 = vmul.f32 %v2640, 1.050701
    %v2673 = vmul.f32 %v2641, 1.050701
    %v2674 = vmul.f32 %v2642, 1.050701
    %v2675 = vmul.f32 %v2643, 1.050701
    %v2676 = vmul.f32 %v2644, 1.050701
    %v2677 = vmul.f32 %v2645, 1.050701
    %v2678 = vmul.f32 %v2646, 1.050701
    %v2679 = vmul.f32 %v2647, 1.050701
    %v2680 = vmul.f32 %v2648, 1.050701
    %v2681 = vmul.f32 %v2649, 1.050701
    %v2682 = vmul.f32 %v2650, 1.050701
    %v2683 = vmul.f32 %v2651, 1.050701
    %v2684 = vmul.f32 %v2652, 1.050701
    %v2685 = vmul.f32 %v2653, 1.050701
    %v2686 = vmul.f32 %v2654, 1.050701
    %v2687 = vmul.f32 %v2655, 1.050701
    %v2688 = vmul.f32 %v2656, 1.050701
    %v2689 = vmul.f32 %v2657, 1.050701
    %v2690 = vmul.f32 %v2658, 1.050701
    %v2691 = vmul.f32 %v2659, 1.050701
    %v2692 = vmul.f32 %v2660, 1.050701
    %v2693 = vmul.f32 %v2661, 1.050701
    %v2694 = vmul.f32 %v2662, 1.050701
    %v2695 = vmul.f32 %v2663, 1.050701
    %v2696 = vld [vmem:[#allocation3] sm:$0xff]
    %v2697 = vld [vmem:[%s8] sm:$0xf]
    %v2698 = vld [vmem:[%s8 + $0x4] sm:$0xf]
    %v2699 = vld [vmem:[%s8 + $0x8] sm:$0xf]
    %v2700 = vld [vmem:[%s8 + $0xc] sm:$0xf]
    %v2701 = vld [vmem:[%s8 + $0x10] sm:$0xf]
    %v2702 = vld [vmem:[%s8 + $0x14] sm:$0xf]
    %v2703 = vld [vmem:[%s8 + $0x18] sm:$0xf]
    %v2704 = vld [vmem:[%s8 + $0x1c] sm:$0xf]
    %v2705 = vld [vmem:[%s8 + $0x20] sm:$0xf]
    %v2706 = vld [vmem:[%s8 + $0x24] sm:$0xf]
    %v2707 = vld [vmem:[%s8 + $0x28] sm:$0xf]
    %v2708 = vld [vmem:[%s8 + $0x2c] sm:$0xf]
    %v2709 = vld [vmem:[%s8 + $0x30] sm:$0xf]
    %v2710 = vld [vmem:[%s8 + $0x34] sm:$0xf]
    %v2711 = vld [vmem:[%s8 + $0x38] sm:$0xf]
    %v2712 = vld [vmem:[%s8 + $0x3c] sm:$0xf]
    %v2713 = vld [vmem:[%s8 + $0x40] sm:$0xf]
    %v2714 = vld [vmem:[%s8 + $0x44] sm:$0xf]
    %v2715 = vld [vmem:[%s8 + $0x48] sm:$0xf]
    %v2716 = vld [vmem:[%s8 + $0x4c] sm:$0xf]
    %v2717 = vld [vmem:[%s8 + $0x50] sm:$0xf]
    %v2718 = vld [vmem:[%s8 + $0x54] sm:$0xf]
    %v2719 = vld [vmem:[%s8 + $0x58] sm:$0xf]
    %v2720 = vld [vmem:[%s8 + $0x5c] sm:$0xf]
    %v2721 = vld [vmem:[%s8 + $0x60] sm:$0xf]
    %v2722 = vld [vmem:[%s8 + $0x64] sm:$0xf]
    %v2723 = vld [vmem:[%s8 + $0x68] sm:$0xf]
    %v2724 = vld [vmem:[%s8 + $0x6c] sm:$0xf]
    %v2725 = vld [vmem:[%s8 + $0x70] sm:$0xf]
    %v2726 = vld [vmem:[%s8 + $0x74] sm:$0xf]
    %v2727 = vld [vmem:[%s8 + $0x78] sm:$0xf]
    %v2728 = vld [vmem:[%s8 + $0x7c] sm:$0xf]
    %v2729 = vld [vmem:[%s8 + $0x80] sm:$0xf]
    %v2730 = vld [vmem:[%s8 + $0x84] sm:$0xf]
    %v2731 = vld [vmem:[%s8 + $0x88] sm:$0xf]
    %v2732 = vld [vmem:[%s8 + $0x8c] sm:$0xf]
    %v2733 = vld [vmem:[%s8 + $0x90] sm:$0xf]
    %v2734 = vld [vmem:[%s8 + $0x94] sm:$0xf]
    %v2735 = vld [vmem:[%s8 + $0x98] sm:$0xf]
    %v2736 = vld [vmem:[%s8 + $0x9c] sm:$0xf]
    %v2737 = vld [vmem:[%s8 + $0xa0] sm:$0xf]
    %v2738 = vld [vmem:[%s8 + $0xa4] sm:$0xf]
    %v2739 = vld [vmem:[%s8 + $0xa8] sm:$0xf]
    %v2740 = vld [vmem:[%s8 + $0xac] sm:$0xf]
    %v2741 = vld [vmem:[%s8 + $0xb0] sm:$0xf]
    %v2742 = vld [vmem:[%s8 + $0xb4] sm:$0xf]
    %v2743 = vld [vmem:[%s8 + $0xb8] sm:$0xf]
    %v2744 = vld [vmem:[%s8 + $0xbc] sm:$0xf]
    %v2745 = vld [vmem:[%s8 + $0xc0] sm:$0xf]
    %v2746 = vld [vmem:[%s8 + $0xc4] sm:$0xf]
    %v2747 = vld [vmem:[%s8 + $0xc8] sm:$0xf]
    %v2748 = vld [vmem:[%s8 + $0xcc] sm:$0xf]
    %v2749 = vld [vmem:[%s8 + $0xd0] sm:$0xf]
    %v2750 = vld [vmem:[%s8 + $0xd4] sm:$0xf]
    %v2751 = vld [vmem:[%s8 + $0xd8] sm:$0xf]
    %v2752 = vld [vmem:[%s8 + $0xdc] sm:$0xf]
    %v2753 = vld [vmem:[%s8 + $0xe0] sm:$0xf]
    %v2754 = vld [vmem:[%s8 + $0xe4] sm:$0xf]
    %v2755 = vld [vmem:[%s8 + $0xe8] sm:$0xf]
    %v2756 = vld [vmem:[%s8 + $0xec] sm:$0xf]
    %v2757 = vld [vmem:[%s8 + $0xf0] sm:$0xf]
    %v2758 = vld [vmem:[%s8 + $0xf4] sm:$0xf]
    %v2759 = vld [vmem:[%s8 + $0xf8] sm:$0xf]
    %v2760 = vld [vmem:[%s8 + $0xfc] sm:$0xf]
    %v2761 = vld [vmem:[%s8 + $0x100] sm:$0xf]
    %v2762 = vld [vmem:[%s8 + $0x104] sm:$0xf]
    %v2763 = vld [vmem:[%s8 + $0x108] sm:$0xf]
    %v2764 = vld [vmem:[%s8 + $0x10c] sm:$0xf]
    %v2765 = vld [vmem:[%s8 + $0x110] sm:$0xf]
    %v2766 = vld [vmem:[%s8 + $0x114] sm:$0xf]
    %v2767 = vld [vmem:[%s8 + $0x118] sm:$0xf]
    %v2768 = vld [vmem:[%s8 + $0x11c] sm:$0xf]
    %v2769 = vld [vmem:[%s8 + $0x120] sm:$0xf]
    %v2770 = vld [vmem:[%s8 + $0x124] sm:$0xf]
    %v2771 = vld [vmem:[%s8 + $0x128] sm:$0xf]
    %v2772 = vld [vmem:[%s8 + $0x12c] sm:$0xf]
    %v2773 = vld [vmem:[%s8 + $0x130] sm:$0xf]
    %v2774 = vld [vmem:[%s8 + $0x134] sm:$0xf]
    %v2775 = vld [vmem:[%s8 + $0x138] sm:$0xf]
    %v2776 = vld [vmem:[%s8 + $0x13c] sm:$0xf]
    %v2777 = vld [vmem:[%s8 + $0x140] sm:$0xf]
    %v2778 = vld [vmem:[%s8 + $0x144] sm:$0xf]
    %v2779 = vld [vmem:[%s8 + $0x148] sm:$0xf]
    %v2780 = vld [vmem:[%s8 + $0x14c] sm:$0xf]
    %v2781 = vld [vmem:[%s8 + $0x150] sm:$0xf]
    %v2782 = vld [vmem:[%s8 + $0x154] sm:$0xf]
    %v2783 = vld [vmem:[%s8 + $0x158] sm:$0xf]
    %v2784 = vld [vmem:[%s8 + $0x15c] sm:$0xf]
    %v2785 = vld [vmem:[%s8 + $0x160] sm:$0xf]
    %v2786 = vld [vmem:[%s8 + $0x164] sm:$0xf]
    %v2787 = vld [vmem:[%s8 + $0x168] sm:$0xf]
    %v2788 = vld [vmem:[%s8 + $0x16c] sm:$0xf]
    %v2789 = vld [vmem:[%s8 + $0x170] sm:$0xf]
    %v2790 = vld [vmem:[%s8 + $0x174] sm:$0xf]
    %v2791 = vld [vmem:[%s8 + $0x178] sm:$0xf]
    %v2792 = vld [vmem:[%s8 + $0x17c] sm:$0xf]
    %v2793 = vld [vmem:[%s8 + $0x180] sm:$0xf]
    %v2794 = vld [vmem:[%s8 + $0x184] sm:$0xf]
    %v2795 = vld [vmem:[%s8 + $0x188] sm:$0xf]
    %v2796 = vld [vmem:[%s8 + $0x18c] sm:$0xf]
    %v2797 = vld [vmem:[%s8 + $0x190] sm:$0xf]
    %v2798 = vld [vmem:[%s8 + $0x194] sm:$0xf]
    %v2799 = vld [vmem:[%s8 + $0x198] sm:$0xf]
    %v2800 = vld [vmem:[%s8 + $0x19c] sm:$0xf]
    %v2801 = vld [vmem:[%s8 + $0x1a0] sm:$0xf]
    %v2802 = vld [vmem:[%s8 + $0x1a4] sm:$0xf]
    %v2803 = vld [vmem:[%s8 + $0x1a8] sm:$0xf]
    %v2804 = vld [vmem:[%s8 + $0x1ac] sm:$0xf]
    %v2805 = vld [vmem:[%s8 + $0x1b0] sm:$0xf]
    %v2806 = vld [vmem:[%s8 + $0x1b4] sm:$0xf]
    %v2807 = vld [vmem:[%s8 + $0x1b8] sm:$0xf]
    %v2808 = vld [vmem:[%s8 + $0x1bc] sm:$0xf]
    %v2809 = vld [vmem:[%s8 + $0x1c0] sm:$0xf]
    %v2810 = vld [vmem:[%s8 + $0x1c4] sm:$0xf]
    %v2811 = vld [vmem:[%s8 + $0x1c8] sm:$0xf]
    %v2812 = vld [vmem:[%s8 + $0x1cc] sm:$0xf]
    %v2813 = vld [vmem:[%s8 + $0x1d0] sm:$0xf]
    %v2814 = vld [vmem:[%s8 + $0x1d4] sm:$0xf]
    %v2815 = vld [vmem:[%s8 + $0x1d8] sm:$0xf]
    %v2816 = vld [vmem:[%s8 + $0x1dc] sm:$0xf]
    %v2817 = vld [vmem:[%s8 + $0x1e0] sm:$0xf]
    %v2818 = vld [vmem:[%s8 + $0x1e4] sm:$0xf]
    %v2819 = vld [vmem:[%s8 + $0x1e8] sm:$0xf]
    %v2820 = vld [vmem:[%s8 + $0x1ec] sm:$0xf]
    %v2821 = vld [vmem:[%s8 + $0x1f0] sm:$0xf]
    %v2822 = vld [vmem:[%s8 + $0x1f4] sm:$0xf]
    %v2823 = vld [vmem:[%s8 + $0x1f8] sm:$0xf]
    %v2824 = vld [vmem:[%s8 + $0x1fc] sm:$0xf]
    %v2825 = vld [vmem:[%s8 + $0x200] sm:$0xf]
    %v2826 = vld [vmem:[%s8 + $0x204] sm:$0xf]
    %v2827 = vld [vmem:[%s8 + $0x208] sm:$0xf]
    %v2828 = vld [vmem:[%s8 + $0x20c] sm:$0xf]
    %v2829 = vld [vmem:[%s8 + $0x210] sm:$0xf]
    %v2830 = vld [vmem:[%s8 + $0x214] sm:$0xf]
    %v2831 = vld [vmem:[%s8 + $0x218] sm:$0xf]
    %v2832 = vld [vmem:[%s8 + $0x21c] sm:$0xf]
    %v2833 = vld [vmem:[%s8 + $0x220] sm:$0xf]
    %v2834 = vld [vmem:[%s8 + $0x224] sm:$0xf]
    %v2835 = vld [vmem:[%s8 + $0x228] sm:$0xf]
    %v2836 = vld [vmem:[%s8 + $0x22c] sm:$0xf]
    %v2837 = vld [vmem:[%s8 + $0x230] sm:$0xf]
    %v2838 = vld [vmem:[%s8 + $0x234] sm:$0xf]
    %v2839 = vld [vmem:[%s8 + $0x238] sm:$0xf]
    %v2840 = vld [vmem:[%s8 + $0x23c] sm:$0xf]
    %v2841 = vld [vmem:[%s8 + $0x240] sm:$0xf]
    %v2842 = vld [vmem:[%s8 + $0x244] sm:$0xf]
    %v2843 = vld [vmem:[%s8 + $0x248] sm:$0xf]
    %v2844 = vld [vmem:[%s8 + $0x24c] sm:$0xf]
    %v2845 = vld [vmem:[%s8 + $0x250] sm:$0xf]
    %v2846 = vld [vmem:[%s8 + $0x254] sm:$0xf]
    %v2847 = vld [vmem:[%s8 + $0x258] sm:$0xf]
    %v2848 = vld [vmem:[%s8 + $0x25c] sm:$0xf]
    %v2849 = vld [vmem:[%s8 + $0x260] sm:$0xf]
    %v2850 = vld [vmem:[%s8 + $0x264] sm:$0xf]
    %v2851 = vld [vmem:[%s8 + $0x268] sm:$0xf]
    %v2852 = vld [vmem:[%s8 + $0x26c] sm:$0xf]
    %v2853 = vld [vmem:[%s8 + $0x270] sm:$0xf]
    %v2854 = vld [vmem:[%s8 + $0x274] sm:$0xf]
    %v2855 = vld [vmem:[%s8 + $0x278] sm:$0xf]
    %v2856 = vld [vmem:[%s8 + $0x27c] sm:$0xf]
    %v2857 = vld [vmem:[%s8 + $0x280] sm:$0xf]
    %v2858 = vld [vmem:[%s8 + $0x284] sm:$0xf]
    %v2859 = vld [vmem:[%s8 + $0x288] sm:$0xf]
    %v2860 = vld [vmem:[%s8 + $0x28c] sm:$0xf]
    %v2861 = vld [vmem:[%s8 + $0x290] sm:$0xf]
    %v2862 = vld [vmem:[%s8 + $0x294] sm:$0xf]
    %v2863 = vld [vmem:[%s8 + $0x298] sm:$0xf]
    %v2864 = vld [vmem:[%s8 + $0x29c] sm:$0xf]
    %v2865 = vld [vmem:[%s8 + $0x2a0] sm:$0xf]
    %v2866 = vld [vmem:[%s8 + $0x2a4] sm:$0xf]
    %v2867 = vld [vmem:[%s8 + $0x2a8] sm:$0xf]
    %v2868 = vld [vmem:[%s8 + $0x2ac] sm:$0xf]
    %v2869 = vld [vmem:[%s8 + $0x2b0] sm:$0xf]
    %v2870 = vld [vmem:[%s8 + $0x2b4] sm:$0xf]
    %v2871 = vld [vmem:[%s8 + $0x2b8] sm:$0xf]
    %v2872 = vld [vmem:[%s8 + $0x2bc] sm:$0xf]
    %v2873 = vld [vmem:[%s8 + $0x2c0] sm:$0xf]
    %v2874 = vld [vmem:[%s8 + $0x2c4] sm:$0xf]
    %v2875 = vld [vmem:[%s8 + $0x2c8] sm:$0xf]
    %v2876 = vld [vmem:[%s8 + $0x2cc] sm:$0xf]
    %v2877 = vld [vmem:[%s8 + $0x2d0] sm:$0xf]
    %v2878 = vld [vmem:[%s8 + $0x2d4] sm:$0xf]
    %v2879 = vld [vmem:[%s8 + $0x2d8] sm:$0xf]
    %v2880 = vld [vmem:[%s8 + $0x2dc] sm:$0xf]
    %v2881 = vld [vmem:[%s8 + $0x2e0] sm:$0xf]
    %v2882 = vld [vmem:[%s8 + $0x2e4] sm:$0xf]
    %v2883 = vld [vmem:[%s8 + $0x2e8] sm:$0xf]
    %v2884 = vld [vmem:[%s8 + $0x2ec] sm:$0xf]
    %v2885 = vld [vmem:[%s8 + $0x2f0] sm:$0xf]
    %v2886 = vld [vmem:[%s8 + $0x2f4] sm:$0xf]
    %v2887 = vld [vmem:[%s8 + $0x2f8] sm:$0xf]
    %v2888 = vld [vmem:[%s8 + $0x2fc] sm:$0xf]
    %v2889 = vld [vmem:[%s8 + $0x300] sm:$0xf]
    %v2890 = vld [vmem:[%s8 + $0x304] sm:$0xf]
    %v2891 = vld [vmem:[%s8 + $0x308] sm:$0xf]
    %v2892 = vld [vmem:[%s8 + $0x30c] sm:$0xf]
    %v2893 = vld [vmem:[%s8 + $0x310] sm:$0xf]
    %v2894 = vld [vmem:[%s8 + $0x314] sm:$0xf]
    %v2895 = vld [vmem:[%s8 + $0x318] sm:$0xf]
    %v2896 = vld [vmem:[%s8 + $0x31c] sm:$0xf]
    %v2897 = vld [vmem:[%s8 + $0x320] sm:$0xf]
    %v2898 = vld [vmem:[%s8 + $0x324] sm:$0xf]
    %v2899 = vld [vmem:[%s8 + $0x328] sm:$0xf]
    %v2900 = vld [vmem:[%s8 + $0x32c] sm:$0xf]
    %v2901 = vld [vmem:[%s8 + $0x330] sm:$0xf]
    %v2902 = vld [vmem:[%s8 + $0x334] sm:$0xf]
    %v2903 = vld [vmem:[%s8 + $0x338] sm:$0xf]
    %v2904 = vld [vmem:[%s8 + $0x33c] sm:$0xf]
    %v2905 = vld [vmem:[%s8 + $0x340] sm:$0xf]
    %v2906 = vld [vmem:[%s8 + $0x344] sm:$0xf]
    %v2907 = vld [vmem:[%s8 + $0x348] sm:$0xf]
    %v2908 = vld [vmem:[%s8 + $0x34c] sm:$0xf]
    %v2909 = vld [vmem:[%s8 + $0x350] sm:$0xf]
    %v2910 = vld [vmem:[%s8 + $0x354] sm:$0xf]
    %v2911 = vld [vmem:[%s8 + $0x358] sm:$0xf]
    %v2912 = vld [vmem:[%s8 + $0x35c] sm:$0xf]
    %v2913 = vld [vmem:[%s8 + $0x360] sm:$0xf]
    %v2914 = vld [vmem:[%s8 + $0x364] sm:$0xf]
    %v2915 = vld [vmem:[%s8 + $0x368] sm:$0xf]
    %v2916 = vld [vmem:[%s8 + $0x36c] sm:$0xf]
    %v2917 = vld [vmem:[%s8 + $0x370] sm:$0xf]
    %v2918 = vld [vmem:[%s8 + $0x374] sm:$0xf]
    %v2919 = vld [vmem:[%s8 + $0x378] sm:$0xf]
    %v2920 = vld [vmem:[%s8 + $0x37c] sm:$0xf]
    %v2921 = vld [vmem:[%s8 + $0x380] sm:$0xf]
    %v2922 = vld [vmem:[%s8 + $0x384] sm:$0xf]
    %v2923 = vld [vmem:[%s8 + $0x388] sm:$0xf]
    %v2924 = vld [vmem:[%s8 + $0x38c] sm:$0xf]
    %v2925 = vld [vmem:[%s8 + $0x390] sm:$0xf]
    %v2926 = vld [vmem:[%s8 + $0x394] sm:$0xf]
    %v2927 = vld [vmem:[%s8 + $0x398] sm:$0xf]
    %v2928 = vld [vmem:[%s8 + $0x39c] sm:$0xf]
    %v2929 = vld [vmem:[%s8 + $0x3a0] sm:$0xf]
    %v2930 = vld [vmem:[%s8 + $0x3a4] sm:$0xf]
    %v2931 = vld [vmem:[%s8 + $0x3a8] sm:$0xf]
    %v2932 = vld [vmem:[%s8 + $0x3ac] sm:$0xf]
    %v2933 = vld [vmem:[%s8 + $0x3b0] sm:$0xf]
    %v2934 = vld [vmem:[%s8 + $0x3b4] sm:$0xf]
    %v2935 = vld [vmem:[%s8 + $0x3b8] sm:$0xf]
    %v2936 = vld [vmem:[%s8 + $0x3bc] sm:$0xf]
    %v2937 = vld [vmem:[%s8 + $0x3c0] sm:$0xf]
    %v2938 = vld [vmem:[%s8 + $0x3c4] sm:$0xf]
    %v2939 = vld [vmem:[%s8 + $0x3c8] sm:$0xf]
    %v2940 = vld [vmem:[%s8 + $0x3cc] sm:$0xf]
    %v2941 = vld [vmem:[%s8 + $0x3d0] sm:$0xf]
    %v2942 = vld [vmem:[%s8 + $0x3d4] sm:$0xf]
    %v2943 = vld [vmem:[%s8 + $0x3d8] sm:$0xf]
    %v2944 = vld [vmem:[%s8 + $0x3dc] sm:$0xf]
    %v2945 = vld [vmem:[%s8 + $0x3e0] sm:$0xf]
    %v2946 = vld [vmem:[%s8 + $0x3e4] sm:$0xf]
    %v2947 = vld [vmem:[%s8 + $0x3e8] sm:$0xf]
    %v2948 = vld [vmem:[%s8 + $0x3ec] sm:$0xf]
    %v2949 = vld [vmem:[%s8 + $0x3f0] sm:$0xf]
    %v2950 = vld [vmem:[%s8 + $0x3f4] sm:$0xf]
    %v2951 = vld [vmem:[%s8 + $0x3f8] sm:$0xf]
    %v2952 = vld [vmem:[%s8 + $0x3fc] sm:$0xf]
    %v2953 = vld [vmem:[%s8 + $0x400] sm:$0xf]
    %v2954 = vld [vmem:[%s8 + $0x404] sm:$0xf]
    %v2955 = vld [vmem:[%s8 + $0x408] sm:$0xf]
    %v2956 = vld [vmem:[%s8 + $0x40c] sm:$0xf]
    %v2957 = vld [vmem:[%s8 + $0x410] sm:$0xf]
    %v2958 = vld [vmem:[%s8 + $0x414] sm:$0xf]
    %v2959 = vld [vmem:[%s8 + $0x418] sm:$0xf]
    %v2960 = vld [vmem:[%s8 + $0x41c] sm:$0xf]
    %v2961 = vld [vmem:[%s8 + $0x420] sm:$0xf]
    %v2962 = vld [vmem:[%s8 + $0x424] sm:$0xf]
    %v2963 = vld [vmem:[%s8 + $0x428] sm:$0xf]
    %v2964 = vld [vmem:[%s8 + $0x42c] sm:$0xf]
    %v2965 = vld [vmem:[%s8 + $0x430] sm:$0xf]
    %v2966 = vld [vmem:[%s8 + $0x434] sm:$0xf]
    %v2967 = vld [vmem:[%s8 + $0x438] sm:$0xf]
    %v2968 = vld [vmem:[%s8 + $0x43c] sm:$0xf]
    %v2969 = vld [vmem:[%s8 + $0x440] sm:$0xf]
    %v2970 = vld [vmem:[%s8 + $0x444] sm:$0xf]
    %v2971 = vld [vmem:[%s8 + $0x448] sm:$0xf]
    %v2972 = vld [vmem:[%s8 + $0x44c] sm:$0xf]
    %v2973 = vld [vmem:[%s8 + $0x450] sm:$0xf]
    %v2974 = vld [vmem:[%s8 + $0x454] sm:$0xf]
    %v2975 = vld [vmem:[%s8 + $0x458] sm:$0xf]
    %v2976 = vld [vmem:[%s8 + $0x45c] sm:$0xf]
    %v2977 = vld [vmem:[%s8 + $0x460] sm:$0xf]
    %v2978 = vld [vmem:[%s8 + $0x464] sm:$0xf]
    %v2979 = vld [vmem:[%s8 + $0x468] sm:$0xf]
    %v2980 = vld [vmem:[%s8 + $0x46c] sm:$0xf]
    %v2981 = vld [vmem:[%s8 + $0x470] sm:$0xf]
    %v2982 = vld [vmem:[%s8 + $0x474] sm:$0xf]
    %v2983 = vld [vmem:[%s8 + $0x478] sm:$0xf]
    %v2984 = vld [vmem:[%s8 + $0x47c] sm:$0xf]
    %v2985 = vld [vmem:[%s8 + $0x480] sm:$0xf]
    %v2986 = vld [vmem:[%s8 + $0x484] sm:$0xf]
    %v2987 = vld [vmem:[%s8 + $0x488] sm:$0xf]
    %v2988 = vld [vmem:[%s8 + $0x48c] sm:$0xf]
    %v2989 = vld [vmem:[%s8 + $0x490] sm:$0xf]
    %v2990 = vld [vmem:[%s8 + $0x494] sm:$0xf]
    %v2991 = vld [vmem:[%s8 + $0x498] sm:$0xf]
    %v2992 = vld [vmem:[%s8 + $0x49c] sm:$0xf]
    %v2993 = vld [vmem:[%s8 + $0x4a0] sm:$0xf]
    %v2994 = vld [vmem:[%s8 + $0x4a4] sm:$0xf]
    %v2995 = vld [vmem:[%s8 + $0x4a8] sm:$0xf]
    %v2996 = vld [vmem:[%s8 + $0x4ac] sm:$0xf]
    %v2997 = vld [vmem:[%s8 + $0x4b0] sm:$0xf]
    %v2998 = vld [vmem:[%s8 + $0x4b4] sm:$0xf]
    %v2999 = vld [vmem:[%s8 + $0x4b8] sm:$0xf]
    %v3000 = vld [vmem:[%s8 + $0x4bc] sm:$0xf]
    %v3001 = vld [vmem:[%s8 + $0x4c0] sm:$0xf]
    %v3002 = vld [vmem:[%s8 + $0x4c4] sm:$0xf]
    %v3003 = vld [vmem:[%s8 + $0x4c8] sm:$0xf]
    %v3004 = vld [vmem:[%s8 + $0x4cc] sm:$0xf]
    %v3005 = vld [vmem:[%s8 + $0x4d0] sm:$0xf]
    %v3006 = vld [vmem:[%s8 + $0x4d4] sm:$0xf]
    %v3007 = vld [vmem:[%s8 + $0x4d8] sm:$0xf]
    %v3008 = vld [vmem:[%s8 + $0x4dc] sm:$0xf]
    %v3009 = vld [vmem:[%s8 + $0x4e0] sm:$0xf]
    %v3010 = vld [vmem:[%s8 + $0x4e4] sm:$0xf]
    %v3011 = vld [vmem:[%s8 + $0x4e8] sm:$0xf]
    %v3012 = vld [vmem:[%s8 + $0x4ec] sm:$0xf]
    %v3013 = vld [vmem:[%s8 + $0x4f0] sm:$0xf]
    %v3014 = vld [vmem:[%s8 + $0x4f4] sm:$0xf]
    %v3015 = vld [vmem:[%s8 + $0x4f8] sm:$0xf]
    %v3016 = vld [vmem:[%s8 + $0x4fc] sm:$0xf]
    %v3017 = vld [vmem:[%s8 + $0x500] sm:$0xf]
    %v3018 = vld [vmem:[%s8 + $0x504] sm:$0xf]
    %v3019 = vld [vmem:[%s8 + $0x508] sm:$0xf]
    %v3020 = vld [vmem:[%s8 + $0x50c] sm:$0xf]
    %v3021 = vld [vmem:[%s8 + $0x510] sm:$0xf]
    %v3022 = vld [vmem:[%s8 + $0x514] sm:$0xf]
    %v3023 = vld [vmem:[%s8 + $0x518] sm:$0xf]
    %v3024 = vld [vmem:[%s8 + $0x51c] sm:$0xf]
    %v3025 = vld [vmem:[%s8 + $0x520] sm:$0xf]
    %v3026 = vld [vmem:[%s8 + $0x524] sm:$0xf]
    %v3027 = vld [vmem:[%s8 + $0x528] sm:$0xf]
    %v3028 = vld [vmem:[%s8 + $0x52c] sm:$0xf]
    %v3029 = vld [vmem:[%s8 + $0x530] sm:$0xf]
    %v3030 = vld [vmem:[%s8 + $0x534] sm:$0xf]
    %v3031 = vld [vmem:[%s8 + $0x538] sm:$0xf]
    %v3032 = vld [vmem:[%s8 + $0x53c] sm:$0xf]
    %v3033 = vld [vmem:[%s8 + $0x540] sm:$0xf]
    %v3034 = vld [vmem:[%s8 + $0x544] sm:$0xf]
    %v3035 = vld [vmem:[%s8 + $0x548] sm:$0xf]
    %v3036 = vld [vmem:[%s8 + $0x54c] sm:$0xf]
    %v3037 = vld [vmem:[%s8 + $0x550] sm:$0xf]
    %v3038 = vld [vmem:[%s8 + $0x554] sm:$0xf]
    %v3039 = vld [vmem:[%s8 + $0x558] sm:$0xf]
    %v3040 = vld [vmem:[%s8 + $0x55c] sm:$0xf]
    %v3041 = vld [vmem:[%s8 + $0x560] sm:$0xf]
    %v3042 = vld [vmem:[%s8 + $0x564] sm:$0xf]
    %v3043 = vld [vmem:[%s8 + $0x568] sm:$0xf]
    %v3044 = vld [vmem:[%s8 + $0x56c] sm:$0xf]
    %v3045 = vld [vmem:[%s8 + $0x570] sm:$0xf]
    %v3046 = vld [vmem:[%s8 + $0x574] sm:$0xf]
    %v3047 = vld [vmem:[%s8 + $0x578] sm:$0xf]
    %v3048 = vld [vmem:[%s8 + $0x57c] sm:$0xf]
    %v3049 = vld [vmem:[%s8 + $0x580] sm:$0xf]
    %v3050 = vld [vmem:[%s8 + $0x584] sm:$0xf]
    %v3051 = vld [vmem:[%s8 + $0x588] sm:$0xf]
    %v3052 = vld [vmem:[%s8 + $0x58c] sm:$0xf]
    %v3053 = vld [vmem:[%s8 + $0x590] sm:$0xf]
    %v3054 = vld [vmem:[%s8 + $0x594] sm:$0xf]
    %v3055 = vld [vmem:[%s8 + $0x598] sm:$0xf]
    %v3056 = vld [vmem:[%s8 + $0x59c] sm:$0xf]
    %v3057 = vld [vmem:[%s8 + $0x5a0] sm:$0xf]
    %v3058 = vld [vmem:[%s8 + $0x5a4] sm:$0xf]
    %v3059 = vld [vmem:[%s8 + $0x5a8] sm:$0xf]
    %v3060 = vld [vmem:[%s8 + $0x5ac] sm:$0xf]
    %v3061 = vld [vmem:[%s8 + $0x5b0] sm:$0xf]
    %v3062 = vld [vmem:[%s8 + $0x5b4] sm:$0xf]
    %v3063 = vld [vmem:[%s8 + $0x5b8] sm:$0xf]
    %v3064 = vld [vmem:[%s8 + $0x5bc] sm:$0xf]
    %v3065 = vld [vmem:[%s8 + $0x5c0] sm:$0xf]
    %v3066 = vld [vmem:[%s8 + $0x5c4] sm:$0xf]
    %v3067 = vld [vmem:[%s8 + $0x5c8] sm:$0xf]
    %v3068 = vld [vmem:[%s8 + $0x5cc] sm:$0xf]
    %v3069 = vld [vmem:[%s8 + $0x5d0] sm:$0xf]
    %v3070 = vld [vmem:[%s8 + $0x5d4] sm:$0xf]
    %v3071 = vld [vmem:[%s8 + $0x5d8] sm:$0xf]
    %v3072 = vld [vmem:[%s8 + $0x5dc] sm:$0xf]
    %v3073 = vld [vmem:[%s8 + $0x5e0] sm:$0xf]
    %v3074 = vld [vmem:[%s8 + $0x5e4] sm:$0xf]
    %v3075 = vld [vmem:[%s8 + $0x5e8] sm:$0xf]
    %v3076 = vld [vmem:[%s8 + $0x5ec] sm:$0xf]
    %v3077 = vld [vmem:[%s8 + $0x5f0] sm:$0xf]
    %v3078 = vld [vmem:[%s8 + $0x5f4] sm:$0xf]
    %v3079 = vld [vmem:[%s8 + $0x5f8] sm:$0xf]
    %v3080 = vld [vmem:[%s8 + $0x5fc] sm:$0xf]
    %v3081 = vld [vmem:[%s8 + $0x600] sm:$0xf]
    %v3082 = vld [vmem:[%s8 + $0x604] sm:$0xf]
    %v3083 = vld [vmem:[%s8 + $0x608] sm:$0xf]
    %v3084 = vld [vmem:[%s8 + $0x60c] sm:$0xf]
    %v3085 = vld [vmem:[%s8 + $0x610] sm:$0xf]
    %v3086 = vld [vmem:[%s8 + $0x614] sm:$0xf]
    %v3087 = vld [vmem:[%s8 + $0x618] sm:$0xf]
    %v3088 = vld [vmem:[%s8 + $0x61c] sm:$0xf]
    %v3089 = vld [vmem:[%s8 + $0x620] sm:$0xf]
    %v3090 = vld [vmem:[%s8 + $0x624] sm:$0xf]
    %v3091 = vld [vmem:[%s8 + $0x628] sm:$0xf]
    %v3092 = vld [vmem:[%s8 + $0x62c] sm:$0xf]
    %v3093 = vld [vmem:[%s8 + $0x630] sm:$0xf]
    %v3094 = vld [vmem:[%s8 + $0x634] sm:$0xf]
    %v3095 = vld [vmem:[%s8 + $0x638] sm:$0xf]
    %v3096 = vld [vmem:[%s8 + $0x63c] sm:$0xf]
    %v3097 = vld [vmem:[%s8 + $0x640] sm:$0xf]
    %v3098 = vld [vmem:[%s8 + $0x644] sm:$0xf]
    %v3099 = vld [vmem:[%s8 + $0x648] sm:$0xf]
    %v3100 = vld [vmem:[%s8 + $0x64c] sm:$0xf]
    %v3101 = vld [vmem:[%s8 + $0x650] sm:$0xf]
    %v3102 = vld [vmem:[%s8 + $0x654] sm:$0xf]
    %v3103 = vld [vmem:[%s8 + $0x658] sm:$0xf]
    %v3104 = vld [vmem:[%s8 + $0x65c] sm:$0xf]
    %v3105 = vld [vmem:[%s8 + $0x660] sm:$0xf]
    %v3106 = vld [vmem:[%s8 + $0x664] sm:$0xf]
    %v3107 = vld [vmem:[%s8 + $0x668] sm:$0xf]
    %v3108 = vld [vmem:[%s8 + $0x66c] sm:$0xf]
    %v3109 = vld [vmem:[%s8 + $0x670] sm:$0xf]
    %v3110 = vld [vmem:[%s8 + $0x674] sm:$0xf]
    %v3111 = vld [vmem:[%s8 + $0x678] sm:$0xf]
    %v3112 = vld [vmem:[%s8 + $0x67c] sm:$0xf]
    %v3113 = vld [vmem:[%s8 + $0x680] sm:$0xf]
    %v3114 = vld [vmem:[%s8 + $0x684] sm:$0xf]
    %v3115 = vld [vmem:[%s8 + $0x688] sm:$0xf]
    %v3116 = vld [vmem:[%s8 + $0x68c] sm:$0xf]
    %v3117 = vld [vmem:[%s8 + $0x690] sm:$0xf]
    %v3118 = vld [vmem:[%s8 + $0x694] sm:$0xf]
    %v3119 = vld [vmem:[%s8 + $0x698] sm:$0xf]
    %v3120 = vld [vmem:[%s8 + $0x69c] sm:$0xf]
    %v3121 = vld [vmem:[%s8 + $0x6a0] sm:$0xf]
    %v3122 = vld [vmem:[%s8 + $0x6a4] sm:$0xf]
    %v3123 = vld [vmem:[%s8 + $0x6a8] sm:$0xf]
    %v3124 = vld [vmem:[%s8 + $0x6ac] sm:$0xf]
    %v3125 = vld [vmem:[%s8 + $0x6b0] sm:$0xf]
    %v3126 = vld [vmem:[%s8 + $0x6b4] sm:$0xf]
    %v3127 = vld [vmem:[%s8 + $0x6b8] sm:$0xf]
    %v3128 = vld [vmem:[%s8 + $0x6bc] sm:$0xf]
    %v3129 = vld [vmem:[%s8 + $0x6c0] sm:$0xf]
    %v3130 = vld [vmem:[%s8 + $0x6c4] sm:$0xf]
    %v3131 = vld [vmem:[%s8 + $0x6c8] sm:$0xf]
    %v3132 = vld [vmem:[%s8 + $0x6cc] sm:$0xf]
    %v3133 = vld [vmem:[%s8 + $0x6d0] sm:$0xf]
    %v3134 = vld [vmem:[%s8 + $0x6d4] sm:$0xf]
    %v3135 = vld [vmem:[%s8 + $0x6d8] sm:$0xf]
    %v3136 = vld [vmem:[%s8 + $0x6dc] sm:$0xf]
    %v3137 = vld [vmem:[%s8 + $0x6e0] sm:$0xf]
    %v3138 = vld [vmem:[%s8 + $0x6e4] sm:$0xf]
    %v3139 = vld [vmem:[%s8 + $0x6e8] sm:$0xf]
    %v3140 = vld [vmem:[%s8 + $0x6ec] sm:$0xf]
    %v3141 = vld [vmem:[%s8 + $0x6f0] sm:$0xf]
    %v3142 = vld [vmem:[%s8 + $0x6f4] sm:$0xf]
    %v3143 = vld [vmem:[%s8 + $0x6f8] sm:$0xf]
    %v3144 = vld [vmem:[%s8 + $0x6fc] sm:$0xf]
    %v3145 = vld [vmem:[%s8 + $0x700] sm:$0xf]
    %v3146 = vld [vmem:[%s8 + $0x704] sm:$0xf]
    %v3147 = vld [vmem:[%s8 + $0x708] sm:$0xf]
    %v3148 = vld [vmem:[%s8 + $0x70c] sm:$0xf]
    %v3149 = vld [vmem:[%s8 + $0x710] sm:$0xf]
    %v3150 = vld [vmem:[%s8 + $0x714] sm:$0xf]
    %v3151 = vld [vmem:[%s8 + $0x718] sm:$0xf]
    %v3152 = vld [vmem:[%s8 + $0x71c] sm:$0xf]
    %v3153 = vld [vmem:[%s8 + $0x720] sm:$0xf]
    %v3154 = vld [vmem:[%s8 + $0x724] sm:$0xf]
    %v3155 = vld [vmem:[%s8 + $0x728] sm:$0xf]
    %v3156 = vld [vmem:[%s8 + $0x72c] sm:$0xf]
    %v3157 = vld [vmem:[%s8 + $0x730] sm:$0xf]
    %v3158 = vld [vmem:[%s8 + $0x734] sm:$0xf]
    %v3159 = vld [vmem:[%s8 + $0x738] sm:$0xf]
    %v3160 = vld [vmem:[%s8 + $0x73c] sm:$0xf]
    %v3161 = vld [vmem:[%s8 + $0x740] sm:$0xf]
    %v3162 = vld [vmem:[%s8 + $0x744] sm:$0xf]
    %v3163 = vld [vmem:[%s8 + $0x748] sm:$0xf]
    %v3164 = vld [vmem:[%s8 + $0x74c] sm:$0xf]
    %v3165 = vld [vmem:[%s8 + $0x750] sm:$0xf]
    %v3166 = vld [vmem:[%s8 + $0x754] sm:$0xf]
    %v3167 = vld [vmem:[%s8 + $0x758] sm:$0xf]
    %v3168 = vld [vmem:[%s8 + $0x75c] sm:$0xf]
    %v3169 = vld [vmem:[%s8 + $0x760] sm:$0xf]
    %v3170 = vld [vmem:[%s8 + $0x764] sm:$0xf]
    %v3171 = vld [vmem:[%s8 + $0x768] sm:$0xf]
    %v3172 = vld [vmem:[%s8 + $0x76c] sm:$0xf]
    %v3173 = vld [vmem:[%s8 + $0x770] sm:$0xf]
    %v3174 = vld [vmem:[%s8 + $0x774] sm:$0xf]
    %v3175 = vld [vmem:[%s8 + $0x778] sm:$0xf]
    %v3176 = vld [vmem:[%s8 + $0x77c] sm:$0xf]
    %v3177 = vld [vmem:[%s8 + $0x780] sm:$0xf]
    %v3178 = vld [vmem:[%s8 + $0x784] sm:$0xf]
    %v3179 = vld [vmem:[%s8 + $0x788] sm:$0xf]
    %v3180 = vld [vmem:[%s8 + $0x78c] sm:$0xf]
    %v3181 = vld [vmem:[%s8 + $0x790] sm:$0xf]
    %v3182 = vld [vmem:[%s8 + $0x794] sm:$0xf]
    %v3183 = vld [vmem:[%s8 + $0x798] sm:$0xf]
    %v3184 = vld [vmem:[%s8 + $0x79c] sm:$0xf]
    %v3185 = vld [vmem:[%s8 + $0x7a0] sm:$0xf]
    %v3186 = vld [vmem:[%s8 + $0x7a4] sm:$0xf]
    %v3187 = vld [vmem:[%s8 + $0x7a8] sm:$0xf]
    %v3188 = vld [vmem:[%s8 + $0x7ac] sm:$0xf]
    %v3189 = vld [vmem:[%s8 + $0x7b0] sm:$0xf]
    %v3190 = vld [vmem:[%s8 + $0x7b4] sm:$0xf]
    %v3191 = vld [vmem:[%s8 + $0x7b8] sm:$0xf]
    %v3192 = vld [vmem:[%s8 + $0x7bc] sm:$0xf]
    %v3193 = vld [vmem:[%s8 + $0x7c0] sm:$0xf]
    %v3194 = vld [vmem:[%s8 + $0x7c4] sm:$0xf]
    %v3195 = vld [vmem:[%s8 + $0x7c8] sm:$0xf]
    %v3196 = vld [vmem:[%s8 + $0x7cc] sm:$0xf]
    %v3197 = vld [vmem:[%s8 + $0x7d0] sm:$0xf]
    %v3198 = vld [vmem:[%s8 + $0x7d4] sm:$0xf]
    %v3199 = vld [vmem:[%s8 + $0x7d8] sm:$0xf]
    %v3200 = vld [vmem:[%s8 + $0x7dc] sm:$0xf]
    %v3201 = vld [vmem:[%s8 + $0x7e0] sm:$0xf]
    %v3202 = vld [vmem:[%s8 + $0x7e4] sm:$0xf]
    %v3203 = vld [vmem:[%s8 + $0x7e8] sm:$0xf]
    %v3204 = vld [vmem:[%s8 + $0x7ec] sm:$0xf]
    %v3205 = vld [vmem:[%s8 + $0x7f0] sm:$0xf]
    %v3206 = vld [vmem:[%s8 + $0x7f4] sm:$0xf]
    %v3207 = vld [vmem:[%s8 + $0x7f8] sm:$0xf]
    %v3208 = vld [vmem:[%s8 + $0x7fc] sm:$0xf]
    %v3209 = vunpack.c.l.bf16 %v2697
    %v3210 = vunpack.c.l.bf16 %v2698
    %v3211 = vunpack.c.l.bf16 %v2699
    %v3212 = vunpack.c.l.bf16 %v2700
    %v3213 = vunpack.c.l.bf16 %v2701
    %v3214 = vunpack.c.l.bf16 %v2702
    %v3215 = vunpack.c.l.bf16 %v2703
    %v3216 = vunpack.c.l.bf16 %v2704
    %v3217 = vunpack.c.l.bf16 %v2705
    %v3218 = vunpack.c.l.bf16 %v2706
    %v3219 = vunpack.c.l.bf16 %v2707
    %v3220 = vunpack.c.l.bf16 %v2708
    %v3221 = vunpack.c.l.bf16 %v2709
    %v3222 = vunpack.c.l.bf16 %v2710
    %v3223 = vunpack.c.l.bf16 %v2711
    %v3224 = vunpack.c.l.bf16 %v2712
    %v3225 = vunpack.c.l.bf16 %v2713
    %v3226 = vunpack.c.l.bf16 %v2714
    %v3227 = vunpack.c.l.bf16 %v2715
    %v3228 = vunpack.c.l.bf16 %v2716
    %v3229 = vunpack.c.l.bf16 %v2717
    %v3230 = vunpack.c.l.bf16 %v2718
    %v3231 = vunpack.c.l.bf16 %v2719
    %v3232 = vunpack.c.l.bf16 %v2720
    %v3233 = vunpack.c.l.bf16 %v2721
    %v3234 = vunpack.c.l.bf16 %v2722
    %v3235 = vunpack.c.l.bf16 %v2723
    %v3236 = vunpack.c.l.bf16 %v2724
    %v3237 = vunpack.c.l.bf16 %v2725
    %v3238 = vunpack.c.l.bf16 %v2726
    %v3239 = vunpack.c.l.bf16 %v2727
    %v3240 = vunpack.c.l.bf16 %v2728
    %v3241 = vunpack.c.l.bf16 %v2729
    %v3242 = vunpack.c.l.bf16 %v2730
    %v3243 = vunpack.c.l.bf16 %v2731
    %v3244 = vunpack.c.l.bf16 %v2732
    %v3245 = vunpack.c.l.bf16 %v2733
    %v3246 = vunpack.c.l.bf16 %v2734
    %v3247 = vunpack.c.l.bf16 %v2735
    %v3248 = vunpack.c.l.bf16 %v2736
    %v3249 = vunpack.c.l.bf16 %v2737
    %v3250 = vunpack.c.l.bf16 %v2738
    %v3251 = vunpack.c.l.bf16 %v2739
    %v3252 = vunpack.c.l.bf16 %v2740
    %v3253 = vunpack.c.l.bf16 %v2741
    %v3254 = vunpack.c.l.bf16 %v2742
    %v3255 = vunpack.c.l.bf16 %v2743
    %v3256 = vunpack.c.l.bf16 %v2744
    %v3257 = vunpack.c.l.bf16 %v2745
    %v3258 = vunpack.c.l.bf16 %v2746
    %v3259 = vunpack.c.l.bf16 %v2747
    %v3260 = vunpack.c.l.bf16 %v2748
    %v3261 = vunpack.c.l.bf16 %v2749
    %v3262 = vunpack.c.l.bf16 %v2750
    %v3263 = vunpack.c.l.bf16 %v2751
    %v3264 = vunpack.c.l.bf16 %v2752
    %v3265 = vunpack.c.l.bf16 %v2753
    %v3266 = vunpack.c.l.bf16 %v2754
    %v3267 = vunpack.c.l.bf16 %v2755
    %v3268 = vunpack.c.l.bf16 %v2756
    %v3269 = vunpack.c.l.bf16 %v2757
    %v3270 = vunpack.c.l.bf16 %v2758
    %v3271 = vunpack.c.l.bf16 %v2759
    %v3272 = vunpack.c.l.bf16 %v2760
    %v3273 = vunpack.c.l.bf16 %v2761
    %v3274 = vunpack.c.l.bf16 %v2762
    %v3275 = vunpack.c.l.bf16 %v2763
    %v3276 = vunpack.c.l.bf16 %v2764
    %v3277 = vunpack.c.l.bf16 %v2765
    %v3278 = vunpack.c.l.bf16 %v2766
    %v3279 = vunpack.c.l.bf16 %v2767
    %v3280 = vunpack.c.l.bf16 %v2768
    %v3281 = vunpack.c.l.bf16 %v2769
    %v3282 = vunpack.c.l.bf16 %v2770
    %v3283 = vunpack.c.l.bf16 %v2771
    %v3284 = vunpack.c.l.bf16 %v2772
    %v3285 = vunpack.c.l.bf16 %v2773
    %v3286 = vunpack.c.l.bf16 %v2774
    %v3287 = vunpack.c.l.bf16 %v2775
    %v3288 = vunpack.c.l.bf16 %v2776
    %v3289 = vunpack.c.l.bf16 %v2777
    %v3290 = vunpack.c.l.bf16 %v2778
    %v3291 = vunpack.c.l.bf16 %v2779
    %v3292 = vunpack.c.l.bf16 %v2780
    %v3293 = vunpack.c.l.bf16 %v2781
    %v3294 = vunpack.c.l.bf16 %v2782
    %v3295 = vunpack.c.l.bf16 %v2783
    %v3296 = vunpack.c.l.bf16 %v2784
    %v3297 = vunpack.c.l.bf16 %v2785
    %v3298 = vunpack.c.l.bf16 %v2786
    %v3299 = vunpack.c.l.bf16 %v2787
    %v3300 = vunpack.c.l.bf16 %v2788
    %v3301 = vunpack.c.l.bf16 %v2789
    %v3302 = vunpack.c.l.bf16 %v2790
    %v3303 = vunpack.c.l.bf16 %v2791
    %v3304 = vunpack.c.l.bf16 %v2792
    %v3305 = vunpack.c.l.bf16 %v2793
    %v3306 = vunpack.c.l.bf16 %v2794
    %v3307 = vunpack.c.l.bf16 %v2795
    %v3308 = vunpack.c.l.bf16 %v2796
    %v3309 = vunpack.c.l.bf16 %v2797
    %v3310 = vunpack.c.l.bf16 %v2798
    %v3311 = vunpack.c.l.bf16 %v2799
    %v3312 = vunpack.c.l.bf16 %v2800
    %v3313 = vunpack.c.l.bf16 %v2801
    %v3314 = vunpack.c.l.bf16 %v2802
    %v3315 = vunpack.c.l.bf16 %v2803
    %v3316 = vunpack.c.l.bf16 %v2804
    %v3317 = vunpack.c.l.bf16 %v2805
    %v3318 = vunpack.c.l.bf16 %v2806
    %v3319 = vunpack.c.l.bf16 %v2807
    %v3320 = vunpack.c.l.bf16 %v2808
    %v3321 = vunpack.c.l.bf16 %v2809
    %v3322 = vunpack.c.l.bf16 %v2810
    %v3323 = vunpack.c.l.bf16 %v2811
    %v3324 = vunpack.c.l.bf16 %v2812
    %v3325 = vunpack.c.l.bf16 %v2813
    %v3326 = vunpack.c.l.bf16 %v2814
    %v3327 = vunpack.c.l.bf16 %v2815
    %v3328 = vunpack.c.l.bf16 %v2816
    %v3329 = vunpack.c.l.bf16 %v2817
    %v3330 = vunpack.c.l.bf16 %v2818
    %v3331 = vunpack.c.l.bf16 %v2819
    %v3332 = vunpack.c.l.bf16 %v2820
    %v3333 = vunpack.c.l.bf16 %v2821
    %v3334 = vunpack.c.l.bf16 %v2822
    %v3335 = vunpack.c.l.bf16 %v2823
    %v3336 = vunpack.c.l.bf16 %v2824
    %v3337 = vunpack.c.l.bf16 %v2825
    %v3338 = vunpack.c.l.bf16 %v2826
    %v3339 = vunpack.c.l.bf16 %v2827
    %v3340 = vunpack.c.l.bf16 %v2828
    %v3341 = vunpack.c.l.bf16 %v2829
    %v3342 = vunpack.c.l.bf16 %v2830
    %v3343 = vunpack.c.l.bf16 %v2831
    %v3344 = vunpack.c.l.bf16 %v2832
    %v3345 = vunpack.c.l.bf16 %v2833
    %v3346 = vunpack.c.l.bf16 %v2834
    %v3347 = vunpack.c.l.bf16 %v2835
    %v3348 = vunpack.c.l.bf16 %v2836
    %v3349 = vunpack.c.l.bf16 %v2837
    %v3350 = vunpack.c.l.bf16 %v2838
    %v3351 = vunpack.c.l.bf16 %v2839
    %v3352 = vunpack.c.l.bf16 %v2840
    %v3353 = vunpack.c.l.bf16 %v2841
    %v3354 = vunpack.c.l.bf16 %v2842
    %v3355 = vunpack.c.l.bf16 %v2843
    %v3356 = vunpack.c.l.bf16 %v2844
    %v3357 = vunpack.c.l.bf16 %v2845
    %v3358 = vunpack.c.l.bf16 %v2846
    %v3359 = vunpack.c.l.bf16 %v2847
    %v3360 = vunpack.c.l.bf16 %v2848
    %v3361 = vunpack.c.l.bf16 %v2849
    %v3362 = vunpack.c.l.bf16 %v2850
    %v3363 = vunpack.c.l.bf16 %v2851
    %v3364 = vunpack.c.l.bf16 %v2852
    %v3365 = vunpack.c.l.bf16 %v2853
    %v3366 = vunpack.c.l.bf16 %v2854
    %v3367 = vunpack.c.l.bf16 %v2855
    %v3368 = vunpack.c.l.bf16 %v2856
    %v3369 = vunpack.c.l.bf16 %v2857
    %v3370 = vunpack.c.l.bf16 %v2858
    %v3371 = vunpack.c.l.bf16 %v2859
    %v3372 = vunpack.c.l.bf16 %v2860
    %v3373 = vunpack.c.l.bf16 %v2861
    %v3374 = vunpack.c.l.bf16 %v2862
    %v3375 = vunpack.c.l.bf16 %v2863
    %v3376 = vunpack.c.l.bf16 %v2864
    %v3377 = vunpack.c.l.bf16 %v2865
    %v3378 = vunpack.c.l.bf16 %v2866
    %v3379 = vunpack.c.l.bf16 %v2867
    %v3380 = vunpack.c.l.bf16 %v2868
    %v3381 = vunpack.c.l.bf16 %v2869
    %v3382 = vunpack.c.l.bf16 %v2870
    %v3383 = vunpack.c.l.bf16 %v2871
    %v3384 = vunpack.c.l.bf16 %v2872
    %v3385 = vunpack.c.l.bf16 %v2873
    %v3386 = vunpack.c.l.bf16 %v2874
    %v3387 = vunpack.c.l.bf16 %v2875
    %v3388 = vunpack.c.l.bf16 %v2876
    %v3389 = vunpack.c.l.bf16 %v2877
    %v3390 = vunpack.c.l.bf16 %v2878
    %v3391 = vunpack.c.l.bf16 %v2879
    %v3392 = vunpack.c.l.bf16 %v2880
    %v3393 = vunpack.c.l.bf16 %v2881
    %v3394 = vunpack.c.l.bf16 %v2882
    %v3395 = vunpack.c.l.bf16 %v2883
    %v3396 = vunpack.c.l.bf16 %v2884
    %v3397 = vunpack.c.l.bf16 %v2885
    %v3398 = vunpack.c.l.bf16 %v2886
    %v3399 = vunpack.c.l.bf16 %v2887
    %v3400 = vunpack.c.l.bf16 %v2888
    %v3401 = vunpack.c.l.bf16 %v2889
    %v3402 = vunpack.c.l.bf16 %v2890
    %v3403 = vunpack.c.l.bf16 %v2891
    %v3404 = vunpack.c.l.bf16 %v2892
    %v3405 = vunpack.c.l.bf16 %v2893
    %v3406 = vunpack.c.l.bf16 %v2894
    %v3407 = vunpack.c.l.bf16 %v2895
    %v3408 = vunpack.c.l.bf16 %v2896
    %v3409 = vunpack.c.l.bf16 %v2897
    %v3410 = vunpack.c.l.bf16 %v2898
    %v3411 = vunpack.c.l.bf16 %v2899
    %v3412 = vunpack.c.l.bf16 %v2900
    %v3413 = vunpack.c.l.bf16 %v2901
    %v3414 = vunpack.c.l.bf16 %v2902
    %v3415 = vunpack.c.l.bf16 %v2903
    %v3416 = vunpack.c.l.bf16 %v2904
    %v3417 = vunpack.c.l.bf16 %v2905
    %v3418 = vunpack.c.l.bf16 %v2906
    %v3419 = vunpack.c.l.bf16 %v2907
    %v3420 = vunpack.c.l.bf16 %v2908
    %v3421 = vunpack.c.l.bf16 %v2909
    %v3422 = vunpack.c.l.bf16 %v2910
    %v3423 = vunpack.c.l.bf16 %v2911
    %v3424 = vunpack.c.l.bf16 %v2912
    %v3425 = vunpack.c.l.bf16 %v2913
    %v3426 = vunpack.c.l.bf16 %v2914
    %v3427 = vunpack.c.l.bf16 %v2915
    %v3428 = vunpack.c.l.bf16 %v2916
    %v3429 = vunpack.c.l.bf16 %v2917
    %v3430 = vunpack.c.l.bf16 %v2918
    %v3431 = vunpack.c.l.bf16 %v2919
    %v3432 = vunpack.c.l.bf16 %v2920
    %v3433 = vunpack.c.l.bf16 %v2921
    %v3434 = vunpack.c.l.bf16 %v2922
    %v3435 = vunpack.c.l.bf16 %v2923
    %v3436 = vunpack.c.l.bf16 %v2924
    %v3437 = vunpack.c.l.bf16 %v2925
    %v3438 = vunpack.c.l.bf16 %v2926
    %v3439 = vunpack.c.l.bf16 %v2927
    %v3440 = vunpack.c.l.bf16 %v2928
    %v3441 = vunpack.c.l.bf16 %v2929
    %v3442 = vunpack.c.l.bf16 %v2930
    %v3443 = vunpack.c.l.bf16 %v2931
    %v3444 = vunpack.c.l.bf16 %v2932
    %v3445 = vunpack.c.l.bf16 %v2933
    %v3446 = vunpack.c.l.bf16 %v2934
    %v3447 = vunpack.c.l.bf16 %v2935
    %v3448 = vunpack.c.l.bf16 %v2936
    %v3449 = vunpack.c.l.bf16 %v2937
    %v3450 = vunpack.c.l.bf16 %v2938
    %v3451 = vunpack.c.l.bf16 %v2939
    %v3452 = vunpack.c.l.bf16 %v2940
    %v3453 = vunpack.c.l.bf16 %v2941
    %v3454 = vunpack.c.l.bf16 %v2942
    %v3455 = vunpack.c.l.bf16 %v2943
    %v3456 = vunpack.c.l.bf16 %v2944
    %v3457 = vunpack.c.l.bf16 %v2945
    %v3458 = vunpack.c.l.bf16 %v2946
    %v3459 = vunpack.c.l.bf16 %v2947
    %v3460 = vunpack.c.l.bf16 %v2948
    %v3461 = vunpack.c.l.bf16 %v2949
    %v3462 = vunpack.c.l.bf16 %v2950
    %v3463 = vunpack.c.l.bf16 %v2951
    %v3464 = vunpack.c.l.bf16 %v2952
    %v3465 = vunpack.c.l.bf16 %v2953
    %v3466 = vunpack.c.l.bf16 %v2954
    %v3467 = vunpack.c.l.bf16 %v2955
    %v3468 = vunpack.c.l.bf16 %v2956
    %v3469 = vunpack.c.l.bf16 %v2957
    %v3470 = vunpack.c.l.bf16 %v2958
    %v3471 = vunpack.c.l.bf16 %v2959
    %v3472 = vunpack.c.l.bf16 %v2960
    %v3473 = vunpack.c.l.bf16 %v2961
    %v3474 = vunpack.c.l.bf16 %v2962
    %v3475 = vunpack.c.l.bf16 %v2963
    %v3476 = vunpack.c.l.bf16 %v2964
    %v3477 = vunpack.c.l.bf16 %v2965
    %v3478 = vunpack.c.l.bf16 %v2966
    %v3479 = vunpack.c.l.bf16 %v2967
    %v3480 = vunpack.c.l.bf16 %v2968
    %v3481 = vunpack.c.l.bf16 %v2969
    %v3482 = vunpack.c.l.bf16 %v2970
    %v3483 = vunpack.c.l.bf16 %v2971
    %v3484 = vunpack.c.l.bf16 %v2972
    %v3485 = vunpack.c.l.bf16 %v2973
    %v3486 = vunpack.c.l.bf16 %v2974
    %v3487 = vunpack.c.l.bf16 %v2975
    %v3488 = vunpack.c.l.bf16 %v2976
    %v3489 = vunpack.c.l.bf16 %v2977
    %v3490 = vunpack.c.l.bf16 %v2978
    %v3491 = vunpack.c.l.bf16 %v2979
    %v3492 = vunpack.c.l.bf16 %v2980
    %v3493 = vunpack.c.l.bf16 %v2981
    %v3494 = vunpack.c.l.bf16 %v2982
    %v3495 = vunpack.c.l.bf16 %v2983
    %v3496 = vunpack.c.l.bf16 %v2984
    %v3497 = vunpack.c.l.bf16 %v2985
    %v3498 = vunpack.c.l.bf16 %v2986
    %v3499 = vunpack.c.l.bf16 %v2987
    %v3500 = vunpack.c.l.bf16 %v2988
    %v3501 = vunpack.c.l.bf16 %v2989
    %v3502 = vunpack.c.l.bf16 %v2990
    %v3503 = vunpack.c.l.bf16 %v2991
    %v3504 = vunpack.c.l.bf16 %v2992
    %v3505 = vunpack.c.l.bf16 %v2993
    %v3506 = vunpack.c.l.bf16 %v2994
    %v3507 = vunpack.c.l.bf16 %v2995
    %v3508 = vunpack.c.l.bf16 %v2996
    %v3509 = vunpack.c.l.bf16 %v2997
    %v3510 = vunpack.c.l.bf16 %v2998
    %v3511 = vunpack.c.l.bf16 %v2999
    %v3512 = vunpack.c.l.bf16 %v3000
    %v3513 = vunpack.c.l.bf16 %v3001
    %v3514 = vunpack.c.l.bf16 %v3002
    %v3515 = vunpack.c.l.bf16 %v3003
    %v3516 = vunpack.c.l.bf16 %v3004
    %v3517 = vunpack.c.l.bf16 %v3005
    %v3518 = vunpack.c.l.bf16 %v3006
    %v3519 = vunpack.c.l.bf16 %v3007
    %v3520 = vunpack.c.l.bf16 %v3008
    %v3521 = vunpack.c.l.bf16 %v3009
    %v3522 = vunpack.c.l.bf16 %v3010
    %v3523 = vunpack.c.l.bf16 %v3011
    %v3524 = vunpack.c.l.bf16 %v3012
    %v3525 = vunpack.c.l.bf16 %v3013
    %v3526 = vunpack.c.l.bf16 %v3014
    %v3527 = vunpack.c.l.bf16 %v3015
    %v3528 = vunpack.c.l.bf16 %v3016
    %v3529 = vunpack.c.l.bf16 %v3017
    %v3530 = vunpack.c.l.bf16 %v3018
    %v3531 = vunpack.c.l.bf16 %v3019
    %v3532 = vunpack.c.l.bf16 %v3020
    %v3533 = vunpack.c.l.bf16 %v3021
    %v3534 = vunpack.c.l.bf16 %v3022
    %v3535 = vunpack.c.l.bf16 %v3023
    %v3536 = vunpack.c.l.bf16 %v3024
    %v3537 = vunpack.c.l.bf16 %v3025
    %v3538 = vunpack.c.l.bf16 %v3026
    %v3539 = vunpack.c.l.bf16 %v3027
    %v3540 = vunpack.c.l.bf16 %v3028
    %v3541 = vunpack.c.l.bf16 %v3029
    %v3542 = vunpack.c.l.bf16 %v3030
    %v3543 = vunpack.c.l.bf16 %v3031
    %v3544 = vunpack.c.l.bf16 %v3032
    %v3545 = vunpack.c.l.bf16 %v3033
    %v3546 = vunpack.c.l.bf16 %v3034
    %v3547 = vunpack.c.l.bf16 %v3035
    %v3548 = vunpack.c.l.bf16 %v3036
    %v3549 = vunpack.c.l.bf16 %v3037
    %v3550 = vunpack.c.l.bf16 %v3038
    %v3551 = vunpack.c.l.bf16 %v3039
    %v3552 = vunpack.c.l.bf16 %v3040
    %v3553 = vunpack.c.l.bf16 %v3041
    %v3554 = vunpack.c.l.bf16 %v3042
    %v3555 = vunpack.c.l.bf16 %v3043
    %v3556 = vunpack.c.l.bf16 %v3044
    %v3557 = vunpack.c.l.bf16 %v3045
    %v3558 = vunpack.c.l.bf16 %v3046
    %v3559 = vunpack.c.l.bf16 %v3047
    %v3560 = vunpack.c.l.bf16 %v3048
    %v3561 = vunpack.c.l.bf16 %v3049
    %v3562 = vunpack.c.l.bf16 %v3050
    %v3563 = vunpack.c.l.bf16 %v3051
    %v3564 = vunpack.c.l.bf16 %v3052
    %v3565 = vunpack.c.l.bf16 %v3053
    %v3566 = vunpack.c.l.bf16 %v3054
    %v3567 = vunpack.c.l.bf16 %v3055
    %v3568 = vunpack.c.l.bf16 %v3056
    %v3569 = vunpack.c.l.bf16 %v3057
    %v3570 = vunpack.c.l.bf16 %v3058
    %v3571 = vunpack.c.l.bf16 %v3059
    %v3572 = vunpack.c.l.bf16 %v3060
    %v3573 = vunpack.c.l.bf16 %v3061
    %v3574 = vunpack.c.l.bf16 %v3062
    %v3575 = vunpack.c.l.bf16 %v3063
    %v3576 = vunpack.c.l.bf16 %v3064
    %v3577 = vunpack.c.l.bf16 %v3065
    %v3578 = vunpack.c.l.bf16 %v3066
    %v3579 = vunpack.c.l.bf16 %v3067
    %v3580 = vunpack.c.l.bf16 %v3068
    %v3581 = vunpack.c.l.bf16 %v3069
    %v3582 = vunpack.c.l.bf16 %v3070
    %v3583 = vunpack.c.l.bf16 %v3071
    %v3584 = vunpack.c.l.bf16 %v3072
    %v3585 = vunpack.c.l.bf16 %v3073
    %v3586 = vunpack.c.l.bf16 %v3074
    %v3587 = vunpack.c.l.bf16 %v3075
    %v3588 = vunpack.c.l.bf16 %v3076
    %v3589 = vunpack.c.l.bf16 %v3077
    %v3590 = vunpack.c.l.bf16 %v3078
    %v3591 = vunpack.c.l.bf16 %v3079
    %v3592 = vunpack.c.l.bf16 %v3080
    %v3593 = vunpack.c.l.bf16 %v3081
    %v3594 = vunpack.c.l.bf16 %v3082
    %v3595 = vunpack.c.l.bf16 %v3083
    %v3596 = vunpack.c.l.bf16 %v3084
    %v3597 = vunpack.c.l.bf16 %v3085
    %v3598 = vunpack.c.l.bf16 %v3086
    %v3599 = vunpack.c.l.bf16 %v3087
    %v3600 = vunpack.c.l.bf16 %v3088
    %v3601 = vunpack.c.l.bf16 %v3089
    %v3602 = vunpack.c.l.bf16 %v3090
    %v3603 = vunpack.c.l.bf16 %v3091
    %v3604 = vunpack.c.l.bf16 %v3092
    %v3605 = vunpack.c.l.bf16 %v3093
    %v3606 = vunpack.c.l.bf16 %v3094
    %v3607 = vunpack.c.l.bf16 %v3095
    %v3608 = vunpack.c.l.bf16 %v3096
    %v3609 = vunpack.c.l.bf16 %v3097
    %v3610 = vunpack.c.l.bf16 %v3098
    %v3611 = vunpack.c.l.bf16 %v3099
    %v3612 = vunpack.c.l.bf16 %v3100
    %v3613 = vunpack.c.l.bf16 %v3101
    %v3614 = vunpack.c.l.bf16 %v3102
    %v3615 = vunpack.c.l.bf16 %v3103
    %v3616 = vunpack.c.l.bf16 %v3104
    %v3617 = vunpack.c.l.bf16 %v3105
    %v3618 = vunpack.c.l.bf16 %v3106
    %v3619 = vunpack.c.l.bf16 %v3107
    %v3620 = vunpack.c.l.bf16 %v3108
    %v3621 = vunpack.c.l.bf16 %v3109
    %v3622 = vunpack.c.l.bf16 %v3110
    %v3623 = vunpack.c.l.bf16 %v3111
    %v3624 = vunpack.c.l.bf16 %v3112
    %v3625 = vunpack.c.l.bf16 %v3113
    %v3626 = vunpack.c.l.bf16 %v3114
    %v3627 = vunpack.c.l.bf16 %v3115
    %v3628 = vunpack.c.l.bf16 %v3116
    %v3629 = vunpack.c.l.bf16 %v3117
    %v3630 = vunpack.c.l.bf16 %v3118
    %v3631 = vunpack.c.l.bf16 %v3119
    %v3632 = vunpack.c.l.bf16 %v3120
    %v3633 = vunpack.c.l.bf16 %v3121
    %v3634 = vunpack.c.l.bf16 %v3122
    %v3635 = vunpack.c.l.bf16 %v3123
    %v3636 = vunpack.c.l.bf16 %v3124
    %v3637 = vunpack.c.l.bf16 %v3125
    %v3638 = vunpack.c.l.bf16 %v3126
    %v3639 = vunpack.c.l.bf16 %v3127
    %v3640 = vunpack.c.l.bf16 %v3128
    %v3641 = vunpack.c.l.bf16 %v3129
    %v3642 = vunpack.c.l.bf16 %v3130
    %v3643 = vunpack.c.l.bf16 %v3131
    %v3644 = vunpack.c.l.bf16 %v3132
    %v3645 = vunpack.c.l.bf16 %v3133
    %v3646 = vunpack.c.l.bf16 %v3134
    %v3647 = vunpack.c.l.bf16 %v3135
    %v3648 = vunpack.c.l.bf16 %v3136
    %v3649 = vunpack.c.l.bf16 %v3137
    %v3650 = vunpack.c.l.bf16 %v3138
    %v3651 = vunpack.c.l.bf16 %v3139
    %v3652 = vunpack.c.l.bf16 %v3140
    %v3653 = vunpack.c.l.bf16 %v3141
    %v3654 = vunpack.c.l.bf16 %v3142
    %v3655 = vunpack.c.l.bf16 %v3143
    %v3656 = vunpack.c.l.bf16 %v3144
    %v3657 = vunpack.c.l.bf16 %v3145
    %v3658 = vunpack.c.l.bf16 %v3146
    %v3659 = vunpack.c.l.bf16 %v3147
    %v3660 = vunpack.c.l.bf16 %v3148
    %v3661 = vunpack.c.l.bf16 %v3149
    %v3662 = vunpack.c.l.bf16 %v3150
    %v3663 = vunpack.c.l.bf16 %v3151
    %v3664 = vunpack.c.l.bf16 %v3152
    %v3665 = vunpack.c.l.bf16 %v3153
    %v3666 = vunpack.c.l.bf16 %v3154
    %v3667 = vunpack.c.l.bf16 %v3155
    %v3668 = vunpack.c.l.bf16 %v3156
    %v3669 = vunpack.c.l.bf16 %v3157
    %v3670 = vunpack.c.l.bf16 %v3158
    %v3671 = vunpack.c.l.bf16 %v3159
    %v3672 = vunpack.c.l.bf16 %v3160
    %v3673 = vunpack.c.l.bf16 %v3161
    %v3674 = vunpack.c.l.bf16 %v3162
    %v3675 = vunpack.c.l.bf16 %v3163
    %v3676 = vunpack.c.l.bf16 %v3164
    %v3677 = vunpack.c.l.bf16 %v3165
    %v3678 = vunpack.c.l.bf16 %v3166
    %v3679 = vunpack.c.l.bf16 %v3167
    %v3680 = vunpack.c.l.bf16 %v3168
    %v3681 = vunpack.c.l.bf16 %v3169
    %v3682 = vunpack.c.l.bf16 %v3170
    %v3683 = vunpack.c.l.bf16 %v3171
    %v3684 = vunpack.c.l.bf16 %v3172
    %v3685 = vunpack.c.l.bf16 %v3173
    %v3686 = vunpack.c.l.bf16 %v3174
    %v3687 = vunpack.c.l.bf16 %v3175
    %v3688 = vunpack.c.l.bf16 %v3176
    %v3689 = vunpack.c.l.bf16 %v3177
    %v3690 = vunpack.c.l.bf16 %v3178
    %v3691 = vunpack.c.l.bf16 %v3179
    %v3692 = vunpack.c.l.bf16 %v3180
    %v3693 = vunpack.c.l.bf16 %v3181
    %v3694 = vunpack.c.l.bf16 %v3182
    %v3695 = vunpack.c.l.bf16 %v3183
    %v3696 = vunpack.c.l.bf16 %v3184
    %v3697 = vunpack.c.l.bf16 %v3185
    %v3698 = vunpack.c.l.bf16 %v3186
    %v3699 = vunpack.c.l.bf16 %v3187
    %v3700 = vunpack.c.l.bf16 %v3188
    %v3701 = vunpack.c.l.bf16 %v3189
    %v3702 = vunpack.c.l.bf16 %v3190
    %v3703 = vunpack.c.l.bf16 %v3191
    %v3704 = vunpack.c.l.bf16 %v3192
    %v3705 = vunpack.c.l.bf16 %v3193
    %v3706 = vunpack.c.l.bf16 %v3194
    %v3707 = vunpack.c.l.bf16 %v3195
    %v3708 = vunpack.c.l.bf16 %v3196
    %v3709 = vunpack.c.l.bf16 %v3197
    %v3710 = vunpack.c.l.bf16 %v3198
    %v3711 = vunpack.c.l.bf16 %v3199
    %v3712 = vunpack.c.l.bf16 %v3200
    %v3713 = vunpack.c.l.bf16 %v3201
    %v3714 = vunpack.c.l.bf16 %v3202
    %v3715 = vunpack.c.l.bf16 %v3203
    %v3716 = vunpack.c.l.bf16 %v3204
    %v3717 = vunpack.c.l.bf16 %v3205
    %v3718 = vunpack.c.l.bf16 %v3206
    %v3719 = vunpack.c.l.bf16 %v3207
    %v3720 = vunpack.c.l.bf16 %v3208
    %3721 = vmatprep.subr.mxu0 0.0
    %3722 = vmatpush1.msra.mxu0 %v3209
    %3723 = vmatprep.subr.mxu0 0.0
    %3724 = vmatpush1.msra.mxu0 %v3210
    %3725 = vmatprep.subr.mxu0 0.0
    %3726 = vmatpush1.msra.mxu0 %v3211
    %3727 = vmatprep.subr.mxu0 0.0
    %3728 = vmatpush1.msra.mxu0 %v3212
    %3729 = vmatprep.subr.mxu0 0.0
    %3730 = vmatpush1.msra.mxu0 %v3213
    %3731 = vmatprep.subr.mxu0 0.0
    %3732 = vmatpush1.msra.mxu0 %v3214
    %3733 = vmatprep.subr.mxu0 0.0
    %3734 = vmatpush1.msra.mxu0 %v3215
    %3735 = vmatprep.subr.mxu0 0.0
    %3736 = vmatpush1.msra.mxu0 %v3216
    %3737 = vmatprep.subr.mxu0 0.0
    %3738 = vmatpush1.msra.mxu0 %v3217
    %3739 = vmatprep.subr.mxu0 0.0
    %3740 = vmatpush1.msra.mxu0 %v3218
    %3741 = vmatprep.subr.mxu0 0.0
    %3742 = vmatpush1.msra.mxu0 %v3219
    %3743 = vmatprep.subr.mxu0 0.0
    %3744 = vmatpush1.msra.mxu0 %v3220
    %3745 = vmatprep.subr.mxu0 0.0
    %3746 = vmatpush1.msra.mxu0 %v3221
    %3747 = vmatprep.subr.mxu0 0.0
    %3748 = vmatpush1.msra.mxu0 %v3222
    %3749 = vmatprep.subr.mxu0 0.0
    %3750 = vmatpush1.msra.mxu0 %v3223
    %3751 = vmatprep.subr.mxu0 0.0
    %3752 = vmatpush1.msra.mxu0 %v3224
    %3753 = vmatprep.subr.mxu0 0.0
    %3754 = vmatpush1.msra.mxu0 %v3225
    %3755 = vmatprep.subr.mxu0 0.0
    %3756 = vmatpush1.msra.mxu0 %v3226
    %3757 = vmatprep.subr.mxu0 0.0
    %3758 = vmatpush1.msra.mxu0 %v3227
    %3759 = vmatprep.subr.mxu0 0.0
    %3760 = vmatpush1.msra.mxu0 %v3228
    %3761 = vmatprep.subr.mxu0 0.0
    %3762 = vmatpush1.msra.mxu0 %v3229
    %3763 = vmatprep.subr.mxu0 0.0
    %3764 = vmatpush1.msra.mxu0 %v3230
    %3765 = vmatprep.subr.mxu0 0.0
    %3766 = vmatpush1.msra.mxu0 %v3231
    %3767 = vmatprep.subr.mxu0 0.0
    %3768 = vmatpush1.msra.mxu0 %v3232
    %3769 = vmatprep.subr.mxu0 0.0
    %3770 = vmatpush1.msra.mxu0 %v3233
    %3771 = vmatprep.subr.mxu0 0.0
    %3772 = vmatpush1.msra.mxu0 %v3234
    %3773 = vmatprep.subr.mxu0 0.0
    %3774 = vmatpush1.msra.mxu0 %v3235
    %3775 = vmatprep.subr.mxu0 0.0
    %3776 = vmatpush1.msra.mxu0 %v3236
    %3777 = vmatprep.subr.mxu0 0.0
    %3778 = vmatpush1.msra.mxu0 %v3237
    %3779 = vmatprep.subr.mxu0 0.0
    %3780 = vmatpush1.msra.mxu0 %v3238
    %3781 = vmatprep.subr.mxu0 0.0
    %3782 = vmatpush1.msra.mxu0 %v3239
    %3783 = vmatprep.subr.mxu0 0.0
    %3784 = vmatpush1.msra.mxu0 %v3240
    %3785 = vmatprep.mubr.f32.mxu0 %v2665
    %3786 = vmatmul.mubr.f32.gmra.mrb[0].mxu0 %v2664
    %v3787 = vpop.f32.mrb[0].mxu0
    %v3788 = vadd.f32 0.0, %v3787
    %v3789 = vpop.f32.mrb[0].mxu0
    %3790 = vdwg.mxu0
    %3791 = vmatprep.subr.mxu0 0.0
    %3792 = vmatpush1.msra.mxu0 %v3241
    %3793 = vmatprep.subr.mxu0 0.0
    %3794 = vmatpush1.msra.mxu0 %v3242
    %3795 = vmatprep.subr.mxu0 0.0
    %3796 = vmatpush1.msra.mxu0 %v3243
    %3797 = vmatprep.subr.mxu0 0.0
    %3798 = vmatpush1.msra.mxu0 %v3244
    %3799 = vmatprep.subr.mxu0 0.0
    %3800 = vmatpush1.msra.mxu0 %v3245
    %3801 = vmatprep.subr.mxu0 0.0
    %3802 = vmatpush1.msra.mxu0 %v3246
    %3803 = vmatprep.subr.mxu0 0.0
    %3804 = vmatpush1.msra.mxu0 %v3247
    %3805 = vmatprep.subr.mxu0 0.0
    %3806 = vmatpush1.msra.mxu0 %v3248
    %3807 = vmatprep.subr.mxu0 0.0
    %3808 = vmatpush1.msra.mxu0 %v3249
    %3809 = vmatprep.subr.mxu0 0.0
    %3810 = vmatpush1.msra.mxu0 %v3250
    %3811 = vmatprep.subr.mxu0 0.0
    %3812 = vmatpush1.msra.mxu0 %v3251
    %3813 = vmatprep.subr.mxu0 0.0
    %3814 = vmatpush1.msra.mxu0 %v3252
    %3815 = vmatprep.subr.mxu0 0.0
    %3816 = vmatpush1.msra.mxu0 %v3253
    %3817 = vmatprep.subr.mxu0 0.0
    %3818 = vmatpush1.msra.mxu0 %v3254
    %3819 = vmatprep.subr.mxu0 0.0
    %3820 = vmatpush1.msra.mxu0 %v3255
    %3821 = vmatprep.subr.mxu0 0.0
    %3822 = vmatpush1.msra.mxu0 %v3256
    %3823 = vmatprep.subr.mxu0 0.0
    %3824 = vmatpush1.msra.mxu0 %v3257
    %3825 = vmatprep.subr.mxu0 0.0
    %3826 = vmatpush1.msra.mxu0 %v3258
    %3827 = vmatprep.subr.mxu0 0.0
    %3828 = vmatpush1.msra.mxu0 %v3259
    %3829 = vmatprep.subr.mxu0 0.0
    %3830 = vmatpush1.msra.mxu0 %v3260
    %3831 = vmatprep.subr.mxu0 0.0
    %3832 = vmatpush1.msra.mxu0 %v3261
    %3833 = vmatprep.subr.mxu0 0.0
    %3834 = vmatpush1.msra.mxu0 %v3262
    %3835 = vmatprep.subr.mxu0 0.0
    %3836 = vmatpush1.msra.mxu0 %v3263
    %3837 = vmatprep.subr.mxu0 0.0
    %3838 = vmatpush1.msra.mxu0 %v3264
    %3839 = vmatprep.subr.mxu0 0.0
    %3840 = vmatpush1.msra.mxu0 %v3265
    %3841 = vmatprep.subr.mxu0 0.0
    %3842 = vmatpush1.msra.mxu0 %v3266
    %3843 = vmatprep.subr.mxu0 0.0
    %3844 = vmatpush1.msra.mxu0 %v3267
    %3845 = vmatprep.subr.mxu0 0.0
    %3846 = vmatpush1.msra.mxu0 %v3268
    %3847 = vmatprep.subr.mxu0 0.0
    %3848 = vmatpush1.msra.mxu0 %v3269
    %3849 = vmatprep.subr.mxu0 0.0
    %3850 = vmatpush1.msra.mxu0 %v3270
    %3851 = vmatprep.subr.mxu0 0.0
    %3852 = vmatpush1.msra.mxu0 %v3271
    %3853 = vmatprep.subr.mxu0 0.0
    %3854 = vmatpush1.msra.mxu0 %v3272
    %3855 = vmatprep.mubr.f32.mxu0 %v2667
    %3856 = vmatmul.mubr.f32.gmra.mrb[0].mxu0 %v2666
    %v3857 = vpop.f32.mrb[0].mxu0
    %v3858 = vadd.f32 %v3788, %v3857
    %v3859 = vpop.f32.mrb[0].mxu0
    %3860 = vdwg.mxu0
    %3861 = vmatprep.subr.mxu0 0.0
    %3862 = vmatpush1.msra.mxu0 %v3273
    %3863 = vmatprep.subr.mxu0 0.0
    %3864 = vmatpush1.msra.mxu0 %v3274
    %3865 = vmatprep.subr.mxu0 0.0
    %3866 = vmatpush1.msra.mxu0 %v3275
    %3867 = vmatprep.subr.mxu0 0.0
    %3868 = vmatpush1.msra.mxu0 %v3276
    %3869 = vmatprep.subr.mxu0 0.0
    %3870 = vmatpush1.msra.mxu0 %v3277
    %3871 = vmatprep.subr.mxu0 0.0
    %3872 = vmatpush1.msra.mxu0 %v3278
    %3873 = vmatprep.subr.mxu0 0.0
    %3874 = vmatpush1.msra.mxu0 %v3279
    %3875 = vmatprep.subr.mxu0 0.0
    %3876 = vmatpush1.msra.mxu0 %v3280
    %3877 = vmatprep.subr.mxu0 0.0
    %3878 = vmatpush1.msra.mxu0 %v3281
    %3879 = vmatprep.subr.mxu0 0.0
    %3880 = vmatpush1.msra.mxu0 %v3282
    %3881 = vmatprep.subr.mxu0 0.0
    %3882 = vmatpush1.msra.mxu0 %v3283
    %3883 = vmatprep.subr.mxu0 0.0
    %3884 = vmatpush1.msra.mxu0 %v3284
    %3885 = vmatprep.subr.mxu0 0.0
    %3886 = vmatpush1.msra.mxu0 %v3285
    %3887 = vmatprep.subr.mxu0 0.0
    %3888 = vmatpush1.msra.mxu0 %v3286
    %3889 = vmatprep.subr.mxu0 0.0
    %3890 = vmatpush1.msra.mxu0 %v3287
    %3891 = vmatprep.subr.mxu0 0.0
    %3892 = vmatpush1.msra.mxu0 %v3288
    %3893 = vmatprep.subr.mxu0 0.0
    %3894 = vmatpush1.msra.mxu0 %v3289
    %3895 = vmatprep.subr.mxu0 0.0
    %3896 = vmatpush1.msra.mxu0 %v3290
    %3897 = vmatprep.subr.mxu0 0.0
    %3898 = vmatpush1.msra.mxu0 %v3291
    %3899 = vmatprep.subr.mxu0 0.0
    %3900 = vmatpush1.msra.mxu0 %v3292
    %3901 = vmatprep.subr.mxu0 0.0
    %3902 = vmatpush1.msra.mxu0 %v3293
    %3903 = vmatprep.subr.mxu0 0.0
    %3904 = vmatpush1.msra.mxu0 %v3294
    %3905 = vmatprep.subr.mxu0 0.0
    %3906 = vmatpush1.msra.mxu0 %v3295
    %3907 = vmatprep.subr.mxu0 0.0
    %3908 = vmatpush1.msra.mxu0 %v3296
    %3909 = vmatprep.subr.mxu0 0.0
    %3910 = vmatpush1.msra.mxu0 %v3297
    %3911 = vmatprep.subr.mxu0 0.0
    %3912 = vmatpush1.msra.mxu0 %v3298
    %3913 = vmatprep.subr.mxu0 0.0
    %3914 = vmatpush1.msra.mxu0 %v3299
    %3915 = vmatprep.subr.mxu0 0.0
    %3916 = vmatpush1.msra.mxu0 %v3300
    %3917 = vmatprep.subr.mxu0 0.0
    %3918 = vmatpush1.msra.mxu0 %v3301
    %3919 = vmatprep.subr.mxu0 0.0
    %3920 = vmatpush1.msra.mxu0 %v3302
    %3921 = vmatprep.subr.mxu0 0.0
    %3922 = vmatpush1.msra.mxu0 %v3303
    %3923 = vmatprep.subr.mxu0 0.0
    %3924 = vmatpush1.msra.mxu0 %v3304
    %3925 = vmatprep.mubr.f32.mxu0 %v2669
    %3926 = vmatmul.mubr.f32.gmra.mrb[0].mxu0 %v2668
    %v3927 = vpop.f32.mrb[0].mxu0
    %v3928 = vadd.f32 %v3858, %v3927
    %v3929 = vpop.f32.mrb[0].mxu0
    %3930 = vdwg.mxu0
    %3931 = vmatprep.subr.mxu0 0.0
    %3932 = vmatpush1.msra.mxu0 %v3305
    %3933 = vmatprep.subr.mxu0 0.0
    %3934 = vmatpush1.msra.mxu0 %v3306
    %3935 = vmatprep.subr.mxu0 0.0
    %3936 = vmatpush1.msra.mxu0 %v3307
    %3937 = vmatprep.subr.mxu0 0.0
    %3938 = vmatpush1.msra.mxu0 %v3308
    %3939 = vmatprep.subr.mxu0 0.0
    %3940 = vmatpush1.msra.mxu0 %v3309
    %3941 = vmatprep.subr.mxu0 0.0
    %3942 = vmatpush1.msra.mxu0 %v3310
    %3943 = vmatprep.subr.mxu0 0.0
    %3944 = vmatpush1.msra.mxu0 %v3311
    %3945 = vmatprep.subr.mxu0 0.0
    %3946 = vmatpush1.msra.mxu0 %v3312
    %3947 = vmatprep.subr.mxu0 0.0
    %3948 = vmatpush1.msra.mxu0 %v3313
    %3949 = vmatprep.subr.mxu0 0.0
    %3950 = vmatpush1.msra.mxu0 %v3314
    %3951 = vmatprep.subr.mxu0 0.0
    %3952 = vmatpush1.msra.mxu0 %v3315
    %3953 = vmatprep.subr.mxu0 0.0
    %3954 = vmatpush1.msra.mxu0 %v3316
    %3955 = vmatprep.subr.mxu0 0.0
    %3956 = vmatpush1.msra.mxu0 %v3317
    %3957 = vmatprep.subr.mxu0 0.0
    %3958 = vmatpush1.msra.mxu0 %v3318
    %3959 = vmatprep.subr.mxu0 0.0
    %3960 = vmatpush1.msra.mxu0 %v3319
    %3961 = vmatprep.subr.mxu0 0.0
    %3962 = vmatpush1.msra.mxu0 %v3320
    %3963 = vmatprep.subr.mxu0 0.0
    %3964 = vmatpush1.msra.mxu0 %v3321
    %3965 = vmatprep.subr.mxu0 0.0
    %3966 = vmatpush1.msra.mxu0 %v3322
    %3967 = vmatprep.subr.mxu0 0.0
    %3968 = vmatpush1.msra.mxu0 %v3323
    %3969 = vmatprep.subr.mxu0 0.0
    %3970 = vmatpush1.msra.mxu0 %v3324
    %3971 = vmatprep.subr.mxu0 0.0
    %3972 = vmatpush1.msra.mxu0 %v3325
    %3973 = vmatprep.subr.mxu0 0.0
    %3974 = vmatpush1.msra.mxu0 %v3326
    %3975 = vmatprep.subr.mxu0 0.0
    %3976 = vmatpush1.msra.mxu0 %v3327
    %3977 = vmatprep.subr.mxu0 0.0
    %3978 = vmatpush1.msra.mxu0 %v3328
    %3979 = vmatprep.subr.mxu0 0.0
    %3980 = vmatpush1.msra.mxu0 %v3329
    %3981 = vmatprep.subr.mxu0 0.0
    %3982 = vmatpush1.msra.mxu0 %v3330
    %3983 = vmatprep.subr.mxu0 0.0
    %3984 = vmatpush1.msra.mxu0 %v3331
    %3985 = vmatprep.subr.mxu0 0.0
    %3986 = vmatpush1.msra.mxu0 %v3332
    %3987 = vmatprep.subr.mxu0 0.0
    %3988 = vmatpush1.msra.mxu0 %v3333
    %3989 = vmatprep.subr.mxu0 0.0
    %3990 = vmatpush1.msra.mxu0 %v3334
    %3991 = vmatprep.subr.mxu0 0.0
    %3992 = vmatpush1.msra.mxu0 %v3335
    %3993 = vmatprep.subr.mxu0 0.0
    %3994 = vmatpush1.msra.mxu0 %v3336
    %3995 = vmatprep.mubr.f32.mxu0 %v2671
    %3996 = vmatmul.mubr.f32.gmra.mrb[0].mxu0 %v2670
    %v3997 = vpop.f32.mrb[0].mxu0
    %v3998 = vadd.f32 %v3928, %v3997
    %v3999 = vpop.f32.mrb[0].mxu0
    %4000 = vdwg.mxu0
    %4001 = vmatprep.subr.mxu0 0.0
    %4002 = vmatpush1.msra.mxu0 %v3337
    %4003 = vmatprep.subr.mxu0 0.0
    %4004 = vmatpush1.msra.mxu0 %v3338
    %4005 = vmatprep.subr.mxu0 0.0
    %4006 = vmatpush1.msra.mxu0 %v3339
    %4007 = vmatprep.subr.mxu0 0.0
    %4008 = vmatpush1.msra.mxu0 %v3340
    %4009 = vmatprep.subr.mxu0 0.0
    %4010 = vmatpush1.msra.mxu0 %v3341
    %4011 = vmatprep.subr.mxu0 0.0
    %4012 = vmatpush1.msra.mxu0 %v3342
    %4013 = vmatprep.subr.mxu0 0.0
    %4014 = vmatpush1.msra.mxu0 %v3343
    %4015 = vmatprep.subr.mxu0 0.0
    %4016 = vmatpush1.msra.mxu0 %v3344
    %4017 = vmatprep.subr.mxu0 0.0
    %4018 = vmatpush1.msra.mxu0 %v3345
    %4019 = vmatprep.subr.mxu0 0.0
    %4020 = vmatpush1.msra.mxu0 %v3346
    %4021 = vmatprep.subr.mxu0 0.0
    %4022 = vmatpush1.msra.mxu0 %v3347
    %4023 = vmatprep.subr.mxu0 0.0
    %4024 = vmatpush1.msra.mxu0 %v3348
    %4025 = vmatprep.subr.mxu0 0.0
    %4026 = vmatpush1.msra.mxu0 %v3349
    %4027 = vmatprep.subr.mxu0 0.0
    %4028 = vmatpush1.msra.mxu0 %v3350
    %4029 = vmatprep.subr.mxu0 0.0
    %4030 = vmatpush1.msra.mxu0 %v3351
    %4031 = vmatprep.subr.mxu0 0.0
    %4032 = vmatpush1.msra.mxu0 %v3352
    %4033 = vmatprep.subr.mxu0 0.0
    %4034 = vmatpush1.msra.mxu0 %v3353
    %4035 = vmatprep.subr.mxu0 0.0
    %4036 = vmatpush1.msra.mxu0 %v3354
    %4037 = vmatprep.subr.mxu0 0.0
    %4038 = vmatpush1.msra.mxu0 %v3355
    %4039 = vmatprep.subr.mxu0 0.0
    %4040 = vmatpush1.msra.mxu0 %v3356
    %4041 = vmatprep.subr.mxu0 0.0
    %4042 = vmatpush1.msra.mxu0 %v3357
    %4043 = vmatprep.subr.mxu0 0.0
    %4044 = vmatpush1.msra.mxu0 %v3358
    %4045 = vmatprep.subr.mxu0 0.0
    %4046 = vmatpush1.msra.mxu0 %v3359
    %4047 = vmatprep.subr.mxu0 0.0
    %4048 = vmatpush1.msra.mxu0 %v3360
    %4049 = vmatprep.subr.mxu0 0.0
    %4050 = vmatpush1.msra.mxu0 %v3361
    %4051 = vmatprep.subr.mxu0 0.0
    %4052 = vmatpush1.msra.mxu0 %v3362
    %4053 = vmatprep.subr.mxu0 0.0
    %4054 = vmatpush1.msra.mxu0 %v3363
    %4055 = vmatprep.subr.mxu0 0.0
    %4056 = vmatpush1.msra.mxu0 %v3364
    %4057 = vmatprep.subr.mxu0 0.0
    %4058 = vmatpush1.msra.mxu0 %v3365
    %4059 = vmatprep.subr.mxu0 0.0
    %4060 = vmatpush1.msra.mxu0 %v3366
    %4061 = vmatprep.subr.mxu0 0.0
    %4062 = vmatpush1.msra.mxu0 %v3367
    %4063 = vmatprep.subr.mxu0 0.0
    %4064 = vmatpush1.msra.mxu0 %v3368
    %4065 = vmatprep.mubr.f32.mxu0 %v2673
    %4066 = vmatmul.mubr.f32.gmra.mrb[0].mxu0 %v2672
    %v4067 = vpop.f32.mrb[0].mxu0
    %v4068 = vadd.f32 %v3998, %v4067
    %v4069 = vpop.f32.mrb[0].mxu0
    %4070 = vdwg.mxu0
    %4071 = vmatprep.subr.mxu0 0.0
    %4072 = vmatpush1.msra.mxu0 %v3369
    %4073 = vmatprep.subr.mxu0 0.0
    %4074 = vmatpush1.msra.mxu0 %v3370
    %4075 = vmatprep.subr.mxu0 0.0
    %4076 = vmatpush1.msra.mxu0 %v3371
    %4077 = vmatprep.subr.mxu0 0.0
    %4078 = vmatpush1.msra.mxu0 %v3372
    %4079 = vmatprep.subr.mxu0 0.0
    %4080 = vmatpush1.msra.mxu0 %v3373
    %4081 = vmatprep.subr.mxu0 0.0
    %4082 = vmatpush1.msra.mxu0 %v3374
    %4083 = vmatprep.subr.mxu0 0.0
    %4084 = vmatpush1.msra.mxu0 %v3375
    %4085 = vmatprep.subr.mxu0 0.0
    %4086 = vmatpush1.msra.mxu0 %v3376
    %4087 = vmatprep.subr.mxu0 0.0
    %4088 = vmatpush1.msra.mxu0 %v3377
    %4089 = vmatprep.subr.mxu0 0.0
    %4090 = vmatpush1.msra.mxu0 %v3378
    %4091 = vmatprep.subr.mxu0 0.0
    %4092 = vmatpush1.msra.mxu0 %v3379
    %4093 = vmatprep.subr.mxu0 0.0
    %4094 = vmatpush1.msra.mxu0 %v3380
    %4095 = vmatprep.subr.mxu0 0.0
    %4096 = vmatpush1.msra.mxu0 %v3381
    %4097 = vmatprep.subr.mxu0 0.0
    %4098 = vmatpush1.msra.mxu0 %v3382
    %4099 = vmatprep.subr.mxu0 0.0
    %4100 = vmatpush1.msra.mxu0 %v3383
    %4101 = vmatprep.subr.mxu0 0.0
    %4102 = vmatpush1.msra.mxu0 %v3384
    %4103 = vmatprep.subr.mxu0 0.0
    %4104 = vmatpush1.msra.mxu0 %v3385
    %4105 = vmatprep.subr.mxu0 0.0
    %4106 = vmatpush1.msra.mxu0 %v3386
    %4107 = vmatprep.subr.mxu0 0.0
    %4108 = vmatpush1.msra.mxu0 %v3387
    %4109 = vmatprep.subr.mxu0 0.0
    %4110 = vmatpush1.msra.mxu0 %v3388
    %4111 = vmatprep.subr.mxu0 0.0
    %4112 = vmatpush1.msra.mxu0 %v3389
    %4113 = vmatprep.subr.mxu0 0.0
    %4114 = vmatpush1.msra.mxu0 %v3390
    %4115 = vmatprep.subr.mxu0 0.0
    %4116 = vmatpush1.msra.mxu0 %v3391
    %4117 = vmatprep.subr.mxu0 0.0
    %4118 = vmatpush1.msra.mxu0 %v3392
    %4119 = vmatprep.subr.mxu0 0.0
    %4120 = vmatpush1.msra.mxu0 %v3393
    %4121 = vmatprep.subr.mxu0 0.0
    %4122 = vmatpush1.msra.mxu0 %v3394
    %4123 = vmatprep.subr.mxu0 0.0
    %4124 = vmatpush1.msra.mxu0 %v3395
    %4125 = vmatprep.subr.mxu0 0.0
    %4126 = vmatpush1.msra.mxu0 %v3396
    %4127 = vmatprep.subr.mxu0 0.0
    %4128 = vmatpush1.msra.mxu0 %v3397
    %4129 = vmatprep.subr.mxu0 0.0
    %4130 = vmatpush1.msra.mxu0 %v3398
    %4131 = vmatprep.subr.mxu0 0.0
    %4132 = vmatpush1.msra.mxu0 %v3399
    %4133 = vmatprep.subr.mxu0 0.0
    %4134 = vmatpush1.msra.mxu0 %v3400
    %4135 = vmatprep.mubr.f32.mxu0 %v2675
    %4136 = vmatmul.mubr.f32.gmra.mrb[0].mxu0 %v2674
    %v4137 = vpop.f32.mrb[0].mxu0
    %v4138 = vadd.f32 %v4068, %v4137
    %v4139 = vpop.f32.mrb[0].mxu0
    %4140 = vdwg.mxu0
    %4141 = vmatprep.subr.mxu0 0.0
    %4142 = vmatpush1.msra.mxu0 %v3401
    %4143 = vmatprep.subr.mxu0 0.0
    %4144 = vmatpush1.msra.mxu0 %v3402
    %4145 = vmatprep.subr.mxu0 0.0
    %4146 = vmatpush1.msra.mxu0 %v3403
    %4147 = vmatprep.subr.mxu0 0.0
    %4148 = vmatpush1.msra.mxu0 %v3404
    %4149 = vmatprep.subr.mxu0 0.0
    %4150 = vmatpush1.msra.mxu0 %v3405
    %4151 = vmatprep.subr.mxu0 0.0
    %4152 = vmatpush1.msra.mxu0 %v3406
    %4153 = vmatprep.subr.mxu0 0.0
    %4154 = vmatpush1.msra.mxu0 %v3407
    %4155 = vmatprep.subr.mxu0 0.0
    %4156 = vmatpush1.msra.mxu0 %v3408
    %4157 = vmatprep.subr.mxu0 0.0
    %4158 = vmatpush1.msra.mxu0 %v3409
    %4159 = vmatprep.subr.mxu0 0.0
    %4160 = vmatpush1.msra.mxu0 %v3410
    %4161 = vmatprep.subr.mxu0 0.0
    %4162 = vmatpush1.msra.mxu0 %v3411
    %4163 = vmatprep.subr.mxu0 0.0
    %4164 = vmatpush1.msra.mxu0 %v3412
    %4165 = vmatprep.subr.mxu0 0.0
    %4166 = vmatpush1.msra.mxu0 %v3413
    %4167 = vmatprep.subr.mxu0 0.0
    %4168 = vmatpush1.msra.mxu0 %v3414
    %4169 = vmatprep.subr.mxu0 0.0
    %4170 = vmatpush1.msra.mxu0 %v3415
    %4171 = vmatprep.subr.mxu0 0.0
    %4172 = vmatpush1.msra.mxu0 %v3416
    %4173 = vmatprep.subr.mxu0 0.0
    %4174 = vmatpush1.msra.mxu0 %v3417
    %4175 = vmatprep.subr.mxu0 0.0
    %4176 = vmatpush1.msra.mxu0 %v3418
    %4177 = vmatprep.subr.mxu0 0.0
    %4178 = vmatpush1.msra.mxu0 %v3419
    %4179 = vmatprep.subr.mxu0 0.0
    %4180 = vmatpush1.msra.mxu0 %v3420
    %4181 = vmatprep.subr.mxu0 0.0
    %4182 = vmatpush1.msra.mxu0 %v3421
    %4183 = vmatprep.subr.mxu0 0.0
    %4184 = vmatpush1.msra.mxu0 %v3422
    %4185 = vmatprep.subr.mxu0 0.0
    %4186 = vmatpush1.msra.mxu0 %v3423
    %4187 = vmatprep.subr.mxu0 0.0
    %4188 = vmatpush1.msra.mxu0 %v3424
    %4189 = vmatprep.subr.mxu0 0.0
    %4190 = vmatpush1.msra.mxu0 %v3425
    %4191 = vmatprep.subr.mxu0 0.0
    %4192 = vmatpush1.msra.mxu0 %v3426
    %4193 = vmatprep.subr.mxu0 0.0
    %4194 = vmatpush1.msra.mxu0 %v3427
    %4195 = vmatprep.subr.mxu0 0.0
    %4196 = vmatpush1.msra.mxu0 %v3428
    %4197 = vmatprep.subr.mxu0 0.0
    %4198 = vmatpush1.msra.mxu0 %v3429
    %4199 = vmatprep.subr.mxu0 0.0
    %4200 = vmatpush1.msra.mxu0 %v3430
    %4201 = vmatprep.subr.mxu0 0.0
    %4202 = vmatpush1.msra.mxu0 %v3431
    %4203 = vmatprep.subr.mxu0 0.0
    %4204 = vmatpush1.msra.mxu0 %v3432
    %4205 = vmatprep.mubr.f32.mxu0 %v2677
    %4206 = vmatmul.mubr.f32.gmra.mrb[0].mxu0 %v2676
    %v4207 = vpop.f32.mrb[0].mxu0
    %v4208 = vadd.f32 %v4138, %v4207
    %v4209 = vpop.f32.mrb[0].mxu0
    %4210 = vdwg.mxu0
    %4211 = vmatprep.subr.mxu0 0.0
    %4212 = vmatpush1.msra.mxu0 %v3433
    %4213 = vmatprep.subr.mxu0 0.0
    %4214 = vmatpush1.msra.mxu0 %v3434
    %4215 = vmatprep.subr.mxu0 0.0
    %4216 = vmatpush1.msra.mxu0 %v3435
    %4217 = vmatprep.subr.mxu0 0.0
    %4218 = vmatpush1.msra.mxu0 %v3436
    %4219 = vmatprep.subr.mxu0 0.0
    %4220 = vmatpush1.msra.mxu0 %v3437
    %4221 = vmatprep.subr.mxu0 0.0
    %4222 = vmatpush1.msra.mxu0 %v3438
    %4223 = vmatprep.subr.mxu0 0.0
    %4224 = vmatpush1.msra.mxu0 %v3439
    %4225 = vmatprep.subr.mxu0 0.0
    %4226 = vmatpush1.msra.mxu0 %v3440
    %4227 = vmatprep.subr.mxu0 0.0
    %4228 = vmatpush1.msra.mxu0 %v3441
    %4229 = vmatprep.subr.mxu0 0.0
    %4230 = vmatpush1.msra.mxu0 %v3442
    %4231 = vmatprep.subr.mxu0 0.0
    %4232 = vmatpush1.msra.mxu0 %v3443
    %4233 = vmatprep.subr.mxu0 0.0
    %4234 = vmatpush1.msra.mxu0 %v3444
    %4235 = vmatprep.subr.mxu0 0.0
    %4236 = vmatpush1.msra.mxu0 %v3445
    %4237 = vmatprep.subr.mxu0 0.0
    %4238 = vmatpush1.msra.mxu0 %v3446
    %4239 = vmatprep.subr.mxu0 0.0
    %4240 = vmatpush1.msra.mxu0 %v3447
    %4241 = vmatprep.subr.mxu0 0.0
    %4242 = vmatpush1.msra.mxu0 %v3448
    %4243 = vmatprep.subr.mxu0 0.0
    %4244 = vmatpush1.msra.mxu0 %v3449
    %4245 = vmatprep.subr.mxu0 0.0
    %4246 = vmatpush1.msra.mxu0 %v3450
    %4247 = vmatprep.subr.mxu0 0.0
    %4248 = vmatpush1.msra.mxu0 %v3451
    %4249 = vmatprep.subr.mxu0 0.0
    %4250 = vmatpush1.msra.mxu0 %v3452
    %4251 = vmatprep.subr.mxu0 0.0
    %4252 = vmatpush1.msra.mxu0 %v3453
    %4253 = vmatprep.subr.mxu0 0.0
    %4254 = vmatpush1.msra.mxu0 %v3454
    %4255 = vmatprep.subr.mxu0 0.0
    %4256 = vmatpush1.msra.mxu0 %v3455
    %4257 = vmatprep.subr.mxu0 0.0
    %4258 = vmatpush1.msra.mxu0 %v3456
    %4259 = vmatprep.subr.mxu0 0.0
    %4260 = vmatpush1.msra.mxu0 %v3457
    %4261 = vmatprep.subr.mxu0 0.0
    %4262 = vmatpush1.msra.mxu0 %v3458
    %4263 = vmatprep.subr.mxu0 0.0
    %4264 = vmatpush1.msra.mxu0 %v3459
    %4265 = vmatprep.subr.mxu0 0.0
    %4266 = vmatpush1.msra.mxu0 %v3460
    %4267 = vmatprep.subr.mxu0 0.0
    %4268 = vmatpush1.msra.mxu0 %v3461
    %4269 = vmatprep.subr.mxu0 0.0
    %4270 = vmatpush1.msra.mxu0 %v3462
    %4271 = vmatprep.subr.mxu0 0.0
    %4272 = vmatpush1.msra.mxu0 %v3463
    %4273 = vmatprep.subr.mxu0 0.0
    %4274 = vmatpush1.msra.mxu0 %v3464
    %4275 = vmatprep.mubr.f32.mxu0 %v2679
    %4276 = vmatmul.mubr.f32.gmra.mrb[0].mxu0 %v2678
    %v4277 = vpop.f32.mrb[0].mxu0
    %v4278 = vadd.f32 %v4208, %v4277
    %v4279 = vpop.f32.mrb[0].mxu0
    %4280 = vdwg.mxu0
    %4281 = vmatprep.subr.mxu0 0.0
    %4282 = vmatpush1.msra.mxu0 %v3465
    %4283 = vmatprep.subr.mxu0 0.0
    %4284 = vmatpush1.msra.mxu0 %v3466
    %4285 = vmatprep.subr.mxu0 0.0
    %4286 = vmatpush1.msra.mxu0 %v3467
    %4287 = vmatprep.subr.mxu0 0.0
    %4288 = vmatpush1.msra.mxu0 %v3468
    %4289 = vmatprep.subr.mxu0 0.0
    %4290 = vmatpush1.msra.mxu0 %v3469
    %4291 = vmatprep.subr.mxu0 0.0
    %4292 = vmatpush1.msra.mxu0 %v3470
    %4293 = vmatprep.subr.mxu0 0.0
    %4294 = vmatpush1.msra.mxu0 %v3471
    %4295 = vmatprep.subr.mxu0 0.0
    %4296 = vmatpush1.msra.mxu0 %v3472
    %4297 = vmatprep.subr.mxu0 0.0
    %4298 = vmatpush1.msra.mxu0 %v3473
    %4299 = vmatprep.subr.mxu0 0.0
    %4300 = vmatpush1.msra.mxu0 %v3474
    %4301 = vmatprep.subr.mxu0 0.0
    %4302 = vmatpush1.msra.mxu0 %v3475
    %4303 = vmatprep.subr.mxu0 0.0
    %4304 = vmatpush1.msra.mxu0 %v3476
    %4305 = vmatprep.subr.mxu0 0.0
    %4306 = vmatpush1.msra.mxu0 %v3477
    %4307 = vmatprep.subr.mxu0 0.0
    %4308 = vmatpush1.msra.mxu0 %v3478
    %4309 = vmatprep.subr.mxu0 0.0
    %4310 = vmatpush1.msra.mxu0 %v3479
    %4311 = vmatprep.subr.mxu0 0.0
    %4312 = vmatpush1.msra.mxu0 %v3480
    %4313 = vmatprep.subr.mxu0 0.0
    %4314 = vmatpush1.msra.mxu0 %v3481
    %4315 = vmatprep.subr.mxu0 0.0
    %4316 = vmatpush1.msra.mxu0 %v3482
    %4317 = vmatprep.subr.mxu0 0.0
    %4318 = vmatpush1.msra.mxu0 %v3483
    %4319 = vmatprep.subr.mxu0 0.0
    %4320 = vmatpush1.msra.mxu0 %v3484
    %4321 = vmatprep.subr.mxu0 0.0
    %4322 = vmatpush1.msra.mxu0 %v3485
    %4323 = vmatprep.subr.mxu0 0.0
    %4324 = vmatpush1.msra.mxu0 %v3486
    %4325 = vmatprep.subr.mxu0 0.0
    %4326 = vmatpush1.msra.mxu0 %v3487
    %4327 = vmatprep.subr.mxu0 0.0
    %4328 = vmatpush1.msra.mxu0 %v3488
    %4329 = vmatprep.subr.mxu0 0.0
    %4330 = vmatpush1.msra.mxu0 %v3489
    %4331 = vmatprep.subr.mxu0 0.0
    %4332 = vmatpush1.msra.mxu0 %v3490
    %4333 = vmatprep.subr.mxu0 0.0
    %4334 = vmatpush1.msra.mxu0 %v3491
    %4335 = vmatprep.subr.mxu0 0.0
    %4336 = vmatpush1.msra.mxu0 %v3492
    %4337 = vmatprep.subr.mxu0 0.0
    %4338 = vmatpush1.msra.mxu0 %v3493
    %4339 = vmatprep.subr.mxu0 0.0
    %4340 = vmatpush1.msra.mxu0 %v3494
    %4341 = vmatprep.subr.mxu0 0.0
    %4342 = vmatpush1.msra.mxu0 %v3495
    %4343 = vmatprep.subr.mxu0 0.0
    %4344 = vmatpush1.msra.mxu0 %v3496
    %4345 = vmatprep.mubr.f32.mxu0 %v2681
    %4346 = vmatmul.mubr.f32.gmra.mrb[0].mxu0 %v2680
    %v4347 = vpop.f32.mrb[0].mxu0
    %v4348 = vadd.f32 %v4278, %v4347
    %v4349 = vpop.f32.mrb[0].mxu0
    %4350 = vdwg.mxu0
    %4351 = vmatprep.subr.mxu0 0.0
    %4352 = vmatpush1.msra.mxu0 %v3497
    %4353 = vmatprep.subr.mxu0 0.0
    %4354 = vmatpush1.msra.mxu0 %v3498
    %4355 = vmatprep.subr.mxu0 0.0
    %4356 = vmatpush1.msra.mxu0 %v3499
    %4357 = vmatprep.subr.mxu0 0.0
    %4358 = vmatpush1.msra.mxu0 %v3500
    %4359 = vmatprep.subr.mxu0 0.0
    %4360 = vmatpush1.msra.mxu0 %v3501
    %4361 = vmatprep.subr.mxu0 0.0
    %4362 = vmatpush1.msra.mxu0 %v3502
    %4363 = vmatprep.subr.mxu0 0.0
    %4364 = vmatpush1.msra.mxu0 %v3503
    %4365 = vmatprep.subr.mxu0 0.0
    %4366 = vmatpush1.msra.mxu0 %v3504
    %4367 = vmatprep.subr.mxu0 0.0
    %4368 = vmatpush1.msra.mxu0 %v3505
    %4369 = vmatprep.subr.mxu0 0.0
    %4370 = vmatpush1.msra.mxu0 %v3506
    %4371 = vmatprep.subr.mxu0 0.0
    %4372 = vmatpush1.msra.mxu0 %v3507
    %4373 = vmatprep.subr.mxu0 0.0
    %4374 = vmatpush1.msra.mxu0 %v3508
    %4375 = vmatprep.subr.mxu0 0.0
    %4376 = vmatpush1.msra.mxu0 %v3509
    %4377 = vmatprep.subr.mxu0 0.0
    %4378 = vmatpush1.msra.mxu0 %v3510
    %4379 = vmatprep.subr.mxu0 0.0
    %4380 = vmatpush1.msra.mxu0 %v3511
    %4381 = vmatprep.subr.mxu0 0.0
    %4382 = vmatpush1.msra.mxu0 %v3512
    %4383 = vmatprep.subr.mxu0 0.0
    %4384 = vmatpush1.msra.mxu0 %v3513
    %4385 = vmatprep.subr.mxu0 0.0
    %4386 = vmatpush1.msra.mxu0 %v3514
    %4387 = vmatprep.subr.mxu0 0.0
    %4388 = vmatpush1.msra.mxu0 %v3515
    %4389 = vmatprep.subr.mxu0 0.0
    %4390 = vmatpush1.msra.mxu0 %v3516
    %4391 = vmatprep.subr.mxu0 0.0
    %4392 = vmatpush1.msra.mxu0 %v3517
    %4393 = vmatprep.subr.mxu0 0.0
    %4394 = vmatpush1.msra.mxu0 %v3518
    %4395 = vmatprep.subr.mxu0 0.0
    %4396 = vmatpush1.msra.mxu0 %v3519
    %4397 = vmatprep.subr.mxu0 0.0
    %4398 = vmatpush1.msra.mxu0 %v3520
    %4399 = vmatprep.subr.mxu0 0.0
    %4400 = vmatpush1.msra.mxu0 %v3521
    %4401 = vmatprep.subr.mxu0 0.0
    %4402 = vmatpush1.msra.mxu0 %v3522
    %4403 = vmatprep.subr.mxu0 0.0
    %4404 = vmatpush1.msra.mxu0 %v3523
    %4405 = vmatprep.subr.mxu0 0.0
    %4406 = vmatpush1.msra.mxu0 %v3524
    %4407 = vmatprep.subr.mxu0 0.0
    %4408 = vmatpush1.msra.mxu0 %v3525
    %4409 = vmatprep.subr.mxu0 0.0
    %4410 = vmatpush1.msra.mxu0 %v3526
    %4411 = vmatprep.subr.mxu0 0.0
    %4412 = vmatpush1.msra.mxu0 %v3527
    %4413 = vmatprep.subr.mxu0 0.0
    %4414 = vmatpush1.msra.mxu0 %v3528
    %4415 = vmatprep.mubr.f32.mxu0 %v2683
    %4416 = vmatmul.mubr.f32.gmra.mrb[0].mxu0 %v2682
    %v4417 = vpop.f32.mrb[0].mxu0
    %v4418 = vadd.f32 %v4348, %v4417
    %v4419 = vpop.f32.mrb[0].mxu0
    %4420 = vdwg.mxu0
    %4421 = vmatprep.subr.mxu0 0.0
    %4422 = vmatpush1.msra.mxu0 %v3529
    %4423 = vmatprep.subr.mxu0 0.0
    %4424 = vmatpush1.msra.mxu0 %v3530
    %4425 = vmatprep.subr.mxu0 0.0
    %4426 = vmatpush1.msra.mxu0 %v3531
    %4427 = vmatprep.subr.mxu0 0.0
    %4428 = vmatpush1.msra.mxu0 %v3532
    %4429 = vmatprep.subr.mxu0 0.0
    %4430 = vmatpush1.msra.mxu0 %v3533
    %4431 = vmatprep.subr.mxu0 0.0
    %4432 = vmatpush1.msra.mxu0 %v3534
    %4433 = vmatprep.subr.mxu0 0.0
    %4434 = vmatpush1.msra.mxu0 %v3535
    %4435 = vmatprep.subr.mxu0 0.0
    %4436 = vmatpush1.msra.mxu0 %v3536
    %4437 = vmatprep.subr.mxu0 0.0
    %4438 = vmatpush1.msra.mxu0 %v3537
    %4439 = vmatprep.subr.mxu0 0.0
    %4440 = vmatpush1.msra.mxu0 %v3538
    %4441 = vmatprep.subr.mxu0 0.0
    %4442 = vmatpush1.msra.mxu0 %v3539
    %4443 = vmatprep.subr.mxu0 0.0
    %4444 = vmatpush1.msra.mxu0 %v3540
    %4445 = vmatprep.subr.mxu0 0.0
    %4446 = vmatpush1.msra.mxu0 %v3541
    %4447 = vmatprep.subr.mxu0 0.0
    %4448 = vmatpush1.msra.mxu0 %v3542
    %4449 = vmatprep.subr.mxu0 0.0
    %4450 = vmatpush1.msra.mxu0 %v3543
    %4451 = vmatprep.subr.mxu0 0.0
    %4452 = vmatpush1.msra.mxu0 %v3544
    %4453 = vmatprep.subr.mxu0 0.0
    %4454 = vmatpush1.msra.mxu0 %v3545
    %4455 = vmatprep.subr.mxu0 0.0
    %4456 = vmatpush1.msra.mxu0 %v3546
    %4457 = vmatprep.subr.mxu0 0.0
    %4458 = vmatpush1.msra.mxu0 %v3547
    %4459 = vmatprep.subr.mxu0 0.0
    %4460 = vmatpush1.msra.mxu0 %v3548
    %4461 = vmatprep.subr.mxu0 0.0
    %4462 = vmatpush1.msra.mxu0 %v3549
    %4463 = vmatprep.subr.mxu0 0.0
    %4464 = vmatpush1.msra.mxu0 %v3550
    %4465 = vmatprep.subr.mxu0 0.0
    %4466 = vmatpush1.msra.mxu0 %v3551
    %4467 = vmatprep.subr.mxu0 0.0
    %4468 = vmatpush1.msra.mxu0 %v3552
    %4469 = vmatprep.subr.mxu0 0.0
    %4470 = vmatpush1.msra.mxu0 %v3553
    %4471 = vmatprep.subr.mxu0 0.0
    %4472 = vmatpush1.msra.mxu0 %v3554
    %4473 = vmatprep.subr.mxu0 0.0
    %4474 = vmatpush1.msra.mxu0 %v3555
    %4475 = vmatprep.subr.mxu0 0.0
    %4476 = vmatpush1.msra.mxu0 %v3556
    %4477 = vmatprep.subr.mxu0 0.0
    %4478 = vmatpush1.msra.mxu0 %v3557
    %4479 = vmatprep.subr.mxu0 0.0
    %4480 = vmatpush1.msra.mxu0 %v3558
    %4481 = vmatprep.subr.mxu0 0.0
    %4482 = vmatpush1.msra.mxu0 %v3559
    %4483 = vmatprep.subr.mxu0 0.0
    %4484 = vmatpush1.msra.mxu0 %v3560
    %4485 = vmatprep.mubr.f32.mxu0 %v2685
    %4486 = vmatmul.mubr.f32.gmra.mrb[0].mxu0 %v2684
    %v4487 = vpop.f32.mrb[0].mxu0
    %v4488 = vadd.f32 %v4418, %v4487
    %v4489 = vpop.f32.mrb[0].mxu0
    %4490 = vdwg.mxu0
    %4491 = vmatprep.subr.mxu0 0.0
    %4492 = vmatpush1.msra.mxu0 %v3561
    %4493 = vmatprep.subr.mxu0 0.0
    %4494 = vmatpush1.msra.mxu0 %v3562
    %4495 = vmatprep.subr.mxu0 0.0
    %4496 = vmatpush1.msra.mxu0 %v3563
    %4497 = vmatprep.subr.mxu0 0.0
    %4498 = vmatpush1.msra.mxu0 %v3564
    %4499 = vmatprep.subr.mxu0 0.0
    %4500 = vmatpush1.msra.mxu0 %v3565
    %4501 = vmatprep.subr.mxu0 0.0
    %4502 = vmatpush1.msra.mxu0 %v3566
    %4503 = vmatprep.subr.mxu0 0.0
    %4504 = vmatpush1.msra.mxu0 %v3567
    %4505 = vmatprep.subr.mxu0 0.0
    %4506 = vmatpush1.msra.mxu0 %v3568
    %4507 = vmatprep.subr.mxu0 0.0
    %4508 = vmatpush1.msra.mxu0 %v3569
    %4509 = vmatprep.subr.mxu0 0.0
    %4510 = vmatpush1.msra.mxu0 %v3570
    %4511 = vmatprep.subr.mxu0 0.0
    %4512 = vmatpush1.msra.mxu0 %v3571
    %4513 = vmatprep.subr.mxu0 0.0
    %4514 = vmatpush1.msra.mxu0 %v3572
    %4515 = vmatprep.subr.mxu0 0.0
    %4516 = vmatpush1.msra.mxu0 %v3573
    %4517 = vmatprep.subr.mxu0 0.0
    %4518 = vmatpush1.msra.mxu0 %v3574
    %4519 = vmatprep.subr.mxu0 0.0
    %4520 = vmatpush1.msra.mxu0 %v3575
    %4521 = vmatprep.subr.mxu0 0.0
    %4522 = vmatpush1.msra.mxu0 %v3576
    %4523 = vmatprep.subr.mxu0 0.0
    %4524 = vmatpush1.msra.mxu0 %v3577
    %4525 = vmatprep.subr.mxu0 0.0
    %4526 = vmatpush1.msra.mxu0 %v3578
    %4527 = vmatprep.subr.mxu0 0.0
    %4528 = vmatpush1.msra.mxu0 %v3579
    %4529 = vmatprep.subr.mxu0 0.0
    %4530 = vmatpush1.msra.mxu0 %v3580
    %4531 = vmatprep.subr.mxu0 0.0
    %4532 = vmatpush1.msra.mxu0 %v3581
    %4533 = vmatprep.subr.mxu0 0.0
    %4534 = vmatpush1.msra.mxu0 %v3582
    %4535 = vmatprep.subr.mxu0 0.0
    %4536 = vmatpush1.msra.mxu0 %v3583
    %4537 = vmatprep.subr.mxu0 0.0
    %4538 = vmatpush1.msra.mxu0 %v3584
    %4539 = vmatprep.subr.mxu0 0.0
    %4540 = vmatpush1.msra.mxu0 %v3585
    %4541 = vmatprep.subr.mxu0 0.0
    %4542 = vmatpush1.msra.mxu0 %v3586
    %4543 = vmatprep.subr.mxu0 0.0
    %4544 = vmatpush1.msra.mxu0 %v3587
    %4545 = vmatprep.subr.mxu0 0.0
    %4546 = vmatpush1.msra.mxu0 %v3588
    %4547 = vmatprep.subr.mxu0 0.0
    %4548 = vmatpush1.msra.mxu0 %v3589
    %4549 = vmatprep.subr.mxu0 0.0
    %4550 = vmatpush1.msra.mxu0 %v3590
    %4551 = vmatprep.subr.mxu0 0.0
    %4552 = vmatpush1.msra.mxu0 %v3591
    %4553 = vmatprep.subr.mxu0 0.0
    %4554 = vmatpush1.msra.mxu0 %v3592
    %4555 = vmatprep.mubr.f32.mxu0 %v2687
    %4556 = vmatmul.mubr.f32.gmra.mrb[0].mxu0 %v2686
    %v4557 = vpop.f32.mrb[0].mxu0
    %v4558 = vadd.f32 %v4488, %v4557
    %v4559 = vpop.f32.mrb[0].mxu0
    %4560 = vdwg.mxu0
    %4561 = vmatprep.subr.mxu0 0.0
    %4562 = vmatpush1.msra.mxu0 %v3593
    %4563 = vmatprep.subr.mxu0 0.0
    %4564 = vmatpush1.msra.mxu0 %v3594
    %4565 = vmatprep.subr.mxu0 0.0
    %4566 = vmatpush1.msra.mxu0 %v3595
    %4567 = vmatprep.subr.mxu0 0.0
    %4568 = vmatpush1.msra.mxu0 %v3596
    %4569 = vmatprep.subr.mxu0 0.0
    %4570 = vmatpush1.msra.mxu0 %v3597
    %4571 = vmatprep.subr.mxu0 0.0
    %4572 = vmatpush1.msra.mxu0 %v3598
    %4573 = vmatprep.subr.mxu0 0.0
    %4574 = vmatpush1.msra.mxu0 %v3599
    %4575 = vmatprep.subr.mxu0 0.0
    %4576 = vmatpush1.msra.mxu0 %v3600
    %4577 = vmatprep.subr.mxu0 0.0
    %4578 = vmatpush1.msra.mxu0 %v3601
    %4579 = vmatprep.subr.mxu0 0.0
    %4580 = vmatpush1.msra.mxu0 %v3602
    %4581 = vmatprep.subr.mxu0 0.0
    %4582 = vmatpush1.msra.mxu0 %v3603
    %4583 = vmatprep.subr.mxu0 0.0
    %4584 = vmatpush1.msra.mxu0 %v3604
    %4585 = vmatprep.subr.mxu0 0.0
    %4586 = vmatpush1.msra.mxu0 %v3605
    %4587 = vmatprep.subr.mxu0 0.0
    %4588 = vmatpush1.msra.mxu0 %v3606
    %4589 = vmatprep.subr.mxu0 0.0
    %4590 = vmatpush1.msra.mxu0 %v3607
    %4591 = vmatprep.subr.mxu0 0.0
    %4592 = vmatpush1.msra.mxu0 %v3608
    %4593 = vmatprep.subr.mxu0 0.0
    %4594 = vmatpush1.msra.mxu0 %v3609
    %4595 = vmatprep.subr.mxu0 0.0
    %4596 = vmatpush1.msra.mxu0 %v3610
    %4597 = vmatprep.subr.mxu0 0.0
    %4598 = vmatpush1.msra.mxu0 %v3611
    %4599 = vmatprep.subr.mxu0 0.0
    %4600 = vmatpush1.msra.mxu0 %v3612
    %4601 = vmatprep.subr.mxu0 0.0
    %4602 = vmatpush1.msra.mxu0 %v3613
    %4603 = vmatprep.subr.mxu0 0.0
    %4604 = vmatpush1.msra.mxu0 %v3614
    %4605 = vmatprep.subr.mxu0 0.0
    %4606 = vmatpush1.msra.mxu0 %v3615
    %4607 = vmatprep.subr.mxu0 0.0
    %4608 = vmatpush1.msra.mxu0 %v3616
    %4609 = vmatprep.subr.mxu0 0.0
    %4610 = vmatpush1.msra.mxu0 %v3617
    %4611 = vmatprep.subr.mxu0 0.0
    %4612 = vmatpush1.msra.mxu0 %v3618
    %4613 = vmatprep.subr.mxu0 0.0
    %4614 = vmatpush1.msra.mxu0 %v3619
    %4615 = vmatprep.subr.mxu0 0.0
    %4616 = vmatpush1.msra.mxu0 %v3620
    %4617 = vmatprep.subr.mxu0 0.0
    %4618 = vmatpush1.msra.mxu0 %v3621
    %4619 = vmatprep.subr.mxu0 0.0
    %4620 = vmatpush1.msra.mxu0 %v3622
    %4621 = vmatprep.subr.mxu0 0.0
    %4622 = vmatpush1.msra.mxu0 %v3623
    %4623 = vmatprep.subr.mxu0 0.0
    %4624 = vmatpush1.msra.mxu0 %v3624
    %4625 = vmatprep.mubr.f32.mxu0 %v2689
    %4626 = vmatmul.mubr.f32.gmra.mrb[0].mxu0 %v2688
    %v4627 = vpop.f32.mrb[0].mxu0
    %v4628 = vadd.f32 %v4558, %v4627
    %v4629 = vpop.f32.mrb[0].mxu0
    %4630 = vdwg.mxu0
    %4631 = vmatprep.subr.mxu0 0.0
    %4632 = vmatpush1.msra.mxu0 %v3625
    %4633 = vmatprep.subr.mxu0 0.0
    %4634 = vmatpush1.msra.mxu0 %v3626
    %4635 = vmatprep.subr.mxu0 0.0
    %4636 = vmatpush1.msra.mxu0 %v3627
    %4637 = vmatprep.subr.mxu0 0.0
    %4638 = vmatpush1.msra.mxu0 %v3628
    %4639 = vmatprep.subr.mxu0 0.0
    %4640 = vmatpush1.msra.mxu0 %v3629
    %4641 = vmatprep.subr.mxu0 0.0
    %4642 = vmatpush1.msra.mxu0 %v3630
    %4643 = vmatprep.subr.mxu0 0.0
    %4644 = vmatpush1.msra.mxu0 %v3631
    %4645 = vmatprep.subr.mxu0 0.0
    %4646 = vmatpush1.msra.mxu0 %v3632
    %4647 = vmatprep.subr.mxu0 0.0
    %4648 = vmatpush1.msra.mxu0 %v3633
    %4649 = vmatprep.subr.mxu0 0.0
    %4650 = vmatpush1.msra.mxu0 %v3634
    %4651 = vmatprep.subr.mxu0 0.0
    %4652 = vmatpush1.msra.mxu0 %v3635
    %4653 = vmatprep.subr.mxu0 0.0
    %4654 = vmatpush1.msra.mxu0 %v3636
    %4655 = vmatprep.subr.mxu0 0.0
    %4656 = vmatpush1.msra.mxu0 %v3637
    %4657 = vmatprep.subr.mxu0 0.0
    %4658 = vmatpush1.msra.mxu0 %v3638
    %4659 = vmatprep.subr.mxu0 0.0
    %4660 = vmatpush1.msra.mxu0 %v3639
    %4661 = vmatprep.subr.mxu0 0.0
    %4662 = vmatpush1.msra.mxu0 %v3640
    %4663 = vmatprep.subr.mxu0 0.0
    %4664 = vmatpush1.msra.mxu0 %v3641
    %4665 = vmatprep.subr.mxu0 0.0
    %4666 = vmatpush1.msra.mxu0 %v3642
    %4667 = vmatprep.subr.mxu0 0.0
    %4668 = vmatpush1.msra.mxu0 %v3643
    %4669 = vmatprep.subr.mxu0 0.0
    %4670 = vmatpush1.msra.mxu0 %v3644
    %4671 = vmatprep.subr.mxu0 0.0
    %4672 = vmatpush1.msra.mxu0 %v3645
    %4673 = vmatprep.subr.mxu0 0.0
    %4674 = vmatpush1.msra.mxu0 %v3646
    %4675 = vmatprep.subr.mxu0 0.0
    %4676 = vmatpush1.msra.mxu0 %v3647
    %4677 = vmatprep.subr.mxu0 0.0
    %4678 = vmatpush1.msra.mxu0 %v3648
    %4679 = vmatprep.subr.mxu0 0.0
    %4680 = vmatpush1.msra.mxu0 %v3649
    %4681 = vmatprep.subr.mxu0 0.0
    %4682 = vmatpush1.msra.mxu0 %v3650
    %4683 = vmatprep.subr.mxu0 0.0
    %4684 = vmatpush1.msra.mxu0 %v3651
    %4685 = vmatprep.subr.mxu0 0.0
    %4686 = vmatpush1.msra.mxu0 %v3652
    %4687 = vmatprep.subr.mxu0 0.0
    %4688 = vmatpush1.msra.mxu0 %v3653
    %4689 = vmatprep.subr.mxu0 0.0
    %4690 = vmatpush1.msra.mxu0 %v3654
    %4691 = vmatprep.subr.mxu0 0.0
    %4692 = vmatpush1.msra.mxu0 %v3655
    %4693 = vmatprep.subr.mxu0 0.0
    %4694 = vmatpush1.msra.mxu0 %v3656
    %4695 = vmatprep.mubr.f32.mxu0 %v2691
    %4696 = vmatmul.mubr.f32.gmra.mrb[0].mxu0 %v2690
    %v4697 = vpop.f32.mrb[0].mxu0
    %v4698 = vadd.f32 %v4628, %v4697
    %v4699 = vpop.f32.mrb[0].mxu0
    %4700 = vdwg.mxu0
    %4701 = vmatprep.subr.mxu0 0.0
    %4702 = vmatpush1.msra.mxu0 %v3657
    %4703 = vmatprep.subr.mxu0 0.0
    %4704 = vmatpush1.msra.mxu0 %v3658
    %4705 = vmatprep.subr.mxu0 0.0
    %4706 = vmatpush1.msra.mxu0 %v3659
    %4707 = vmatprep.subr.mxu0 0.0
    %4708 = vmatpush1.msra.mxu0 %v3660
    %4709 = vmatprep.subr.mxu0 0.0
    %4710 = vmatpush1.msra.mxu0 %v3661
    %4711 = vmatprep.subr.mxu0 0.0
    %4712 = vmatpush1.msra.mxu0 %v3662
    %4713 = vmatprep.subr.mxu0 0.0
    %4714 = vmatpush1.msra.mxu0 %v3663
    %4715 = vmatprep.subr.mxu0 0.0
    %4716 = vmatpush1.msra.mxu0 %v3664
    %4717 = vmatprep.subr.mxu0 0.0
    %4718 = vmatpush1.msra.mxu0 %v3665
    %4719 = vmatprep.subr.mxu0 0.0
    %4720 = vmatpush1.msra.mxu0 %v3666
    %4721 = vmatprep.subr.mxu0 0.0
    %4722 = vmatpush1.msra.mxu0 %v3667
    %4723 = vmatprep.subr.mxu0 0.0
    %4724 = vmatpush1.msra.mxu0 %v3668
    %4725 = vmatprep.subr.mxu0 0.0
    %4726 = vmatpush1.msra.mxu0 %v3669
    %4727 = vmatprep.subr.mxu0 0.0
    %4728 = vmatpush1.msra.mxu0 %v3670
    %4729 = vmatprep.subr.mxu0 0.0
    %4730 = vmatpush1.msra.mxu0 %v3671
    %4731 = vmatprep.subr.mxu0 0.0
    %4732 = vmatpush1.msra.mxu0 %v3672
    %4733 = vmatprep.subr.mxu0 0.0
    %4734 = vmatpush1.msra.mxu0 %v3673
    %4735 = vmatprep.subr.mxu0 0.0
    %4736 = vmatpush1.msra.mxu0 %v3674
    %4737 = vmatprep.subr.mxu0 0.0
    %4738 = vmatpush1.msra.mxu0 %v3675
    %4739 = vmatprep.subr.mxu0 0.0
    %4740 = vmatpush1.msra.mxu0 %v3676
    %4741 = vmatprep.subr.mxu0 0.0
    %4742 = vmatpush1.msra.mxu0 %v3677
    %4743 = vmatprep.subr.mxu0 0.0
    %4744 = vmatpush1.msra.mxu0 %v3678
    %4745 = vmatprep.subr.mxu0 0.0
    %4746 = vmatpush1.msra.mxu0 %v3679
    %4747 = vmatprep.subr.mxu0 0.0
    %4748 = vmatpush1.msra.mxu0 %v3680
    %4749 = vmatprep.subr.mxu0 0.0
    %4750 = vmatpush1.msra.mxu0 %v3681
    %4751 = vmatprep.subr.mxu0 0.0
    %4752 = vmatpush1.msra.mxu0 %v3682
    %4753 = vmatprep.subr.mxu0 0.0
    %4754 = vmatpush1.msra.mxu0 %v3683
    %4755 = vmatprep.subr.mxu0 0.0
    %4756 = vmatpush1.msra.mxu0 %v3684
    %4757 = vmatprep.subr.mxu0 0.0
    %4758 = vmatpush1.msra.mxu0 %v3685
    %4759 = vmatprep.subr.mxu0 0.0
    %4760 = vmatpush1.msra.mxu0 %v3686
    %4761 = vmatprep.subr.mxu0 0.0
    %4762 = vmatpush1.msra.mxu0 %v3687
    %4763 = vmatprep.subr.mxu0 0.0
    %4764 = vmatpush1.msra.mxu0 %v3688
    %4765 = vmatprep.mubr.f32.mxu0 %v2693
    %4766 = vmatmul.mubr.f32.gmra.mrb[0].mxu0 %v2692
    %v4767 = vpop.f32.mrb[0].mxu0
    %v4768 = vadd.f32 %v4698, %v4767
    %v4769 = vpop.f32.mrb[0].mxu0
    %4770 = vdwg.mxu0
    %4771 = vmatprep.subr.mxu0 0.0
    %4772 = vmatpush1.msra.mxu0 %v3689
    %4773 = vmatprep.subr.mxu0 0.0
    %4774 = vmatpush1.msra.mxu0 %v3690
    %4775 = vmatprep.subr.mxu0 0.0
    %4776 = vmatpush1.msra.mxu0 %v3691
    %4777 = vmatprep.subr.mxu0 0.0
    %4778 = vmatpush1.msra.mxu0 %v3692
    %4779 = vmatprep.subr.mxu0 0.0
    %4780 = vmatpush1.msra.mxu0 %v3693
    %4781 = vmatprep.subr.mxu0 0.0
    %4782 = vmatpush1.msra.mxu0 %v3694
    %4783 = vmatprep.subr.mxu0 0.0
    %4784 = vmatpush1.msra.mxu0 %v3695
    %4785 = vmatprep.subr.mxu0 0.0
    %4786 = vmatpush1.msra.mxu0 %v3696
    %4787 = vmatprep.subr.mxu0 0.0
    %4788 = vmatpush1.msra.mxu0 %v3697
    %4789 = vmatprep.subr.mxu0 0.0
    %4790 = vmatpush1.msra.mxu0 %v3698
    %4791 = vmatprep.subr.mxu0 0.0
    %4792 = vmatpush1.msra.mxu0 %v3699
    %4793 = vmatprep.subr.mxu0 0.0
    %4794 = vmatpush1.msra.mxu0 %v3700
    %4795 = vmatprep.subr.mxu0 0.0
    %4796 = vmatpush1.msra.mxu0 %v3701
    %4797 = vmatprep.subr.mxu0 0.0
    %4798 = vmatpush1.msra.mxu0 %v3702
    %4799 = vmatprep.subr.mxu0 0.0
    %4800 = vmatpush1.msra.mxu0 %v3703
    %4801 = vmatprep.subr.mxu0 0.0
    %4802 = vmatpush1.msra.mxu0 %v3704
    %4803 = vmatprep.subr.mxu0 0.0
    %4804 = vmatpush1.msra.mxu0 %v3705
    %4805 = vmatprep.subr.mxu0 0.0
    %4806 = vmatpush1.msra.mxu0 %v3706
    %4807 = vmatprep.subr.mxu0 0.0
    %4808 = vmatpush1.msra.mxu0 %v3707
    %4809 = vmatprep.subr.mxu0 0.0
    %4810 = vmatpush1.msra.mxu0 %v3708
    %4811 = vmatprep.subr.mxu0 0.0
    %4812 = vmatpush1.msra.mxu0 %v3709
    %4813 = vmatprep.subr.mxu0 0.0
    %4814 = vmatpush1.msra.mxu0 %v3710
    %4815 = vmatprep.subr.mxu0 0.0
    %4816 = vmatpush1.msra.mxu0 %v3711
    %4817 = vmatprep.subr.mxu0 0.0
    %4818 = vmatpush1.msra.mxu0 %v3712
    %4819 = vmatprep.subr.mxu0 0.0
    %4820 = vmatpush1.msra.mxu0 %v3713
    %4821 = vmatprep.subr.mxu0 0.0
    %4822 = vmatpush1.msra.mxu0 %v3714
    %4823 = vmatprep.subr.mxu0 0.0
    %4824 = vmatpush1.msra.mxu0 %v3715
    %4825 = vmatprep.subr.mxu0 0.0
    %4826 = vmatpush1.msra.mxu0 %v3716
    %4827 = vmatprep.subr.mxu0 0.0
    %4828 = vmatpush1.msra.mxu0 %v3717
    %4829 = vmatprep.subr.mxu0 0.0
    %4830 = vmatpush1.msra.mxu0 %v3718
    %4831 = vmatprep.subr.mxu0 0.0
    %4832 = vmatpush1.msra.mxu0 %v3719
    %4833 = vmatprep.subr.mxu0 0.0
    %4834 = vmatpush1.msra.mxu0 %v3720
    %4835 = vmatprep.mubr.f32.mxu0 %v2695
    %4836 = vmatmul.mubr.f32.gmra.mrb[0].mxu0 %v2694
    %v4837 = vpop.f32.mrb[0].mxu0
    %v4838 = vadd.f32 %v4768, %v4837
    %v4839 = vpop.f32.mrb[0].mxu0
    %4840 = vdwg.mxu0
    %v4841 = vadd.f32 %v2696, %v4838
    %vm4842 = vcmask 523264
    %4843 = vst.msk [vmem:[#allocation3] sm:$0xff] %vm4842, %v4841
    // Predicated region
    $region58: #{tpu_custom_call.1} parent=1 // pred_check
      %p4844 = pneg %p68
    $region59: #{tpu_custom_call.1} parent=1 // pred_check_branch
      %4846 = sbr.rel (%p4844) target = $region61
    $region60: #{tpu_custom_call.1} parent=1 // pred_region
      %v4847 = vld [vmem:[#allocation3] sm:$0xff]
      %v4848 = vld [vmem:[%s9] sm:$0x1]
      %v4850 = vlaneseq
      %v4851 = vshrl.u32 %v4850, 7
      %v4852 = vsub.s32 0, %v4851
      %v4853 = vrot.slane %v4848, %v4852
      %v4855 = vadd.f32 %v4847, %v4853
      %vm4856 = vcmp.gt.f32.partialorder %v4855, 0.0
      %v4857 = vmul.f32 %v4855, 1.442695
      %v4858 = vpow.pop %v4857
      %v4859 = vsub.f32 %v4858, 1.0
      %v4860 = vmul.f32 %v4859, 1.6732632
      %v4861 = vsel %vm4856, %v4855, %v4860
      %v4862 = vmul.f32 %v4861, 1.050701
      %v4863 = vld [vmem:[%s10] sm:$0x1]
      %v4865 = vlaneseq
      %v4866 = vshrl.u32 %v4865, 7
      %v4867 = vsub.s32 0, %v4866
      %v4868 = vrot.slane %v4863, %v4867
      %v4870 = vmul.f32 %v4862, %v4868
      %v4871 = vsel %vm4842, %v4870, 0.0
      %4872 = vadd.xlane.f32.xlu0 %v4871
      %v4873 = vpop.xlane.xlu0 %4872
      %s4874 = sld [smem:[#allocation4]]
      %v4875 = vstv %s4874
      %v4876 = vadd.f32 %v4873, %v4875
      %v4877 = vsub.f32 0.0, %v4876
      %v4878 = vmul.f32 %v4877, 1.442695
      %v4879 = vpow.pop %v4878
      %v4880 = vadd.f32 %v4879, 1.0
      %v4881 = vrcp.pop %v4880
      %v4882 = vmul.f32 1.0, %v4881
      %vm4883 = vcmask 7168
      %4884 = vst.msk [vmem:[%s11] sm:$0xff] %vm4883, %v4882
      %v4885 = vld [vmem:[%s5] sm:$0xff]
      %v4886 = vsub.f32 %v4882, %v4885
      %v4887 = vand.u32 2147483647, %v4886
      %v4888 = vsel %vm4883, %v4887, 0.0
      %4889 = vadd.xlane.f32.xlu0 %v4888
      %v4890 = vpop.xlane.xlu0 %4889
      %v4891 = vrot.slane %v4890, 4
      %v4892 = vadd.f32 %v4890, %v4891
      %v4893 = vrot.slane %v4892, 2
      %v4894 = vadd.f32 %v4892, %v4893
      %v4895 = vrot.slane %v4894, 1
      %v4896 = vadd.f32 %v4894, %v4895
      %s4897 = vtos %v4896
      %v4898 = vrcp.pop 8.0
      %s4899 = vtos %v4898
      %s4900 = smul.f32 %s4897, %s4899
      %s4901 = scalar_lea.smem [#allocation10], 0
      %4902 = sst [smem:[%s4901]] %s4900
    $region61: #{tpu_custom_call.1} parent=1 // pred_fallthru
      _
    // Predicated region
    $region62: #{tpu_custom_call.1} parent=1 // pred_check
      _
    $region63: #{tpu_custom_call.1} parent=1 // pred_check_branch
      %4904 = sbr.rel (0) target = $region65
    $region64: #{tpu_custom_call.1} parent=1 // pred_region
      _
    $region65: #{tpu_custom_call.1} parent=1 // pred_fallthru
      _
    // Predicated region
    $region66: #{tpu_custom_call.1} parent=1 // pred_check
      _
    $region67: #{tpu_custom_call.1} parent=1 // pred_check_branch
      %4906 = sbr.rel (0) target = $region69
    $region68: #{tpu_custom_call.1} parent=1 // pred_region
      %s4908 = ssub.s32 16, 16
      %4909 = vsyncadd [#allocation6], %s4908
      %4912 = dma.smem_to_hbm [#allocation10], 16, %s12, [#allocation6]
    $region69: #{tpu_custom_call.1} parent=1 // pred_fallthru
      _
    // Predicated region
    $region70: #{tpu_custom_call.1} parent=1 // pred_check
      _
    $region71: #{tpu_custom_call.1} parent=1 // pred_check_branch
      %4914 = sbr.rel (0) target = $region73
    $region72: #{tpu_custom_call.1} parent=1 // pred_region
      _
    $region73: #{tpu_custom_call.1} parent=1 // pred_fallthru
      _
    // Predicated region
    $region74: #{tpu_custom_call.1} parent=1 // pred_check
      _
    $region75: #{tpu_custom_call.1} parent=1 // pred_check_branch
      %4916 = sbr.rel (0) target = $region77
    $region76: #{tpu_custom_call.1} parent=1 // pred_region
      %4917 = dma.done [#allocation6], 16
    $region77: #{tpu_custom_call.1} parent=1 // pred_fallthru
      _
    %4918 = sfence
    %4919 = vsyncpa [#allocation6], 1
    %4920 = vsyncpa [#allocation7], 1
    %4921 = vsyncpa [#allocation9], 1

</llo_original>
